<compile_context>
chip_gen: v7x
topology: tpu7x:2x2x1
jax: 0.10.0
libtpu: 0.0.40
codegen_flags: <defaults>
</compile_context>

<pallas_src>
import jax
import jax.numpy as jnp
from jax import lax
from jax.experimental import pallas as pl
from jax.experimental.pallas import tpu as pltpu

# ------------------------------ hyperparameters -------------------------------
BATCH       = 2
IN_CHANNELS = 4
INPUT_SIZE  = 32            # divisible by pooling_size**3
HIDDEN      = 8
LATENT      = 16
KERNEL_SIZE = 3
PADDING     = 1             # length preserving: 2*padding == kernel_size - 1
POOLING     = 2
BN_EPS      = 1e-5
H1, H2      = 100, 50       # head hidden sizes (fixed by the module)

L3   = INPUT_SIZE // POOLING ** 3       # 4
C3   = 4 * HIDDEN                       # 32
FLAT = C3 * L3                          # 128

assert 2 * PADDING == KERNEL_SIZE - 1 and KERNEL_SIZE == 3
assert POOLING == 2 and INPUT_SIZE % (POOLING ** 3) == 0


def _align8(n):
    return -(-n // 8) * 8


# ------------------- packed parameter slab layouts (static) --------------------
# ALL weights live in one (W_ROWS, 128) f32 slab, ALL bias / BN vectors in one
# (V_ROWS, 200) slab -> 2 parameter DMAs per call instead of 36.  Row offsets of
# the weight sub-blocks are aligned to 8 sublanes for clean loads.
_W_SHAPES = (
    ("ew1",  3 * IN_CHANNELS, HIDDEN),          # encoder conv im2col weights
    ("ew2",  3 * HIDDEN,      2 * HIDDEN),
    ("ew3",  3 * 2 * HIDDEN,  4 * HIDDEN),
    ("hw1T", 2 * H1,          FLAT),            # fused head L1, stored transposed
    ("hw2",  2 * H1,          2 * H2),          # fused head L2 (block-diagonal)
    ("hw3",  2 * H2,          2 * LATENT),      # fused head L3 (block-diagonal)
    ("rw",   LATENT,          FLAT),            # decoder recon Linear
    ("dw1",  3 * 4 * HIDDEN,  2 * 2 * HIDDEN),  # convT packed even/odd weights
    ("dw2",  3 * 2 * HIDDEN,  2 * HIDDEN),
    ("dw3",  3 * HIDDEN,      2 * IN_CHANNELS),
)
W_LAYOUT = {}
_row = 0
for _n, _r, _c in _W_SHAPES:
    W_LAYOUT[_n] = (_row, _r, _c)
    _row = _align8(_row + _r)
W_ROWS, W_COLS = _row, FLAT

_V_SHAPES = (
    ("eb1", HIDDEN), ("eg1", HIDDEN), ("ez1", HIDDEN),
    ("eb2", 2 * HIDDEN), ("eg2", 2 * HIDDEN), ("ez2", 2 * HIDDEN),
    ("eb3", 4 * HIDDEN), ("eg3", 4 * HIDDEN), ("ez3", 4 * HIDDEN),
    ("hb1", 2 * H1), ("hb2", 2 * H2), ("hb3", 2 * LATENT),
    ("rb", FLAT),
    ("db1", 2 * 2 * HIDDEN), ("dg1", 2 * HIDDEN), ("dz1", 2 * HIDDEN),
    ("db2", 2 * HIDDEN), ("dg2", HIDDEN), ("dz2", HIDDEN),
    ("db3", 2 * IN_CHANNELS),
)
V_LAYOUT = {n: (i, w) for i, (n, w) in enumerate(_V_SHAPES)}
V_ROWS, V_COLS = _align8(len(_V_SHAPES)), 2 * H1


# --------------------------- in-kernel building blocks -------------------------
def _softplus(x):
    # torch.nn.Softplus(beta=1, threshold=20); min() keeps the untaken branch finite.
    return jnp.where(x > 20.0, x, jnp.log1p(jnp.exp(jnp.minimum(x, 20.0))))


def _batchnorm(x, gamma, beta):
    # Training-mode BatchNorm1d on (rows, C): biased batch stats, eps = 1e-5.
    mean = jnp.mean(x, axis=0, keepdims=True)
    var = jnp.mean(jnp.square(x - mean), axis=0, keepdims=True)
    return (x - mean) * lax.rsqrt(var + BN_EPS) * gamma + beta


def _bn3(x3, gamma, beta):
    B, L, C = x3.shape
    return _batchnorm(x3.reshape(B * L, C), gamma, beta).reshape(B, L, C)


def _enc_block(x3, w, b, gamma, beta):
    """Conv1d(k=3, circular pad) -> Softplus -> AvgPool1d(2) -> BatchNorm1d.

    x3: (B, L, Cin) length-major value.  The im2col matrix is built as a register
    value (concat of circularly shifted slices) so the whole conv is one MXU matmul.
    """
    B, L, Cin = x3.shape
    Cout = w.shape[1]
    xm1 = jnp.concatenate([x3[:, L - 1:, :], x3[:, :L - 1, :]], axis=1)   # x[(l-1)%L]
    xp1 = jnp.concatenate([x3[:, 1:, :], x3[:, :1, :]], axis=1)           # x[(l+1)%L]
    col = jnp.concatenate([xm1, x3, xp1], axis=-1)                        # (B, L, 3Cin)
    a = jnp.dot(col.reshape(B * L, 3 * Cin), w,
                preferred_element_type=jnp.float32) + b
    a = _softplus(a)
    # AvgPool1d(2): sublane-pair split + VPU add (pairs never cross batches, L even).
    ar = a.reshape(B * L // 2, 2, Cout)
    pooled = 0.5 * (ar[:, 0, :] + ar[:, 1, :])
    return _batchnorm(pooled, gamma, beta).reshape(B, L // 2, Cout)


def _dec_block(z3, w, b2, il_ref):
    """ConvTranspose1d(k=4, stride=2, pad=1): (B, Lin, Cin) -> (B, 2*Lin, Cout).

        y[2j]   = x[j]   @ W[:,:,1] + x[j-1] @ W[:,:,3]
        y[2j+1] = x[j+1] @ W[:,:,0] + x[j]   @ W[:,:,2]     (zero padded ends)

    `w` (3*Cin, 2*Cout) packs the even phase in lanes [:Cout] and the odd phase in
    lanes [Cout:], so one matmul yields both; il_ref interleaves into length order.
    """
    B, Lin, Cin = z3.shape
    Cout = w.shape[1] // 2
    zero = jnp.zeros((B, 1, Cin), jnp.float32)
    xm1 = jnp.concatenate([zero, z3[:, :Lin - 1, :]], axis=1)             # x[j-1]
    xp1 = jnp.concatenate([z3[:, 1:, :], zero], axis=1)                   # x[j+1]
    col = jnp.concatenate([xm1, z3, xp1], axis=-1)                        # (B, Lin, 3Cin)
    y = jnp.dot(col.reshape(B * Lin, 3 * Cin), w,
                preferred_element_type=jnp.float32) + b2                  # (rows, 2Cout)
    R = B * Lin
    il_ref[0:R, 0, 0:Cout] = y[:, :Cout]        # even output positions
    il_ref[0:R, 1, 0:Cout] = y[:, Cout:]        # odd output positions
    return il_ref[0:R, :, 0:Cout].reshape(B, 2 * Lin, Cout)


# ------------------------------------ kernel -----------------------------------
def varae_kernel(x_ref, eps_ref, w_ref, v_ref,
                 recon_ref, mu_ref, logvar_ref,
                 il_ref):
    B, Cin, L0 = x_ref.shape
    Z = eps_ref.shape[1]

    def W(name):
        off, r, c = W_LAYOUT[name]
        return w_ref[off:off + r, 0:c]

    def V(name):
        row, width = V_LAYOUT[name]
        return v_ref[row:row + 1, 0:width]

    # -------------------------------- encoder --------------------------------
    xt = jnp.transpose(x_ref[...], (0, 2, 1))                    # NCL -> (B, L, C)
    h = _enc_block(xt, W("ew1"), V("eb1"), V("eg1"), V("ez1"))
    h = _enc_block(h,  W("ew2"), V("eb2"), V("eg2"), V("ez2"))
    h = _enc_block(h,  W("ew3"), V("eb3"), V("eg3"), V("ez3"))   # (B, L3, C3)

    # Flatten into a lane-dense (B, 128) value (length-major; head / recon weights
    # were permuted in prepare_params() to absorb torch's channel-major order).
    flat = jnp.concatenate([h[:, l, :] for l in range(L3)], axis=-1)

    # Fused mu / logsigma head: one 3-layer MLP (W2, W3 block-diagonal).
    a = _softplus(lax.dot_general(flat, W("hw1T"), (((1,), (1,)), ((), ())),
                                  preferred_element_type=jnp.float32) + V("hb1"))
    a = _softplus(jnp.dot(a, W("hw2"), preferred_element_type=jnp.float32) + V("hb2"))
    st = jnp.dot(a, W("hw3"), preferred_element_type=jnp.float32) + V("hb3")  # (B, 2Z)
    mu, logvar = st[:, :Z], st[:, Z:]
    mu_ref[...] = mu
    logvar_ref[...] = logvar

    # --------------------- reparameterised latent sample ---------------------
    latent = mu + jnp.exp(0.5 * logvar) * eps_ref[...]

    # -------------------------------- decoder --------------------------------
    zf = jnp.dot(latent, W("rw"), preferred_element_type=jnp.float32) + V("rb")  # (B,128)
    z = jnp.stack([zf[:, l * C3:(l + 1) * C3] for l in range(L3)], axis=1)       # (B,L3,C3)

    z = _dec_block(z, W("dw1"), V("db1"), il_ref)                 # (B, 2*L3, 2h)
    z = _bn3(jnp.maximum(z, 0.0), V("dg1"), V("dz1"))             # ReLU -> BatchNorm1d
    z = _dec_block(z, W("dw2"), V("db2"), il_ref)                 # (B, 4*L3, h)
    z = _bn3(jnp.maximum(z, 0.0), V("dg2"), V("dz2"))
    z = _dec_block(z, W("dw3"), V("db3"), il_ref)                 # (B, L0, Cin)

    # cos() + NLC -> NCL transpose fused into the kernel (no wrapper post-ops).
    recon_ref[...] = jnp.cos(jnp.transpose(z, (0, 2, 1)))


# ----------------------------- pallas_call wrapper -----------------------------
def _varae_pallas(x, eps, wslab, vslab):
    B, Cin, L0 = x.shape
    Z = eps.shape[1]
    f32 = jnp.float32
    vmem = pl.BlockSpec(memory_space=pltpu.MemorySpace.VMEM)
    cost = pl.CostEstimate(
        flops=400_000, transcendentals=3_000,
        bytes_accessed=4 * (wslab.size + vslab.size + x.size + eps.size
                            + B * Cin * L0 + 2 * B * Z))
    return pl.pallas_call(
        varae_kernel,
        out_shape=(
            jax.ShapeDtypeStruct((B, Cin, L0), f32),   # x_recon (NCL, cos applied)
            jax.ShapeDtypeStruct((B, Z), f32),         # latent_mu
            jax.ShapeDtypeStruct((B, Z), f32),         # latent_logvar
        ),
        in_specs=[vmem, vmem, vmem, vmem],
        out_specs=(vmem, vmem, vmem),
        scratch_shapes=[
            # shared even/odd interleave buffer for the three ConvTranspose blocks
            pltpu.VMEM((B * L0 // 2, 2, 2 * HIDDEN), f32),
        ],
        cost_estimate=cost,
    )(x, eps, wslab, vslab)


@jax.jit
def varae_forward(x_ncl, eps, params):
    """x_ncl: (B, C, L) as in PyTorch.  Returns (x_recon, latent_mu, latent_logvar)."""
    wslab, vslab = params
    return _varae_pallas(x_ncl, eps, wslab, vslab)


# -------------------- one-time parameter preparation (hoisted) ------------------
def _conv_pack(w):
    # Conv1d weight (Cout, Cin, 3) -> im2col weight (3*Cin, Cout), tap-major rows.
    Cout, Cin, K = w.shape
    return jnp.transpose(w, (2, 1, 0)).reshape(K * Cin, Cout)


def _convT_pack(w):
    # ConvTranspose1d weight (Cin, Cout, 4) -> packed even/odd weight (3*Cin, 2*Cout).
    Cin, Cout, _ = w.shape
    zero = jnp.zeros((Cin, Cout), jnp.float32)
    return jnp.concatenate([
        jnp.concatenate([w[:, :, 3], zero], axis=1),            # rows hit by x[j-1]
        jnp.concatenate([w[:, :, 1], w[:, :, 2]], axis=1),      # rows hit by x[j]
        jnp.concatenate([zero, w[:, :, 0]], axis=1),            # rows hit by x[j+1]
    ], axis=0)


def _head_w1_perm(w1):
    # torch flattens (B, C3, L3) channel-major (c*L3+l); the kernel flatten is
    # length-major (l*C3+c) -> permute W1's input features; result is (FLAT, 100).
    return jnp.transpose(w1.reshape(w1.shape[0], C3, L3), (2, 1, 0)).reshape(FLAT, w1.shape[0])


def prepare_params(tp):
    """Hoisted one-time repack of PyTorch-layout tensors into the two kernel slabs."""
    f32, Z = jnp.float32, LATENT

    # Fused mu/logsigma head: W1 concatenated, W2/W3 block-diagonal.
    hw1 = jnp.concatenate([_head_w1_perm(tp["mu_w1"]), _head_w1_perm(tp["ls_w1"])], axis=1)
    hw2 = jnp.zeros((2 * H1, 2 * H2), f32)
    hw2 = hw2.at[:H1, :H2].set(tp["mu_w2"].T).at[H1:, H2:].set(tp["ls_w2"].T)
    hw3 = jnp.zeros((2 * H2, 2 * Z), f32)
    hw3 = hw3.at[:H2, :Z].set(tp["mu_w3"].T).at[H2:, Z:].set(tp["ls_w3"].T)

    # Recon Linear permuted to the kernel's length-major un-flatten order.
    rw = jnp.transpose(tp["recon_w"].reshape(C3, L3, Z), (1, 0, 2)).reshape(FLAT, Z).T
    rb = tp["recon_b"].reshape(C3, L3).T.reshape(FLAT)

    weights = {
        "ew1": _conv_pack(tp["enc1_w"]), "ew2": _conv_pack(tp["enc2_w"]),
        "ew3": _conv_pack(tp["enc3_w"]),
        "hw1T": hw1.T, "hw2": hw2, "hw3": hw3, "rw": rw,
        "dw1": _convT_pack(tp["dec1_w"]), "dw2": _convT_pack(tp["dec2_w"]),
        "dw3": _convT_pack(tp["dec3_w"]),
    }
    vectors = {
        "eb1": tp["enc1_b"], "eg1": tp["enc1_bn_g"], "ez1": tp["enc1_bn_b"],
        "eb2": tp["enc2_b"], "eg2": tp["enc2_bn_g"], "ez2": tp["enc2_bn_b"],
        "eb3": tp["enc3_b"], "eg3": tp["enc3_bn_g"], "ez3": tp["enc3_bn_b"],
        "hb1": jnp.concatenate([tp["mu_b1"], tp["ls_b1"]]),
        "hb2": jnp.concatenate([tp["mu_b2"], tp["ls_b2"]]),
        "hb3": jnp.concatenate([tp["mu_b3"], tp["ls_b3"]]),
        "rb": rb,
        "db1": jnp.concatenate([tp["dec1_b"], tp["dec1_b"]]),   # both convT phases
        "dg1": tp["dec1_bn_g"], "dz1": tp["dec1_bn_b"],
        "db2": jnp.concatenate([tp["dec2_b"], tp["dec2_b"]]),
        "dg2": tp["dec2_bn_g"], "dz2": tp["dec2_bn_b"],
        "db3": jnp.concatenate([tp["dec3_b"], tp["dec3_b"]]),
    }

    wslab = jnp.zeros((W_ROWS, W_COLS), f32)
    for name, (off, r, c) in W_LAYOUT.items():
        wslab = wslab.at[off:off + r, :c].set(weights[name])
    vslab = jnp.zeros((V_ROWS, V_COLS), f32)
    for name, (row, width) in V_LAYOUT.items():
        vslab = vslab.at[row, :width].set(vectors[name])
    return wslab, vslab


def init_torch_params(key):
    """Deterministic random parameters in PyTorch tensor conventions."""
    h, cin, zdim = HIDDEN, IN_CHANNELS, LATENT
    F = FLAT
    ks = iter(jax.random.split(key, 64))
    w = lambda *s: 0.1 * jax.random.normal(next(ks), s, jnp.float32)
    bn = lambda c: (1.0 + 0.1 * jax.random.normal(next(ks), (c,), jnp.float32),
                    0.05 * jax.random.normal(next(ks), (c,), jnp.float32))
    p = {}
    for i, (ci, co) in enumerate([(cin, h), (h, 2 * h), (2 * h, 4 * h)], start=1):
        p[f"enc{i}_w"], p[f"enc{i}_b"] = w(co, ci, KERNEL_SIZE), w(co)
        p[f"enc{i}_bn_g"], p[f"enc{i}_bn_b"] = bn(co)
    for name in ("mu", "ls"):
        p[f"{name}_w1"], p[f"{name}_b1"] = w(H1, F), w(H1)
        p[f"{name}_w2"], p[f"{name}_b2"] = w(H2, H1), w(H2)
        p[f"{name}_w3"], p[f"{name}_b3"] = w(zdim, H2), w(zdim)
    p["recon_w"], p["recon_b"] = w(F, zdim), w(F)
    for i, (ci, co) in enumerate([(4 * h, 2 * h), (2 * h, h), (h, cin)], start=1):
        p[f"dec{i}_w"], p[f"dec{i}_b"] = w(ci, co, KERNEL_SIZE + 1), w(co)
        if i < 3:
            p[f"dec{i}_bn_g"], p[f"dec{i}_bn_b"] = bn(co)
    return p


if __name__ == "__main__":
    k_par, k_x, k_eps = jax.random.split(jax.random.PRNGKey(0), 3)

    params = prepare_params(init_torch_params(k_par))   # hoisted one-time weight repack

    x = jax.random.normal(k_x, (BATCH, IN_CHANNELS, INPUT_SIZE), jnp.float32)   # NCL input
    eps = jax.random.normal(k_eps, (BATCH, LATENT), jnp.float32)                # rsample noise

    x_recon, mu, logvar = varae_forward(x, eps, params)
    jax.block_until_ready((x_recon, mu, logvar))

    assert x_recon.shape == (BATCH, IN_CHANNELS, INPUT_SIZE), x_recon.shape
    assert mu.shape == (BATCH, LATENT) and logvar.shape == (BATCH, LATENT)
    assert bool(jnp.all(jnp.isfinite(x_recon))) and bool(jnp.all(jnp.isfinite(mu)))
    assert bool(jnp.all(jnp.isfinite(logvar)))
    print("KERNEL_OK")
</pallas_src>

<mosaic_0001>
module attributes {stable_mosaic.version = 11 : i64} {
  func.func @varae_kernel(%arg0: memref<2x4x32xf32, #tpu.memory_space<vmem>>, %arg1: memref<2x16xf32, #tpu.memory_space<vmem>>, %arg2: memref<776x128xf32, #tpu.memory_space<vmem>>, %arg3: memref<24x200xf32, #tpu.memory_space<vmem>>, %arg4: memref<2x4x32xf32, #tpu.memory_space<vmem>>, %arg5: memref<2x16xf32, #tpu.memory_space<vmem>>, %arg6: memref<2x16xf32, #tpu.memory_space<vmem>>, %arg7: memref<32x2x16xf32, #tpu.memory_space<vmem>>) attributes {dimension_semantics = [], scalar_prefetch = 0 : i64, scratch_operands = 1 : i64, tpu.core_type = #tpu.core_type<tc>} {
    %c0 = arith.constant 0 : index
    %c0_0 = arith.constant 0 : index
    %c0_1 = arith.constant 0 : index
    %0 = vector.load %arg0[%c0, %c0_0, %c0_1] : memref<2x4x32xf32, #tpu.memory_space<vmem>>, vector<2x4x32xf32>
    %1 = tpu.transpose %0, [0, 2, 1] : vector<2x4x32xf32> -> vector<2x32x4xf32>
    %c0_2 = arith.constant 0 : index
    %c0_3 = arith.constant 0 : index
    %2 = vector.load %arg2[%c0_2, %c0_3] : memref<776x128xf32, #tpu.memory_space<vmem>>, vector<12x8xf32>
    %c0_4 = arith.constant 0 : index
    %c0_5 = arith.constant 0 : index
    %3 = vector.load %arg3[%c0_4, %c0_5] : memref<24x200xf32, #tpu.memory_space<vmem>>, vector<1x8xf32>
    %c1 = arith.constant 1 : index
    %c0_6 = arith.constant 0 : index
    %4 = vector.load %arg3[%c1, %c0_6] : memref<24x200xf32, #tpu.memory_space<vmem>>, vector<1x8xf32>
    %c2 = arith.constant 2 : index
    %c0_7 = arith.constant 0 : index
    %5 = vector.load %arg3[%c2, %c0_7] : memref<24x200xf32, #tpu.memory_space<vmem>>, vector<1x8xf32>
    %6 = vector.extract_strided_slice %1 {offsets = [0, 31, 0], sizes = [2, 1, 4], strides = [1, 1, 1]} : vector<2x32x4xf32> to vector<2x1x4xf32>
    %7 = vector.extract_strided_slice %1 {offsets = [0, 0, 0], sizes = [2, 31, 4], strides = [1, 1, 1]} : vector<2x32x4xf32> to vector<2x31x4xf32>
    %8 = tpu.concatenate %6, %7 in 1 : vector<2x1x4xf32>, vector<2x31x4xf32> -> vector<2x32x4xf32>
    %9 = vector.extract_strided_slice %1 {offsets = [0, 1, 0], sizes = [2, 31, 4], strides = [1, 1, 1]} : vector<2x32x4xf32> to vector<2x31x4xf32>
    %10 = vector.extract_strided_slice %1 {offsets = [0, 0, 0], sizes = [2, 1, 4], strides = [1, 1, 1]} : vector<2x32x4xf32> to vector<2x1x4xf32>
    %11 = tpu.concatenate %9, %10 in 1 : vector<2x31x4xf32>, vector<2x1x4xf32> -> vector<2x32x4xf32>
    %12 = tpu.concatenate %8, %1, %11 in 2 : vector<2x32x4xf32>, vector<2x32x4xf32>, vector<2x32x4xf32> -> vector<2x32x12xf32>
    %13 = vector.shape_cast %12 : vector<2x32x12xf32> to vector<64x12xf32>
    %cst = arith.constant dense<0.000000e+00> : vector<64x8xf32>
    %14 = tpu.matmul %13, %2, %cst {dimension_numbers = #tpu.dot_dimension_numbers<[1], [0], [0], [1], [0, 0, 1, 1], [], []>} : vector<64x12xf32>, vector<12x8xf32>, vector<64x8xf32> -> vector<64x8xf32>
    %15 = vector.broadcast %3 : vector<1x8xf32> to vector<64x8xf32>
    %16 = arith.addf %14, %15 : vector<64x8xf32>
    %cst_8 = arith.constant 2.000000e+01 : f32
    %17 = vector.broadcast %cst_8 : f32 to vector<64x8xf32>
    %18 = arith.cmpf ogt, %16, %17 : vector<64x8xf32>
    %cst_9 = arith.constant 2.000000e+01 : f32
    %19 = vector.broadcast %cst_9 : f32 to vector<64x8xf32>
    %20 = arith.minimumf %16, %19 : vector<64x8xf32>
    %21 = math.exp %20 : vector<64x8xf32>
    %22 = math.log1p %21 : vector<64x8xf32>
    %23 = arith.select %18, %16, %22 : vector<64x8xi1>, vector<64x8xf32>
    %24 = vector.shape_cast %23 : vector<64x8xf32> to vector<32x2x8xf32>
    %25 = vector.extract_strided_slice %24 {offsets = [0, 0, 0], sizes = [32, 1, 8], strides = [1, 1, 1]} : vector<32x2x8xf32> to vector<32x1x8xf32>
    %26 = vector.shape_cast %25 : vector<32x1x8xf32> to vector<32x8xf32>
    %27 = vector.extract_strided_slice %24 {offsets = [0, 1, 0], sizes = [32, 1, 8], strides = [1, 1, 1]} : vector<32x2x8xf32> to vector<32x1x8xf32>
    %28 = vector.shape_cast %27 : vector<32x1x8xf32> to vector<32x8xf32>
    %29 = arith.addf %26, %28 : vector<32x8xf32>
    %cst_10 = arith.constant 5.000000e-01 : f32
    %30 = vector.broadcast %cst_10 : f32 to vector<32x8xf32>
    %31 = arith.mulf %30, %29 : vector<32x8xf32>
    %cst_11 = arith.constant dense<0.000000e+00> : vector<8xf32>
    %32 = vector.multi_reduction <add>, %31, %cst_11 [0] : vector<32x8xf32> to vector<8xf32>
    %33 = vector.shape_cast %32 : vector<8xf32> to vector<1x8xf32>
    %cst_12 = arith.constant 3.200000e+01 : f32
    %34 = vector.broadcast %cst_12 : f32 to vector<1x8xf32>
    %35 = arith.divf %33, %34 : vector<1x8xf32>
    %36 = vector.broadcast %35 : vector<1x8xf32> to vector<32x8xf32>
    %37 = arith.subf %31, %36 : vector<32x8xf32>
    %38 = arith.mulf %37, %37 : vector<32x8xf32>
    %cst_13 = arith.constant dense<0.000000e+00> : vector<8xf32>
    %39 = vector.multi_reduction <add>, %38, %cst_13 [0] : vector<32x8xf32> to vector<8xf32>
    %40 = vector.shape_cast %39 : vector<8xf32> to vector<1x8xf32>
    %cst_14 = arith.constant 3.200000e+01 : f32
    %41 = vector.broadcast %cst_14 : f32 to vector<1x8xf32>
    %42 = arith.divf %40, %41 : vector<1x8xf32>
    %43 = vector.broadcast %35 : vector<1x8xf32> to vector<32x8xf32>
    %44 = arith.subf %31, %43 : vector<32x8xf32>
    %cst_15 = arith.constant 9.99999974E-6 : f32
    %45 = vector.broadcast %cst_15 : f32 to vector<1x8xf32>
    %46 = arith.addf %42, %45 : vector<1x8xf32>
    %47 = math.rsqrt %46 : vector<1x8xf32>
    %48 = vector.broadcast %47 : vector<1x8xf32> to vector<32x8xf32>
    %49 = arith.mulf %44, %48 : vector<32x8xf32>
    %50 = vector.broadcast %4 : vector<1x8xf32> to vector<32x8xf32>
    %51 = arith.mulf %49, %50 : vector<32x8xf32>
    %52 = vector.broadcast %5 : vector<1x8xf32> to vector<32x8xf32>
    %53 = arith.addf %51, %52 : vector<32x8xf32>
    %54 = vector.shape_cast %53 : vector<32x8xf32> to vector<2x16x8xf32>
    %c16 = arith.constant 16 : index
    %c0_16 = arith.constant 0 : index
    %55 = vector.load %arg2[%c16, %c0_16] : memref<776x128xf32, #tpu.memory_space<vmem>>, vector<24x16xf32>
    %c3 = arith.constant 3 : index
    %c0_17 = arith.constant 0 : index
    %56 = vector.load %arg3[%c3, %c0_17] : memref<24x200xf32, #tpu.memory_space<vmem>>, vector<1x16xf32>
    %c4 = arith.constant 4 : index
    %c0_18 = arith.constant 0 : index
    %57 = vector.load %arg3[%c4, %c0_18] : memref<24x200xf32, #tpu.memory_space<vmem>>, vector<1x16xf32>
    %c5 = arith.constant 5 : index
    %c0_19 = arith.constant 0 : index
    %58 = vector.load %arg3[%c5, %c0_19] : memref<24x200xf32, #tpu.memory_space<vmem>>, vector<1x16xf32>
    %59 = vector.extract_strided_slice %54 {offsets = [0, 15, 0], sizes = [2, 1, 8], strides = [1, 1, 1]} : vector<2x16x8xf32> to vector<2x1x8xf32>
    %60 = vector.extract_strided_slice %54 {offsets = [0, 0, 0], sizes = [2, 15, 8], strides = [1, 1, 1]} : vector<2x16x8xf32> to vector<2x15x8xf32>
    %61 = tpu.concatenate %59, %60 in 1 : vector<2x1x8xf32>, vector<2x15x8xf32> -> vector<2x16x8xf32>
    %62 = vector.extract_strided_slice %54 {offsets = [0, 1, 0], sizes = [2, 15, 8], strides = [1, 1, 1]} : vector<2x16x8xf32> to vector<2x15x8xf32>
    %63 = vector.extract_strided_slice %54 {offsets = [0, 0, 0], sizes = [2, 1, 8], strides = [1, 1, 1]} : vector<2x16x8xf32> to vector<2x1x8xf32>
    %64 = tpu.concatenate %62, %63 in 1 : vector<2x15x8xf32>, vector<2x1x8xf32> -> vector<2x16x8xf32>
    %65 = tpu.concatenate %61, %54, %64 in 2 : vector<2x16x8xf32>, vector<2x16x8xf32>, vector<2x16x8xf32> -> vector<2x16x24xf32>
    %66 = vector.shape_cast %65 : vector<2x16x24xf32> to vector<32x24xf32>
    %cst_20 = arith.constant dense<0.000000e+00> : vector<32x16xf32>
    %67 = tpu.matmul %66, %55, %cst_20 {dimension_numbers = #tpu.dot_dimension_numbers<[1], [0], [0], [1], [0, 0, 1, 1], [], []>} : vector<32x24xf32>, vector<24x16xf32>, vector<32x16xf32> -> vector<32x16xf32>
    %68 = vector.broadcast %56 : vector<1x16xf32> to vector<32x16xf32>
    %69 = arith.addf %67, %68 : vector<32x16xf32>
    %cst_21 = arith.constant 2.000000e+01 : f32
    %70 = vector.broadcast %cst_21 : f32 to vector<32x16xf32>
    %71 = arith.cmpf ogt, %69, %70 : vector<32x16xf32>
    %cst_22 = arith.constant 2.000000e+01 : f32
    %72 = vector.broadcast %cst_22 : f32 to vector<32x16xf32>
    %73 = arith.minimumf %69, %72 : vector<32x16xf32>
    %74 = math.exp %73 : vector<32x16xf32>
    %75 = math.log1p %74 : vector<32x16xf32>
    %76 = arith.select %71, %69, %75 : vector<32x16xi1>, vector<32x16xf32>
    %77 = vector.shape_cast %76 : vector<32x16xf32> to vector<16x2x16xf32>
    %78 = vector.extract_strided_slice %77 {offsets = [0, 0, 0], sizes = [16, 1, 16], strides = [1, 1, 1]} : vector<16x2x16xf32> to vector<16x1x16xf32>
    %79 = vector.shape_cast %78 : vector<16x1x16xf32> to vector<16x16xf32>
    %80 = vector.extract_strided_slice %77 {offsets = [0, 1, 0], sizes = [16, 1, 16], strides = [1, 1, 1]} : vector<16x2x16xf32> to vector<16x1x16xf32>
    %81 = vector.shape_cast %80 : vector<16x1x16xf32> to vector<16x16xf32>
    %82 = arith.addf %79, %81 : vector<16x16xf32>
    %cst_23 = arith.constant 5.000000e-01 : f32
    %83 = vector.broadcast %cst_23 : f32 to vector<16x16xf32>
    %84 = arith.mulf %83, %82 : vector<16x16xf32>
    %cst_24 = arith.constant dense<0.000000e+00> : vector<16xf32>
    %85 = vector.multi_reduction <add>, %84, %cst_24 [0] : vector<16x16xf32> to vector<16xf32>
    %86 = vector.shape_cast %85 : vector<16xf32> to vector<1x16xf32>
    %cst_25 = arith.constant 1.600000e+01 : f32
    %87 = vector.broadcast %cst_25 : f32 to vector<1x16xf32>
    %88 = arith.divf %86, %87 : vector<1x16xf32>
    %89 = vector.broadcast %88 : vector<1x16xf32> to vector<16x16xf32>
    %90 = arith.subf %84, %89 : vector<16x16xf32>
    %91 = arith.mulf %90, %90 : vector<16x16xf32>
    %cst_26 = arith.constant dense<0.000000e+00> : vector<16xf32>
    %92 = vector.multi_reduction <add>, %91, %cst_26 [0] : vector<16x16xf32> to vector<16xf32>
    %93 = vector.shape_cast %92 : vector<16xf32> to vector<1x16xf32>
    %cst_27 = arith.constant 1.600000e+01 : f32
    %94 = vector.broadcast %cst_27 : f32 to vector<1x16xf32>
    %95 = arith.divf %93, %94 : vector<1x16xf32>
    %96 = vector.broadcast %88 : vector<1x16xf32> to vector<16x16xf32>
    %97 = arith.subf %84, %96 : vector<16x16xf32>
    %cst_28 = arith.constant 9.99999974E-6 : f32
    %98 = vector.broadcast %cst_28 : f32 to vector<1x16xf32>
    %99 = arith.addf %95, %98 : vector<1x16xf32>
    %100 = math.rsqrt %99 : vector<1x16xf32>
    %101 = vector.broadcast %100 : vector<1x16xf32> to vector<16x16xf32>
    %102 = arith.mulf %97, %101 : vector<16x16xf32>
    %103 = vector.broadcast %57 : vector<1x16xf32> to vector<16x16xf32>
    %104 = arith.mulf %102, %103 : vector<16x16xf32>
    %105 = vector.broadcast %58 : vector<1x16xf32> to vector<16x16xf32>
    %106 = arith.addf %104, %105 : vector<16x16xf32>
    %107 = vector.shape_cast %106 : vector<16x16xf32> to vector<2x8x16xf32>
    %c40 = arith.constant 40 : index
    %c0_29 = arith.constant 0 : index
    %108 = vector.load %arg2[%c40, %c0_29] : memref<776x128xf32, #tpu.memory_space<vmem>>, vector<48x32xf32>
    %c6 = arith.constant 6 : index
    %c0_30 = arith.constant 0 : index
    %109 = vector.load %arg3[%c6, %c0_30] : memref<24x200xf32, #tpu.memory_space<vmem>>, vector<1x32xf32>
    %c7 = arith.constant 7 : index
    %c0_31 = arith.constant 0 : index
    %110 = vector.load %arg3[%c7, %c0_31] : memref<24x200xf32, #tpu.memory_space<vmem>>, vector<1x32xf32>
    %c8 = arith.constant 8 : index
    %c0_32 = arith.constant 0 : index
    %111 = vector.load %arg3[%c8, %c0_32] : memref<24x200xf32, #tpu.memory_space<vmem>>, vector<1x32xf32>
    %112 = vector.extract_strided_slice %107 {offsets = [0, 7, 0], sizes = [2, 1, 16], strides = [1, 1, 1]} : vector<2x8x16xf32> to vector<2x1x16xf32>
    %113 = vector.extract_strided_slice %107 {offsets = [0, 0, 0], sizes = [2, 7, 16], strides = [1, 1, 1]} : vector<2x8x16xf32> to vector<2x7x16xf32>
    %114 = tpu.concatenate %112, %113 in 1 : vector<2x1x16xf32>, vector<2x7x16xf32> -> vector<2x8x16xf32>
    %115 = vector.extract_strided_slice %107 {offsets = [0, 1, 0], sizes = [2, 7, 16], strides = [1, 1, 1]} : vector<2x8x16xf32> to vector<2x7x16xf32>
    %116 = vector.extract_strided_slice %107 {offsets = [0, 0, 0], sizes = [2, 1, 16], strides = [1, 1, 1]} : vector<2x8x16xf32> to vector<2x1x16xf32>
    %117 = tpu.concatenate %115, %116 in 1 : vector<2x7x16xf32>, vector<2x1x16xf32> -> vector<2x8x16xf32>
    %118 = tpu.concatenate %114, %107, %117 in 2 : vector<2x8x16xf32>, vector<2x8x16xf32>, vector<2x8x16xf32> -> vector<2x8x48xf32>
    %119 = vector.shape_cast %118 : vector<2x8x48xf32> to vector<16x48xf32>
    %cst_33 = arith.constant dense<0.000000e+00> : vector<16x32xf32>
    %120 = tpu.matmul %119, %108, %cst_33 {dimension_numbers = #tpu.dot_dimension_numbers<[1], [0], [0], [1], [0, 0, 1, 1], [], []>} : vector<16x48xf32>, vector<48x32xf32>, vector<16x32xf32> -> vector<16x32xf32>
    %121 = vector.broadcast %109 : vector<1x32xf32> to vector<16x32xf32>
    %122 = arith.addf %120, %121 : vector<16x32xf32>
    %cst_34 = arith.constant 2.000000e+01 : f32
    %123 = vector.broadcast %cst_34 : f32 to vector<16x32xf32>
    %124 = arith.cmpf ogt, %122, %123 : vector<16x32xf32>
    %cst_35 = arith.constant 2.000000e+01 : f32
    %125 = vector.broadcast %cst_35 : f32 to vector<16x32xf32>
    %126 = arith.minimumf %122, %125 : vector<16x32xf32>
    %127 = math.exp %126 : vector<16x32xf32>
    %128 = math.log1p %127 : vector<16x32xf32>
    %129 = arith.select %124, %122, %128 : vector<16x32xi1>, vector<16x32xf32>
    %130 = vector.shape_cast %129 : vector<16x32xf32> to vector<8x2x32xf32>
    %131 = vector.extract_strided_slice %130 {offsets = [0, 0, 0], sizes = [8, 1, 32], strides = [1, 1, 1]} : vector<8x2x32xf32> to vector<8x1x32xf32>
    %132 = vector.shape_cast %131 : vector<8x1x32xf32> to vector<8x32xf32>
    %133 = vector.extract_strided_slice %130 {offsets = [0, 1, 0], sizes = [8, 1, 32], strides = [1, 1, 1]} : vector<8x2x32xf32> to vector<8x1x32xf32>
    %134 = vector.shape_cast %133 : vector<8x1x32xf32> to vector<8x32xf32>
    %135 = arith.addf %132, %134 : vector<8x32xf32>
    %cst_36 = arith.constant 5.000000e-01 : f32
    %136 = vector.broadcast %cst_36 : f32 to vector<8x32xf32>
    %137 = arith.mulf %136, %135 : vector<8x32xf32>
    %cst_37 = arith.constant dense<0.000000e+00> : vector<32xf32>
    %138 = vector.multi_reduction <add>, %137, %cst_37 [0] : vector<8x32xf32> to vector<32xf32>
    %139 = vector.shape_cast %138 : vector<32xf32> to vector<1x32xf32>
    %cst_38 = arith.constant 8.000000e+00 : f32
    %140 = vector.broadcast %cst_38 : f32 to vector<1x32xf32>
    %141 = arith.divf %139, %140 : vector<1x32xf32>
    %142 = vector.broadcast %141 : vector<1x32xf32> to vector<8x32xf32>
    %143 = arith.subf %137, %142 : vector<8x32xf32>
    %144 = arith.mulf %143, %143 : vector<8x32xf32>
    %cst_39 = arith.constant dense<0.000000e+00> : vector<32xf32>
    %145 = vector.multi_reduction <add>, %144, %cst_39 [0] : vector<8x32xf32> to vector<32xf32>
    %146 = vector.shape_cast %145 : vector<32xf32> to vector<1x32xf32>
    %cst_40 = arith.constant 8.000000e+00 : f32
    %147 = vector.broadcast %cst_40 : f32 to vector<1x32xf32>
    %148 = arith.divf %146, %147 : vector<1x32xf32>
    %149 = vector.broadcast %141 : vector<1x32xf32> to vector<8x32xf32>
    %150 = arith.subf %137, %149 : vector<8x32xf32>
    %cst_41 = arith.constant 9.99999974E-6 : f32
    %151 = vector.broadcast %cst_41 : f32 to vector<1x32xf32>
    %152 = arith.addf %148, %151 : vector<1x32xf32>
    %153 = math.rsqrt %152 : vector<1x32xf32>
    %154 = vector.broadcast %153 : vector<1x32xf32> to vector<8x32xf32>
    %155 = arith.mulf %150, %154 : vector<8x32xf32>
    %156 = vector.broadcast %110 : vector<1x32xf32> to vector<8x32xf32>
    %157 = arith.mulf %155, %156 : vector<8x32xf32>
    %158 = vector.broadcast %111 : vector<1x32xf32> to vector<8x32xf32>
    %159 = arith.addf %157, %158 : vector<8x32xf32>
    %160 = vector.shape_cast %159 : vector<8x32xf32> to vector<2x4x32xf32>
    %161 = vector.extract_strided_slice %160 {offsets = [0, 0, 0], sizes = [2, 1, 32], strides = [1, 1, 1]} : vector<2x4x32xf32> to vector<2x1x32xf32>
    %162 = vector.shape_cast %161 : vector<2x1x32xf32> to vector<2x32xf32>
    %163 = vector.extract_strided_slice %160 {offsets = [0, 1, 0], sizes = [2, 1, 32], strides = [1, 1, 1]} : vector<2x4x32xf32> to vector<2x1x32xf32>
    %164 = vector.shape_cast %163 : vector<2x1x32xf32> to vector<2x32xf32>
    %165 = vector.extract_strided_slice %160 {offsets = [0, 2, 0], sizes = [2, 1, 32], strides = [1, 1, 1]} : vector<2x4x32xf32> to vector<2x1x32xf32>
    %166 = vector.shape_cast %165 : vector<2x1x32xf32> to vector<2x32xf32>
    %167 = vector.extract_strided_slice %160 {offsets = [0, 3, 0], sizes = [2, 1, 32], strides = [1, 1, 1]} : vector<2x4x32xf32> to vector<2x1x32xf32>
    %168 = vector.shape_cast %167 : vector<2x1x32xf32> to vector<2x32xf32>
    %169 = tpu.concatenate %162, %164, %166, %168 in 1 : vector<2x32xf32>, vector<2x32xf32>, vector<2x32xf32>, vector<2x32xf32> -> vector<2x128xf32>
    %c88 = arith.constant 88 : index
    %c0_42 = arith.constant 0 : index
    %170 = vector.load %arg2[%c88, %c0_42] : memref<776x128xf32, #tpu.memory_space<vmem>>, vector<200x128xf32>
    %cst_43 = arith.constant dense<0.000000e+00> : vector<2x200xf32>
    %171 = tpu.matmul %169, %170, %cst_43 {dimension_numbers = #tpu.dot_dimension_numbers<[1], [1], [0], [0], [0, 0, 1, 0], [], []>} : vector<2x128xf32>, vector<200x128xf32>, vector<2x200xf32> -> vector<2x200xf32>
    %c9 = arith.constant 9 : index
    %c0_44 = arith.constant 0 : index
    %172 = vector.load %arg3[%c9, %c0_44] : memref<24x200xf32, #tpu.memory_space<vmem>>, vector<1x200xf32>
    %173 = vector.broadcast %172 : vector<1x200xf32> to vector<2x200xf32>
    %174 = arith.addf %171, %173 : vector<2x200xf32>
    %cst_45 = arith.constant 2.000000e+01 : f32
    %175 = vector.broadcast %cst_45 : f32 to vector<2x200xf32>
    %176 = arith.cmpf ogt, %174, %175 : vector<2x200xf32>
    %cst_46 = arith.constant 2.000000e+01 : f32
    %177 = vector.broadcast %cst_46 : f32 to vector<2x200xf32>
    %178 = arith.minimumf %174, %177 : vector<2x200xf32>
    %179 = math.exp %178 : vector<2x200xf32>
    %180 = math.log1p %179 : vector<2x200xf32>
    %181 = arith.select %176, %174, %180 : vector<2x200xi1>, vector<2x200xf32>
    %c288 = arith.constant 288 : index
    %c0_47 = arith.constant 0 : index
    %182 = vector.load %arg2[%c288, %c0_47] : memref<776x128xf32, #tpu.memory_space<vmem>>, vector<200x100xf32>
    %cst_48 = arith.constant dense<0.000000e+00> : vector<2x100xf32>
    %183 = tpu.matmul %181, %182, %cst_48 {dimension_numbers = #tpu.dot_dimension_numbers<[1], [0], [0], [1], [0, 0, 1, 1], [], []>} : vector<2x200xf32>, vector<200x100xf32>, vector<2x100xf32> -> vector<2x100xf32>
    %c10 = arith.constant 10 : index
    %c0_49 = arith.constant 0 : index
    %184 = vector.load %arg3[%c10, %c0_49] : memref<24x200xf32, #tpu.memory_space<vmem>>, vector<1x100xf32>
    %185 = vector.broadcast %184 : vector<1x100xf32> to vector<2x100xf32>
    %186 = arith.addf %183, %185 : vector<2x100xf32>
    %cst_50 = arith.constant 2.000000e+01 : f32
    %187 = vector.broadcast %cst_50 : f32 to vector<2x100xf32>
    %188 = arith.cmpf ogt, %186, %187 : vector<2x100xf32>
    %cst_51 = arith.constant 2.000000e+01 : f32
    %189 = vector.broadcast %cst_51 : f32 to vector<2x100xf32>
    %190 = arith.minimumf %186, %189 : vector<2x100xf32>
    %191 = math.exp %190 : vector<2x100xf32>
    %192 = math.log1p %191 : vector<2x100xf32>
    %193 = arith.select %188, %186, %192 : vector<2x100xi1>, vector<2x100xf32>
    %c488 = arith.constant 488 : index
    %c0_52 = arith.constant 0 : index
    %194 = vector.load %arg2[%c488, %c0_52] : memref<776x128xf32, #tpu.memory_space<vmem>>, vector<100x32xf32>
    %cst_53 = arith.constant dense<0.000000e+00> : vector<2x32xf32>
    %195 = tpu.matmul %193, %194, %cst_53 {dimension_numbers = #tpu.dot_dimension_numbers<[1], [0], [0], [1], [0, 0, 1, 1], [], []>} : vector<2x100xf32>, vector<100x32xf32>, vector<2x32xf32> -> vector<2x32xf32>
    %c11 = arith.constant 11 : index
    %c0_54 = arith.constant 0 : index
    %196 = vector.load %arg3[%c11, %c0_54] : memref<24x200xf32, #tpu.memory_space<vmem>>, vector<1x32xf32>
    %197 = vector.broadcast %196 : vector<1x32xf32> to vector<2x32xf32>
    %198 = arith.addf %195, %197 : vector<2x32xf32>
    %199 = vector.extract_strided_slice %198 {offsets = [0, 0], sizes = [2, 16], strides = [1, 1]} : vector<2x32xf32> to vector<2x16xf32>
    %200 = vector.extract_strided_slice %198 {offsets = [0, 16], sizes = [2, 16], strides = [1, 1]} : vector<2x32xf32> to vector<2x16xf32>
    %c0_55 = arith.constant 0 : index
    %c0_56 = arith.constant 0 : index
    %201 = vector.load %arg5[%c0_55, %c0_56] : memref<2x16xf32, #tpu.memory_space<vmem>>, vector<2x16xf32>
    tpu.vector_store %arg5[%c0_55, %c0_56], %199 {strides = array<i32>} : memref<2x16xf32, #tpu.memory_space<vmem>>, vector<2x16xf32>,
    %c0_57 = arith.constant 0 : index
    %c0_58 = arith.constant 0 : index
    %202 = vector.load %arg6[%c0_57, %c0_58] : memref<2x16xf32, #tpu.memory_space<vmem>>, vector<2x16xf32>
    tpu.vector_store %arg6[%c0_57, %c0_58], %200 {strides = array<i32>} : memref<2x16xf32, #tpu.memory_space<vmem>>, vector<2x16xf32>,
    %cst_59 = arith.constant 5.000000e-01 : f32
    %203 = vector.broadcast %cst_59 : f32 to vector<2x16xf32>
    %204 = arith.mulf %203, %200 : vector<2x16xf32>
    %205 = math.exp %204 : vector<2x16xf32>
    %c0_60 = arith.constant 0 : index
    %c0_61 = arith.constant 0 : index
    %206 = vector.load %arg1[%c0_60, %c0_61] : memref<2x16xf32, #tpu.memory_space<vmem>>, vector<2x16xf32>
    %207 = arith.mulf %205, %206 : vector<2x16xf32>
    %208 = arith.addf %199, %207 : vector<2x16xf32>
    %c592 = arith.constant 592 : index
    %c0_62 = arith.constant 0 : index
    %209 = vector.load %arg2[%c592, %c0_62] : memref<776x128xf32, #tpu.memory_space<vmem>>, vector<16x128xf32>
    %cst_63 = arith.constant dense<0.000000e+00> : vector<2x128xf32>
    %210 = tpu.matmul %208, %209, %cst_63 {dimension_numbers = #tpu.dot_dimension_numbers<[1], [0], [0], [1], [0, 0, 1, 1], [], []>} : vector<2x16xf32>, vector<16x128xf32>, vector<2x128xf32> -> vector<2x128xf32>
    %c12 = arith.constant 12 : index
    %c0_64 = arith.constant 0 : index
    %211 = vector.load %arg3[%c12, %c0_64] : memref<24x200xf32, #tpu.memory_space<vmem>>, vector<1x128xf32>
    %212 = vector.broadcast %211 : vector<1x128xf32> to vector<2x128xf32>
    %213 = arith.addf %210, %212 : vector<2x128xf32>
    %214 = vector.extract_strided_slice %213 {offsets = [0, 0], sizes = [2, 32], strides = [1, 1]} : vector<2x128xf32> to vector<2x32xf32>
    %215 = vector.extract_strided_slice %213 {offsets = [0, 32], sizes = [2, 32], strides = [1, 1]} : vector<2x128xf32> to vector<2x32xf32>
    %216 = vector.extract_strided_slice %213 {offsets = [0, 64], sizes = [2, 32], strides = [1, 1]} : vector<2x128xf32> to vector<2x32xf32>
    %217 = vector.extract_strided_slice %213 {offsets = [0, 96], sizes = [2, 32], strides = [1, 1]} : vector<2x128xf32> to vector<2x32xf32>
    %218 = vector.shape_cast %214 : vector<2x32xf32> to vector<2x1x32xf32>
    %219 = vector.shape_cast %215 : vector<2x32xf32> to vector<2x1x32xf32>
    %220 = vector.shape_cast %216 : vector<2x32xf32> to vector<2x1x32xf32>
    %221 = vector.shape_cast %217 : vector<2x32xf32> to vector<2x1x32xf32>
    %222 = tpu.concatenate %218, %219, %220, %221 in 1 : vector<2x1x32xf32>, vector<2x1x32xf32>, vector<2x1x32xf32>, vector<2x1x32xf32> -> vector<2x4x32xf32>
    %c608 = arith.constant 608 : index
    %c0_65 = arith.constant 0 : index
    %223 = vector.load %arg2[%c608, %c0_65] : memref<776x128xf32, #tpu.memory_space<vmem>>, vector<96x32xf32>
    %c13 = arith.constant 13 : index
    %c0_66 = arith.constant 0 : index
    %224 = vector.load %arg3[%c13, %c0_66] : memref<24x200xf32, #tpu.memory_space<vmem>>, vector<1x32xf32>
    %cst_67 = arith.constant 0.000000e+00 : f32
    %225 = vector.broadcast %cst_67 : f32 to vector<2x1x32xf32>
    %226 = vector.extract_strided_slice %222 {offsets = [0, 0, 0], sizes = [2, 3, 32], strides = [1, 1, 1]} : vector<2x4x32xf32> to vector<2x3x32xf32>
    %227 = tpu.concatenate %225, %226 in 1 : vector<2x1x32xf32>, vector<2x3x32xf32> -> vector<2x4x32xf32>
    %228 = vector.extract_strided_slice %222 {offsets = [0, 1, 0], sizes = [2, 3, 32], strides = [1, 1, 1]} : vector<2x4x32xf32> to vector<2x3x32xf32>
    %229 = tpu.concatenate %228, %225 in 1 : vector<2x3x32xf32>, vector<2x1x32xf32> -> vector<2x4x32xf32>
    %230 = tpu.concatenate %227, %222, %229 in 2 : vector<2x4x32xf32>, vector<2x4x32xf32>, vector<2x4x32xf32> -> vector<2x4x96xf32>
    %231 = vector.shape_cast %230 : vector<2x4x96xf32> to vector<8x96xf32>
    %cst_68 = arith.constant dense<0.000000e+00> : vector<8x32xf32>
    %232 = tpu.matmul %231, %223, %cst_68 {dimension_numbers = #tpu.dot_dimension_numbers<[1], [0], [0], [1], [0, 0, 1, 1], [], []>} : vector<8x96xf32>, vector<96x32xf32>, vector<8x32xf32> -> vector<8x32xf32>
    %233 = vector.broadcast %224 : vector<1x32xf32> to vector<8x32xf32>
    %234 = arith.addf %232, %233 : vector<8x32xf32>
    %235 = vector.extract_strided_slice %234 {offsets = [0, 0], sizes = [8, 16], strides = [1, 1]} : vector<8x32xf32> to vector<8x16xf32>
    %c0_69 = arith.constant 0 : index
    %c0_70 = arith.constant 0 : index
    %c0_71 = arith.constant 0 : index
    %236 = vector.load %arg7[%c0_69, %c0_70, %c0_71] : memref<32x2x16xf32, #tpu.memory_space<vmem>>, vector<8x1x16xf32>
    %237 = vector.shape_cast %236 : vector<8x1x16xf32> to vector<8x16xf32>
    %238 = vector.shape_cast %235 : vector<8x16xf32> to vector<8x1x16xf32>
    tpu.vector_store %arg7[%c0_69, %c0_70, %c0_71], %238 {strides = array<i32>} : memref<32x2x16xf32, #tpu.memory_space<vmem>>, vector<8x1x16xf32>,
    %239 = vector.extract_strided_slice %234 {offsets = [0, 16], sizes = [8, 16], strides = [1, 1]} : vector<8x32xf32> to vector<8x16xf32>
    %c0_72 = arith.constant 0 : index
    %c1_73 = arith.constant 1 : index
    %c0_74 = arith.constant 0 : index
    %240 = vector.load %arg7[%c0_72, %c1_73, %c0_74] : memref<32x2x16xf32, #tpu.memory_space<vmem>>, vector<8x1x16xf32>
    %241 = vector.shape_cast %240 : vector<8x1x16xf32> to vector<8x16xf32>
    %242 = vector.shape_cast %239 : vector<8x16xf32> to vector<8x1x16xf32>
    tpu.vector_store %arg7[%c0_72, %c1_73, %c0_74], %242 {strides = array<i32>} : memref<32x2x16xf32, #tpu.memory_space<vmem>>, vector<8x1x16xf32>,
    %c0_75 = arith.constant 0 : index
    %c0_76 = arith.constant 0 : index
    %c0_77 = arith.constant 0 : index
    %243 = vector.load %arg7[%c0_75, %c0_76, %c0_77] : memref<32x2x16xf32, #tpu.memory_space<vmem>>, vector<8x2x16xf32>
    %244 = vector.shape_cast %243 : vector<8x2x16xf32> to vector<2x8x16xf32>
    %cst_78 = arith.constant 0.000000e+00 : f32
    %245 = vector.broadcast %cst_78 : f32 to vector<2x8x16xf32>
    %246 = arith.maximumf %244, %245 : vector<2x8x16xf32>
    %c14 = arith.constant 14 : index
    %c0_79 = arith.constant 0 : index
    %247 = vector.load %arg3[%c14, %c0_79] : memref<24x200xf32, #tpu.memory_space<vmem>>, vector<1x16xf32>
    %c15 = arith.constant 15 : index
    %c0_80 = arith.constant 0 : index
    %248 = vector.load %arg3[%c15, %c0_80] : memref<24x200xf32, #tpu.memory_space<vmem>>, vector<1x16xf32>
    %249 = vector.shape_cast %246 : vector<2x8x16xf32> to vector<16x16xf32>
    %cst_81 = arith.constant dense<0.000000e+00> : vector<16xf32>
    %250 = vector.multi_reduction <add>, %249, %cst_81 [0] : vector<16x16xf32> to vector<16xf32>
    %251 = vector.shape_cast %250 : vector<16xf32> to vector<1x16xf32>
    %cst_82 = arith.constant 1.600000e+01 : f32
    %252 = vector.broadcast %cst_82 : f32 to vector<1x16xf32>
    %253 = arith.divf %251, %252 : vector<1x16xf32>
    %254 = vector.broadcast %253 : vector<1x16xf32> to vector<16x16xf32>
    %255 = arith.subf %249, %254 : vector<16x16xf32>
    %256 = arith.mulf %255, %255 : vector<16x16xf32>
    %cst_83 = arith.constant dense<0.000000e+00> : vector<16xf32>
    %257 = vector.multi_reduction <add>, %256, %cst_83 [0] : vector<16x16xf32> to vector<16xf32>
    %258 = vector.shape_cast %257 : vector<16xf32> to vector<1x16xf32>
    %cst_84 = arith.constant 1.600000e+01 : f32
    %259 = vector.broadcast %cst_84 : f32 to vector<1x16xf32>
    %260 = arith.divf %258, %259 : vector<1x16xf32>
    %261 = vector.broadcast %253 : vector<1x16xf32> to vector<16x16xf32>
    %262 = arith.subf %249, %261 : vector<16x16xf32>
    %cst_85 = arith.constant 9.99999974E-6 : f32
    %263 = vector.broadcast %cst_85 : f32 to vector<1x16xf32>
    %264 = arith.addf %260, %263 : vector<1x16xf32>
    %265 = math.rsqrt %264 : vector<1x16xf32>
    %266 = vector.broadcast %265 : vector<1x16xf32> to vector<16x16xf32>
    %267 = arith.mulf %262, %266 : vector<16x16xf32>
    %268 = vector.broadcast %247 : vector<1x16xf32> to vector<16x16xf32>
    %269 = arith.mulf %267, %268 : vector<16x16xf32>
    %270 = vector.broadcast %248 : vector<1x16xf32> to vector<16x16xf32>
    %271 = arith.addf %269, %270 : vector<16x16xf32>
    %272 = vector.shape_cast %271 : vector<16x16xf32> to vector<2x8x16xf32>
    %c704 = arith.constant 704 : index
    %c0_86 = arith.constant 0 : index
    %273 = vector.load %arg2[%c704, %c0_86] : memref<776x128xf32, #tpu.memory_space<vmem>>, vector<48x16xf32>
    %c16_87 = arith.constant 16 : index
    %c0_88 = arith.constant 0 : index
    %274 = vector.load %arg3[%c16_87, %c0_88] : memref<24x200xf32, #tpu.memory_space<vmem>>, vector<1x16xf32>
    %cst_89 = arith.constant 0.000000e+00 : f32
    %275 = vector.broadcast %cst_89 : f32 to vector<2x1x16xf32>
    %276 = vector.extract_strided_slice %272 {offsets = [0, 0, 0], sizes = [2, 7, 16], strides = [1, 1, 1]} : vector<2x8x16xf32> to vector<2x7x16xf32>
    %277 = tpu.concatenate %275, %276 in 1 : vector<2x1x16xf32>, vector<2x7x16xf32> -> vector<2x8x16xf32>
    %278 = vector.extract_strided_slice %272 {offsets = [0, 1, 0], sizes = [2, 7, 16], strides = [1, 1, 1]} : vector<2x8x16xf32> to vector<2x7x16xf32>
    %279 = tpu.concatenate %278, %275 in 1 : vector<2x7x16xf32>, vector<2x1x16xf32> -> vector<2x8x16xf32>
    %280 = tpu.concatenate %277, %272, %279 in 2 : vector<2x8x16xf32>, vector<2x8x16xf32>, vector<2x8x16xf32> -> vector<2x8x48xf32>
    %281 = vector.shape_cast %280 : vector<2x8x48xf32> to vector<16x48xf32>
    %cst_90 = arith.constant dense<0.000000e+00> : vector<16x16xf32>
    %282 = tpu.matmul %281, %273, %cst_90 {dimension_numbers = #tpu.dot_dimension_numbers<[1], [0], [0], [1], [0, 0, 1, 1], [], []>} : vector<16x48xf32>, vector<48x16xf32>, vector<16x16xf32> -> vector<16x16xf32>
    %283 = vector.broadcast %274 : vector<1x16xf32> to vector<16x16xf32>
    %284 = arith.addf %282, %283 : vector<16x16xf32>
    %285 = vector.extract_strided_slice %284 {offsets = [0, 0], sizes = [16, 8], strides = [1, 1]} : vector<16x16xf32> to vector<16x8xf32>
    %c0_91 = arith.constant 0 : index
    %c0_92 = arith.constant 0 : index
    %c0_93 = arith.constant 0 : index
    %286 = vector.load %arg7[%c0_91, %c0_92, %c0_93] : memref<32x2x16xf32, #tpu.memory_space<vmem>>, vector<16x1x8xf32>
    %287 = vector.shape_cast %286 : vector<16x1x8xf32> to vector<16x8xf32>
    %288 = vector.shape_cast %285 : vector<16x8xf32> to vector<16x1x8xf32>
    tpu.vector_store %arg7[%c0_91, %c0_92, %c0_93], %288 {strides = array<i32>} : memref<32x2x16xf32, #tpu.memory_space<vmem>>, vector<16x1x8xf32>,
    %289 = vector.extract_strided_slice %284 {offsets = [0, 8], sizes = [16, 8], strides = [1, 1]} : vector<16x16xf32> to vector<16x8xf32>
    %c0_94 = arith.constant 0 : index
    %c1_95 = arith.constant 1 : index
    %c0_96 = arith.constant 0 : index
    %290 = vector.load %arg7[%c0_94, %c1_95, %c0_96] : memref<32x2x16xf32, #tpu.memory_space<vmem>>, vector<16x1x8xf32>
    %291 = vector.shape_cast %290 : vector<16x1x8xf32> to vector<16x8xf32>
    %292 = vector.shape_cast %289 : vector<16x8xf32> to vector<16x1x8xf32>
    tpu.vector_store %arg7[%c0_94, %c1_95, %c0_96], %292 {strides = array<i32>} : memref<32x2x16xf32, #tpu.memory_space<vmem>>, vector<16x1x8xf32>,
    %c0_97 = arith.constant 0 : index
    %c0_98 = arith.constant 0 : index
    %c0_99 = arith.constant 0 : index
    %293 = vector.load %arg7[%c0_97, %c0_98, %c0_99] : memref<32x2x16xf32, #tpu.memory_space<vmem>>, vector<16x2x8xf32>
    %294 = vector.shape_cast %293 : vector<16x2x8xf32> to vector<2x16x8xf32>
    %cst_100 = arith.constant 0.000000e+00 : f32
    %295 = vector.broadcast %cst_100 : f32 to vector<2x16x8xf32>
    %296 = arith.maximumf %294, %295 : vector<2x16x8xf32>
    %c17 = arith.constant 17 : index
    %c0_101 = arith.constant 0 : index
    %297 = vector.load %arg3[%c17, %c0_101] : memref<24x200xf32, #tpu.memory_space<vmem>>, vector<1x8xf32>
    %c18 = arith.constant 18 : index
    %c0_102 = arith.constant 0 : index
    %298 = vector.load %arg3[%c18, %c0_102] : memref<24x200xf32, #tpu.memory_space<vmem>>, vector<1x8xf32>
    %299 = vector.shape_cast %296 : vector<2x16x8xf32> to vector<32x8xf32>
    %cst_103 = arith.constant dense<0.000000e+00> : vector<8xf32>
    %300 = vector.multi_reduction <add>, %299, %cst_103 [0] : vector<32x8xf32> to vector<8xf32>
    %301 = vector.shape_cast %300 : vector<8xf32> to vector<1x8xf32>
    %cst_104 = arith.constant 3.200000e+01 : f32
    %302 = vector.broadcast %cst_104 : f32 to vector<1x8xf32>
    %303 = arith.divf %301, %302 : vector<1x8xf32>
    %304 = vector.broadcast %303 : vector<1x8xf32> to vector<32x8xf32>
    %305 = arith.subf %299, %304 : vector<32x8xf32>
    %306 = arith.mulf %305, %305 : vector<32x8xf32>
    %cst_105 = arith.constant dense<0.000000e+00> : vector<8xf32>
    %307 = vector.multi_reduction <add>, %306, %cst_105 [0] : vector<32x8xf32> to vector<8xf32>
    %308 = vector.shape_cast %307 : vector<8xf32> to vector<1x8xf32>
    %cst_106 = arith.constant 3.200000e+01 : f32
    %309 = vector.broadcast %cst_106 : f32 to vector<1x8xf32>
    %310 = arith.divf %308, %309 : vector<1x8xf32>
    %311 = vector.broadcast %303 : vector<1x8xf32> to vector<32x8xf32>
    %312 = arith.subf %299, %311 : vector<32x8xf32>
    %cst_107 = arith.constant 9.99999974E-6 : f32
    %313 = vector.broadcast %cst_107 : f32 to vector<1x8xf32>
    %314 = arith.addf %310, %313 : vector<1x8xf32>
    %315 = math.rsqrt %314 : vector<1x8xf32>
    %316 = vector.broadcast %315 : vector<1x8xf32> to vector<32x8xf32>
    %317 = arith.mulf %312, %316 : vector<32x8xf32>
    %318 = vector.broadcast %297 : vector<1x8xf32> to vector<32x8xf32>
    %319 = arith.mulf %317, %318 : vector<32x8xf32>
    %320 = vector.broadcast %298 : vector<1x8xf32> to vector<32x8xf32>
    %321 = arith.addf %319, %320 : vector<32x8xf32>
    %322 = vector.shape_cast %321 : vector<32x8xf32> to vector<2x16x8xf32>
    %c752 = arith.constant 752 : index
    %c0_108 = arith.constant 0 : index
    %323 = vector.load %arg2[%c752, %c0_108] : memref<776x128xf32, #tpu.memory_space<vmem>>, vector<24x8xf32>
    %c19 = arith.constant 19 : index
    %c0_109 = arith.constant 0 : index
    %324 = vector.load %arg3[%c19, %c0_109] : memref<24x200xf32, #tpu.memory_space<vmem>>, vector<1x8xf32>
    %cst_110 = arith.constant 0.000000e+00 : f32
    %325 = vector.broadcast %cst_110 : f32 to vector<2x1x8xf32>
    %326 = vector.extract_strided_slice %322 {offsets = [0, 0, 0], sizes = [2, 15, 8], strides = [1, 1, 1]} : vector<2x16x8xf32> to vector<2x15x8xf32>
    %327 = tpu.concatenate %325, %326 in 1 : vector<2x1x8xf32>, vector<2x15x8xf32> -> vector<2x16x8xf32>
    %328 = vector.extract_strided_slice %322 {offsets = [0, 1, 0], sizes = [2, 15, 8], strides = [1, 1, 1]} : vector<2x16x8xf32> to vector<2x15x8xf32>
    %329 = tpu.concatenate %328, %325 in 1 : vector<2x15x8xf32>, vector<2x1x8xf32> -> vector<2x16x8xf32>
    %330 = tpu.concatenate %327, %322, %329 in 2 : vector<2x16x8xf32>, vector<2x16x8xf32>, vector<2x16x8xf32> -> vector<2x16x24xf32>
    %331 = vector.shape_cast %330 : vector<2x16x24xf32> to vector<32x24xf32>
    %cst_111 = arith.constant dense<0.000000e+00> : vector<32x8xf32>
    %332 = tpu.matmul %331, %323, %cst_111 {dimension_numbers = #tpu.dot_dimension_numbers<[1], [0], [0], [1], [0, 0, 1, 1], [], []>} : vector<32x24xf32>, vector<24x8xf32>, vector<32x8xf32> -> vector<32x8xf32>
    %333 = vector.broadcast %324 : vector<1x8xf32> to vector<32x8xf32>
    %334 = arith.addf %332, %333 : vector<32x8xf32>
    %335 = vector.extract_strided_slice %334 {offsets = [0, 0], sizes = [32, 4], strides = [1, 1]} : vector<32x8xf32> to vector<32x4xf32>
    %c0_112 = arith.constant 0 : index
    %c0_113 = arith.constant 0 : index
    %c0_114 = arith.constant 0 : index
    %336 = vector.load %arg7[%c0_112, %c0_113, %c0_114] : memref<32x2x16xf32, #tpu.memory_space<vmem>>, vector<32x1x4xf32>
    %337 = vector.shape_cast %336 : vector<32x1x4xf32> to vector<32x4xf32>
    %338 = vector.shape_cast %335 : vector<32x4xf32> to vector<32x1x4xf32>
    tpu.vector_store %arg7[%c0_112, %c0_113, %c0_114], %338 {strides = array<i32>} : memref<32x2x16xf32, #tpu.memory_space<vmem>>, vector<32x1x4xf32>,
    %339 = vector.extract_strided_slice %334 {offsets = [0, 4], sizes = [32, 4], strides = [1, 1]} : vector<32x8xf32> to vector<32x4xf32>
    %c0_115 = arith.constant 0 : index
    %c1_116 = arith.constant 1 : index
    %c0_117 = arith.constant 0 : index
    %340 = vector.load %arg7[%c0_115, %c1_116, %c0_117] : memref<32x2x16xf32, #tpu.memory_space<vmem>>, vector<32x1x4xf32>
    %341 = vector.shape_cast %340 : vector<32x1x4xf32> to vector<32x4xf32>
    %342 = vector.shape_cast %339 : vector<32x4xf32> to vector<32x1x4xf32>
    tpu.vector_store %arg7[%c0_115, %c1_116, %c0_117], %342 {strides = array<i32>} : memref<32x2x16xf32, #tpu.memory_space<vmem>>, vector<32x1x4xf32>,
    %c0_118 = arith.constant 0 : index
    %c0_119 = arith.constant 0 : index
    %c0_120 = arith.constant 0 : index
    %343 = vector.load %arg7[%c0_118, %c0_119, %c0_120] : memref<32x2x16xf32, #tpu.memory_space<vmem>>, vector<32x2x4xf32>
    %344 = vector.shape_cast %343 : vector<32x2x4xf32> to vector<2x32x4xf32>
    %345 = tpu.transpose %344, [0, 2, 1] : vector<2x32x4xf32> -> vector<2x4x32xf32>
    %346 = math.cos %345 : vector<2x4x32xf32>
    %c0_121 = arith.constant 0 : index
    %c0_122 = arith.constant 0 : index
    %c0_123 = arith.constant 0 : index
    %347 = vector.load %arg4[%c0_121, %c0_122, %c0_123] : memref<2x4x32xf32, #tpu.memory_space<vmem>>, vector<2x4x32xf32>
    tpu.vector_store %arg4[%c0_121, %c0_122, %c0_123], %346 {strides = array<i32>} : memref<2x4x32xf32, #tpu.memory_space<vmem>>, vector<2x4x32xf32>,
    return
  }
}

</mosaic_0001>

<llo_original>
// kernel: varae_forward.1
$region0: #{varae_forward.1}
  #allocation0 [shape = 'u32[]', space=smem, size = 0x4, offset = 0x4, fixed_abs, tag = 'smem constant byte address 0x4 - core index']
  #allocation1 [shape = 'u32[144,128]{1,0:T(1,128)}', space=vmem, size = 0x12000, scoped, tag = 'internal scratch']
  #allocation2 [shape = 'f32[32,2,16]{2,1,0:T(2,128)}', space=vmem, size = 0x8000, scoped, tag = 'scratch operand']
  %s0 = inlined_call_operand.hbm [shape: f32[2,4,32], index: 0, kind: input, shape index: {}]
  %s1 = inlined_call_operand.vmem [shape: f32[2,16], index: 1, kind: input, shape index: {}]
  %s2 = inlined_call_operand.hbm [shape: f32[776,128], index: 2, kind: input, shape index: {}]
  %s3 = inlined_call_operand.hbm [shape: f32[24,200], index: 3, kind: input, shape index: {}]
  %s4 = inlined_call_operand.hbm [shape: f32[2,4,32], index: 4, kind: output, shape index: {0}]
  %s5 = inlined_call_operand.hbm [shape: f32[2,16], index: 5, kind: output, shape index: {1}]
  %s6 = inlined_call_operand.hbm [shape: f32[2,16], index: 6, kind: output, shape index: {2}]
  %7 = xla_tuple %s4, %s5, %s6
  %s8 = sld [smem:[#allocation0]]
  $region54: #{varae_forward.1} parent=0
    _
  %s10 = ssub.s32 1, %s8
  %s11 = scalar_select 0, %s10, %s8
  $region1: #{varae_forward.1} parent=0
    #allocation3 [shape = 'u8[4096]{0}', space=vmem, size = 0x1000, scoped, tag = 'input window, operand 0, single buffered']
    #allocation4 [shape = 's32[1]{0}', space=sflag, size = 0x4, scoped, tag = 'scoped memory for varae_forward.1']
    #allocation5 [shape = 's32[1]{0}', space=sflag, size = 0x4, scoped, tag = 'scoped memory for varae_forward.1']
    #allocation6 [shape = 'u8[397312]{0}', space=vmem, size = 0x61000, scoped, tag = 'input window, operand 2, single buffered']
    #allocation7 [shape = 's32[1]{0}', space=sflag, size = 0x4, scoped, tag = 'scoped memory for varae_forward.1']
    #allocation8 [shape = 'u8[24576]{0}', space=vmem, size = 0x6000, scoped, tag = 'input window, operand 3, single buffered']
    #allocation9 [shape = 'u8[4096]{0}', space=vmem, size = 0x1000, scoped, tag = 'output window, operand 0, single buffered']
    #allocation10 [shape = 'u8[1024]{0}', space=vmem, size = 0x400, scoped, tag = 'output window, operand 1, single buffered']
    #allocation11 [shape = 's32[1]{0}', space=sflag, size = 0x4, scoped, tag = 'scoped memory for varae_forward.1']
    #allocation12 [shape = 'u8[1024]{0}', space=vmem, size = 0x400, scoped, tag = 'output window, operand 2, single buffered']
    %12 = vsyncpa [#allocation4], 0
    %13 = vsyncpa [#allocation7], 0
    %14 = vsyncpa [#allocation5], 0
    %15 = vsyncpa [#allocation11], 0
    // Predicated region
    $region2: #{varae_forward.1} parent=1 // pred_check
      _
    $region3: #{varae_forward.1} parent=1 // pred_check_branch
      %17 = sbr.rel (0) target = $region5
    $region4: #{varae_forward.1} parent=1 // pred_region
      %s19 = ssub.s32 128, 128
      %20 = vsyncadd [#allocation4], %s19
      %s21 = sshll.u32 [#allocation3], 4
      %s22 = int_to_ptr.vmem [resolvable:$true] %s21
      %27 = dma.hbm_to_vmem [thread:$0]  %s0, 128, %s22, [#allocation4], 64, 64, 4
    $region5: #{varae_forward.1} parent=1 // pred_fallthru
      _
    // Predicated region
    $region6: #{varae_forward.1} parent=1 // pred_check
      _
    $region7: #{varae_forward.1} parent=1 // pred_check_branch
      %29 = sbr.rel (0) target = $region9
    $region8: #{varae_forward.1} parent=1 // pred_region
      _
    $region9: #{varae_forward.1} parent=1 // pred_fallthru
      _
    // Predicated region
    $region10: #{varae_forward.1} parent=1 // pred_check
      _
    $region11: #{varae_forward.1} parent=1 // pred_check_branch
      %31 = sbr.rel (0) target = $region13
    $region12: #{varae_forward.1} parent=1 // pred_region
      %s33 = ssub.s32 12416, 12416
      %34 = vsyncadd [#allocation7], %s33
      %s35 = sshll.u32 [#allocation6], 4
      %s36 = int_to_ptr.vmem [resolvable:$true] %s35
      %41 = dma.hbm_to_vmem [thread:$0]  %s2, 12416, %s36, [#allocation7], 128, 128, 8
    $region13: #{varae_forward.1} parent=1 // pred_fallthru
      _
    // Predicated region
    $region14: #{varae_forward.1} parent=1 // pred_check
      _
    $region15: #{varae_forward.1} parent=1 // pred_check_branch
      %43 = sbr.rel (0) target = $region17
    $region16: #{varae_forward.1} parent=1 // pred_region
      %s45 = ssub.s32 768, 768
      %46 = vsyncadd [#allocation7], %s45
      %s47 = sshll.u32 [#allocation8], 4
      %s48 = int_to_ptr.vmem [resolvable:$true] %s47
      %53 = dma.hbm_to_vmem [thread:$0]  %s3, 768, %s48, [#allocation7], 256, 256, 16
    $region17: #{varae_forward.1} parent=1 // pred_fallthru
      _
    // Predicated region
    $region18: #{varae_forward.1} parent=1 // pred_check
      _
    $region19: #{varae_forward.1} parent=1 // pred_check_branch
      %55 = sbr.rel (0) target = $region21
    $region20: #{varae_forward.1} parent=1 // pred_region
      %56 = dma.done [#allocation4], 128
    $region21: #{varae_forward.1} parent=1 // pred_fallthru
      _
    // Predicated region
    $region22: #{varae_forward.1} parent=1 // pred_check
      _
    $region23: #{varae_forward.1} parent=1 // pred_check_branch
      %58 = sbr.rel (0) target = $region25
    $region24: #{varae_forward.1} parent=1 // pred_region
      %59 = dma.done [#allocation7], 12416
    $region25: #{varae_forward.1} parent=1 // pred_fallthru
      _
    // Predicated region
    $region26: #{varae_forward.1} parent=1 // pred_check
      _
    $region27: #{varae_forward.1} parent=1 // pred_check_branch
      %61 = sbr.rel (0) target = $region29
    $region28: #{varae_forward.1} parent=1 // pred_region
      %62 = dma.done [#allocation7], 768
    $region29: #{varae_forward.1} parent=1 // pred_fallthru
      _
    %v63 = vld [vmem:[#allocation3] sm:$0xf]
    %v64 = vld [vmem:[#allocation3 + $0x4] sm:$0xf]
    %65 = vxpose.xlu0.b32.start [1/16] %v63, 128
    %66 = vxpose.xlu0.b32.cont [2/16] 0.0, 128
    %67 = vxpose.xlu0.b32.cont [3/16] 0.0, 128
    %68 = vxpose.xlu0.b32.cont [4/16] 0.0, 128
    %69 = vxpose.xlu0.b32.cont [5/16] 0.0, 128
    %70 = vxpose.xlu0.b32.cont [6/16] 0.0, 128
    %71 = vxpose.xlu0.b32.cont [7/16] 0.0, 128
    %72 = vxpose.xlu0.b32.cont [8/16] 0.0, 128
    %73 = vxpose.xlu0.b32.cont [9/16] 0.0, 128
    %74 = vxpose.xlu0.b32.cont [10/16] 0.0, 128
    %75 = vxpose.xlu0.b32.cont [11/16] 0.0, 128
    %76 = vxpose.xlu0.b32.cont [12/16] 0.0, 128
    %77 = vxpose.xlu0.b32.cont [13/16] 0.0, 128
    %78 = vxpose.xlu0.b32.cont [14/16] 0.0, 128
    %79 = vxpose.xlu0.b32.cont [15/16] 0.0, 128
    %80 = vxpose.xlu0.b32.end [16/16] 0.0, 128
    %v81 = vpop.trf.xlu0
    %v82 = vpop.trf.xlu0
    %v83 = vpop.trf.xlu0
    %v84 = vpop.trf.xlu0
    %v85 = vpop.trf.xlu0
    %v86 = vpop.trf.xlu0
    %v87 = vpop.trf.xlu0
    %v88 = vpop.trf.xlu0
    %v89 = vpop.trf.xlu0
    %v90 = vpop.trf.xlu0
    %v91 = vpop.trf.xlu0
    %v92 = vpop.trf.xlu0
    %v93 = vpop.trf.xlu0
    %v94 = vpop.trf.xlu0
    %v95 = vpop.trf.xlu0
    %v96 = vpop.trf.xlu0
    %97 = vxpose.xlu0.b32.start [1/16] %v64, 128
    %98 = vxpose.xlu0.b32.cont [2/16] 0.0, 128
    %99 = vxpose.xlu0.b32.cont [3/16] 0.0, 128
    %100 = vxpose.xlu0.b32.cont [4/16] 0.0, 128
    %101 = vxpose.xlu0.b32.cont [5/16] 0.0, 128
    %102 = vxpose.xlu0.b32.cont [6/16] 0.0, 128
    %103 = vxpose.xlu0.b32.cont [7/16] 0.0, 128
    %104 = vxpose.xlu0.b32.cont [8/16] 0.0, 128
    %105 = vxpose.xlu0.b32.cont [9/16] 0.0, 128
    %106 = vxpose.xlu0.b32.cont [10/16] 0.0, 128
    %107 = vxpose.xlu0.b32.cont [11/16] 0.0, 128
    %108 = vxpose.xlu0.b32.cont [12/16] 0.0, 128
    %109 = vxpose.xlu0.b32.cont [13/16] 0.0, 128
    %110 = vxpose.xlu0.b32.cont [14/16] 0.0, 128
    %111 = vxpose.xlu0.b32.cont [15/16] 0.0, 128
    %112 = vxpose.xlu0.b32.end [16/16] 0.0, 128
    %v113 = vpop.trf.xlu0
    %v114 = vpop.trf.xlu0
    %v115 = vpop.trf.xlu0
    %v116 = vpop.trf.xlu0
    %v117 = vpop.trf.xlu0
    %v118 = vpop.trf.xlu0
    %v119 = vpop.trf.xlu0
    %v120 = vpop.trf.xlu0
    %v121 = vpop.trf.xlu0
    %v122 = vpop.trf.xlu0
    %v123 = vpop.trf.xlu0
    %v124 = vpop.trf.xlu0
    %v125 = vpop.trf.xlu0
    %v126 = vpop.trf.xlu0
    %v127 = vpop.trf.xlu0
    %v128 = vpop.trf.xlu0
    %v129 = vld [vmem:[#allocation6] sm:$0xff]
    %v130 = vld [vmem:[#allocation6 + $0x8] sm:$0xf]
    %v131 = vld [vmem:[#allocation8] ss:$0 sm:$0xff]
    %v132 = vld [vmem:[#allocation8 + $0x1] ss:$0 sm:$0xff]
    %v133 = vld [vmem:[#allocation8 + $0x2] ss:$0 sm:$0xff]
    %v136 = vrot.slane %v84, 7
    %v137 = vrot.slane %v116, 7
    %vm146 = vcmask 1040384
    %v147 = vrot.slane %v81, 7
    %v148 = vrot.slane %v82, 7
    %v149 = vsel %vm146, %v147, %v148
    %v150 = vrot.slane %v83, 7
    %v151 = vsel %vm146, %v148, %v150
    %v152 = vsel %vm146, %v150, %v136
    %v153 = vrot.slane %v113, 7
    %v154 = vrot.slane %v114, 7
    %v155 = vsel %vm146, %v153, %v154
    %v156 = vrot.slane %v115, 7
    %v157 = vsel %vm146, %v154, %v156
    %v158 = vsel %vm146, %v156, %v137
    %v167 = vsel %vm146, %v136, %v147
    %v168 = vsel %vm146, %v137, %v153
    %vm169 = vcmask 1046528
    %v170 = vrot.slane %v81, 1
    %v171 = vrot.slane %v82, 1
    %v172 = vsel %vm169, %v170, %v171
    %v173 = vrot.slane %v83, 1
    %v174 = vsel %vm169, %v171, %v173
    %v175 = vrot.slane %v84, 1
    %v176 = vsel %vm169, %v173, %v175
    %v177 = vrot.slane %v113, 1
    %v178 = vrot.slane %v114, 1
    %v179 = vsel %vm169, %v177, %v178
    %v180 = vrot.slane %v115, 1
    %v181 = vsel %vm169, %v178, %v180
    %v182 = vrot.slane %v116, 1
    %v183 = vsel %vm169, %v180, %v182
    %v188 = vsel %vm169, %v175, %v170
    %v189 = vsel %vm169, %v182, %v177
    %190 = vrot.lane.b32.xlu0 %v81, 4
    %v191 = vpop.permute.xlu0 %190
    %192 = vrot.lane.b32.xlu0 %v82, 4
    %v193 = vpop.permute.xlu0 %192
    %194 = vrot.lane.b32.xlu0 %v83, 4
    %v195 = vpop.permute.xlu0 %194
    %196 = vrot.lane.b32.xlu0 %v84, 4
    %v197 = vpop.permute.xlu0 %196
    %198 = vrot.lane.b32.xlu0 %v113, 4
    %v199 = vpop.permute.xlu0 %198
    %200 = vrot.lane.b32.xlu0 %v114, 4
    %v201 = vpop.permute.xlu0 %200
    %202 = vrot.lane.b32.xlu0 %v115, 4
    %v203 = vpop.permute.xlu0 %202
    %204 = vrot.lane.b32.xlu0 %v116, 4
    %v205 = vpop.permute.xlu0 %204
    %216 = vrot.lane.b32.xlu0 %v172, 8
    %v217 = vpop.permute.xlu0 %216
    %218 = vrot.lane.b32.xlu0 %v174, 8
    %v219 = vpop.permute.xlu0 %218
    %220 = vrot.lane.b32.xlu0 %v176, 8
    %v221 = vpop.permute.xlu0 %220
    %222 = vrot.lane.b32.xlu0 %v188, 8
    %v223 = vpop.permute.xlu0 %222
    %224 = vrot.lane.b32.xlu0 %v179, 8
    %v225 = vpop.permute.xlu0 %224
    %226 = vrot.lane.b32.xlu0 %v181, 8
    %v227 = vpop.permute.xlu0 %226
    %228 = vrot.lane.b32.xlu0 %v183, 8
    %v229 = vpop.permute.xlu0 %228
    %230 = vrot.lane.b32.xlu0 %v189, 8
    %v231 = vpop.permute.xlu0 %230
    %vm240 = vcmask 31744
    %v241 = vsel %vm240, %v167, %v191
    %v242 = vsel %vm240, %v149, %v193
    %v243 = vsel %vm240, %v151, %v195
    %v244 = vsel %vm240, %v152, %v197
    %v245 = vsel %vm240, %v168, %v199
    %v246 = vsel %vm240, %v155, %v201
    %v247 = vsel %vm240, %v157, %v203
    %v248 = vsel %vm240, %v158, %v205
    %vm249 = vcmask 64512
    %v250 = vsel %vm249, %v241, %v217
    %v251 = vsel %vm249, %v242, %v219
    %v252 = vsel %vm249, %v243, %v221
    %v253 = vsel %vm249, %v244, %v223
    %v254 = vsel %vm249, %v245, %v225
    %v255 = vsel %vm249, %v246, %v227
    %v256 = vsel %vm249, %v247, %v229
    %v257 = vsel %vm249, %v248, %v231
    %vm258 = vcmask 97280
    %v260 = vsel %vm258, %v250, 0
    %v263 = vsel %vm258, %v251, 0
    %v266 = vsel %vm258, %v252, 0
    %v269 = vsel %vm258, %v253, 0
    %v272 = vsel %vm258, %v254, 0
    %v275 = vsel %vm258, %v255, 0
    %v278 = vsel %vm258, %v256, 0
    %v281 = vsel %vm258, %v257, 0
    %vm283 = vcmask 1043456
    %v285 = vsel %vm283, %v130, 0
    %287 = vmatprep.subr.mxu0 0.0
    %288 = vmatpush1.msra.mxu0 %v129
    %289 = vmatprep.subr.mxu0 0.0
    %290 = vmatpush1.msra.mxu0 %v285
    %291 = vmatprep.subr.mxu0 0.0
    %292 = vmatpush1.msra.mxu0 0.0
    %293 = vmatprep.subr.mxu0 0.0
    %294 = vmatpush1.msra.mxu0 0.0
    %295 = vmatprep.subr.mxu0 0.0
    %296 = vmatpush1.msra.mxu0 0.0
    %297 = vmatprep.subr.mxu0 0.0
    %298 = vmatpush1.msra.mxu0 0.0
    %299 = vmatprep.subr.mxu0 0.0
    %300 = vmatpush1.msra.mxu0 0.0
    %301 = vmatprep.subr.mxu0 0.0
    %302 = vmatpush1.msra.mxu0 0.0
    %303 = vmatprep.subr.mxu0 0.0
    %304 = vmatpush1.msra.mxu0 0.0
    %305 = vmatprep.subr.mxu0 0.0
    %306 = vmatpush1.msra.mxu0 0.0
    %307 = vmatprep.subr.mxu0 0.0
    %308 = vmatpush1.msra.mxu0 0.0
    %309 = vmatprep.subr.mxu0 0.0
    %310 = vmatpush1.msra.mxu0 0.0
    %311 = vmatprep.subr.mxu0 0.0
    %312 = vmatpush1.msra.mxu0 0.0
    %313 = vmatprep.subr.mxu0 0.0
    %314 = vmatpush1.msra.mxu0 0.0
    %315 = vmatprep.subr.mxu0 0.0
    %316 = vmatpush1.msra.mxu0 0.0
    %317 = vmatprep.subr.mxu0 0.0
    %318 = vmatpush1.msra.mxu0 0.0
    %319 = vmatprep.subr.mxu0 0.0
    %320 = vmatpush1.msra.mxu0 0.0
    %321 = vmatprep.subr.mxu0 0.0
    %322 = vmatpush1.msra.mxu0 0.0
    %323 = vmatprep.subr.mxu0 0.0
    %324 = vmatpush1.msra.mxu0 0.0
    %325 = vmatprep.subr.mxu0 0.0
    %326 = vmatpush1.msra.mxu0 0.0
    %327 = vmatprep.subr.mxu0 0.0
    %328 = vmatpush1.msra.mxu0 0.0
    %329 = vmatprep.subr.mxu0 0.0
    %330 = vmatpush1.msra.mxu0 0.0
    %331 = vmatprep.subr.mxu0 0.0
    %332 = vmatpush1.msra.mxu0 0.0
    %333 = vmatprep.subr.mxu0 0.0
    %334 = vmatpush1.msra.mxu0 0.0
    %335 = vmatprep.subr.mxu0 0.0
    %336 = vmatpush1.msra.mxu0 0.0
    %337 = vmatprep.subr.mxu0 0.0
    %338 = vmatpush1.msra.mxu0 0.0
    %339 = vmatprep.subr.mxu0 0.0
    %340 = vmatpush1.msra.mxu0 0.0
    %341 = vmatprep.subr.mxu0 0.0
    %342 = vmatpush1.msra.mxu0 0.0
    %343 = vmatprep.subr.mxu0 0.0
    %344 = vmatpush1.msra.mxu0 0.0
    %345 = vmatprep.subr.mxu0 0.0
    %346 = vmatpush1.msra.mxu0 0.0
    %347 = vmatprep.subr.mxu0 0.0
    %348 = vmatpush1.msra.mxu0 0.0
    %349 = vmatprep.subr.mxu0 0.0
    %350 = vmatpush1.msra.mxu0 0.0
    %351 = vmatprep.mubr.f32.mxu0 0.0
    %352 = vmatmul.mubr.f32.gmra.mrb[0].mxu0 %v260
    %v353 = vpop.f32.mrb[0].mxu0
    %v354 = vadd.f32 %v131, %v353
    %v355 = vpop.f32.mrb[0].mxu0
    %356 = vmatprep.mubr.f32.mxu0 0.0
    %357 = vmatmul.mubr.f32.gmra.mrb[0].mxu0 %v263
    %v358 = vpop.f32.mrb[0].mxu0
    %v359 = vadd.f32 %v131, %v358
    %v360 = vpop.f32.mrb[0].mxu0
    %361 = vmatprep.mubr.f32.mxu0 0.0
    %362 = vmatmul.mubr.f32.gmra.mrb[0].mxu0 %v266
    %v363 = vpop.f32.mrb[0].mxu0
    %v364 = vadd.f32 %v131, %v363
    %v365 = vpop.f32.mrb[0].mxu0
    %366 = vmatprep.mubr.f32.mxu0 0.0
    %367 = vmatmul.mubr.f32.gmra.mrb[0].mxu0 %v269
    %v368 = vpop.f32.mrb[0].mxu0
    %v369 = vadd.f32 %v131, %v368
    %v370 = vpop.f32.mrb[0].mxu0
    %371 = vmatprep.mubr.f32.mxu0 0.0
    %372 = vmatmul.mubr.f32.gmra.mrb[0].mxu0 %v272
    %v373 = vpop.f32.mrb[0].mxu0
    %v374 = vadd.f32 %v131, %v373
    %v375 = vpop.f32.mrb[0].mxu0
    %376 = vmatprep.mubr.f32.mxu0 0.0
    %377 = vmatmul.mubr.f32.gmra.mrb[0].mxu0 %v275
    %v378 = vpop.f32.mrb[0].mxu0
    %v379 = vadd.f32 %v131, %v378
    %v380 = vpop.f32.mrb[0].mxu0
    %381 = vmatprep.mubr.f32.mxu0 0.0
    %382 = vmatmul.mubr.f32.gmra.mrb[0].mxu0 %v278
    %v383 = vpop.f32.mrb[0].mxu0
    %v384 = vadd.f32 %v131, %v383
    %v385 = vpop.f32.mrb[0].mxu0
    %386 = vmatprep.mubr.f32.mxu0 0.0
    %387 = vmatmul.mubr.f32.gmra.mrb[0].mxu0 %v281
    %v388 = vpop.f32.mrb[0].mxu0
    %v389 = vadd.f32 %v131, %v388
    %v390 = vpop.f32.mrb[0].mxu0
    %391 = vdwg.mxu0
    %vm392 = vcmp.gt.f32.partialorder %v354, 20.0
    %vm393 = vcmp.gt.f32.partialorder %v359, 20.0
    %vm394 = vcmp.gt.f32.partialorder %v364, 20.0
    %vm395 = vcmp.gt.f32.partialorder %v369, 20.0
    %vm396 = vcmp.gt.f32.partialorder %v374, 20.0
    %vm397 = vcmp.gt.f32.partialorder %v379, 20.0
    %vm398 = vcmp.gt.f32.partialorder %v384, 20.0
    %vm399 = vcmp.gt.f32.partialorder %v389, 20.0
    %v400 = vmin.f32 %v354, 20.0
    %v401 = vmin.f32 %v359, 20.0
    %v402 = vmin.f32 %v364, 20.0
    %v403 = vmin.f32 %v369, 20.0
    %v404 = vmin.f32 %v374, 20.0
    %v405 = vmin.f32 %v379, 20.0
    %v406 = vmin.f32 %v384, 20.0
    %v407 = vmin.f32 %v389, 20.0
    %v408 = vmul.f32 %v400, 1.442695
    %v409 = vpow.pop %v408
    %v410 = vmul.f32 %v401, 1.442695
    %v411 = vpow.pop %v410
    %v412 = vmul.f32 %v402, 1.442695
    %v413 = vpow.pop %v412
    %v414 = vmul.f32 %v403, 1.442695
    %v415 = vpow.pop %v414
    %v416 = vmul.f32 %v404, 1.442695
    %v417 = vpow.pop %v416
    %v418 = vmul.f32 %v405, 1.442695
    %v419 = vpow.pop %v418
    %v420 = vmul.f32 %v406, 1.442695
    %v421 = vpow.pop %v420
    %v422 = vmul.f32 %v407, 1.442695
    %v423 = vpow.pop %v422
    %v424 = vadd.f32 %v409, 1.0
    %v425 = vlog2.pop %v424
    %v426 = vmul.f32 %v425, 0.6931472
    %v427 = vmul.f32 -0.5, %v409
    %v428 = vadd.f32 %v427, 1.0
    %v429 = vmul.f32 %v428, %v409
    %v430 = vand.u32 2147483647, %v409
    %vm431 = vcmp.lt.f32.partialorder %v430, 0.0004427343
    %v432 = vsel %vm431, %v429, %v426
    %v433 = vadd.f32 %v411, 1.0
    %v434 = vlog2.pop %v433
    %v435 = vmul.f32 %v434, 0.6931472
    %v436 = vmul.f32 -0.5, %v411
    %v437 = vadd.f32 %v436, 1.0
    %v438 = vmul.f32 %v437, %v411
    %v439 = vand.u32 2147483647, %v411
    %vm440 = vcmp.lt.f32.partialorder %v439, 0.0004427343
    %v441 = vsel %vm440, %v438, %v435
    %v442 = vadd.f32 %v413, 1.0
    %v443 = vlog2.pop %v442
    %v444 = vmul.f32 %v443, 0.6931472
    %v445 = vmul.f32 -0.5, %v413
    %v446 = vadd.f32 %v445, 1.0
    %v447 = vmul.f32 %v446, %v413
    %v448 = vand.u32 2147483647, %v413
    %vm449 = vcmp.lt.f32.partialorder %v448, 0.0004427343
    %v450 = vsel %vm449, %v447, %v444
    %v451 = vadd.f32 %v415, 1.0
    %v452 = vlog2.pop %v451
    %v453 = vmul.f32 %v452, 0.6931472
    %v454 = vmul.f32 -0.5, %v415
    %v455 = vadd.f32 %v454, 1.0
    %v456 = vmul.f32 %v455, %v415
    %v457 = vand.u32 2147483647, %v415
    %vm458 = vcmp.lt.f32.partialorder %v457, 0.0004427343
    %v459 = vsel %vm458, %v456, %v453
    %v460 = vadd.f32 %v417, 1.0
    %v461 = vlog2.pop %v460
    %v462 = vmul.f32 %v461, 0.6931472
    %v463 = vmul.f32 -0.5, %v417
    %v464 = vadd.f32 %v463, 1.0
    %v465 = vmul.f32 %v464, %v417
    %v466 = vand.u32 2147483647, %v417
    %vm467 = vcmp.lt.f32.partialorder %v466, 0.0004427343
    %v468 = vsel %vm467, %v465, %v462
    %v469 = vadd.f32 %v419, 1.0
    %v470 = vlog2.pop %v469
    %v471 = vmul.f32 %v470, 0.6931472
    %v472 = vmul.f32 -0.5, %v419
    %v473 = vadd.f32 %v472, 1.0
    %v474 = vmul.f32 %v473, %v419
    %v475 = vand.u32 2147483647, %v419
    %vm476 = vcmp.lt.f32.partialorder %v475, 0.0004427343
    %v477 = vsel %vm476, %v474, %v471
    %v478 = vadd.f32 %v421, 1.0
    %v479 = vlog2.pop %v478
    %v480 = vmul.f32 %v479, 0.6931472
    %v481 = vmul.f32 -0.5, %v421
    %v482 = vadd.f32 %v481, 1.0
    %v483 = vmul.f32 %v482, %v421
    %v484 = vand.u32 2147483647, %v421
    %vm485 = vcmp.lt.f32.partialorder %v484, 0.0004427343
    %v486 = vsel %vm485, %v483, %v480
    %v487 = vadd.f32 %v423, 1.0
    %v488 = vlog2.pop %v487
    %v489 = vmul.f32 %v488, 0.6931472
    %v490 = vmul.f32 -0.5, %v423
    %v491 = vadd.f32 %v490, 1.0
    %v492 = vmul.f32 %v491, %v423
    %v493 = vand.u32 2147483647, %v423
    %vm494 = vcmp.lt.f32.partialorder %v493, 0.0004427343
    %v495 = vsel %vm494, %v492, %v489
    %v496 = vsel %vm392, %v354, %v432
    %v497 = vsel %vm393, %v359, %v441
    %v498 = vsel %vm394, %v364, %v450
    %v499 = vsel %vm395, %v369, %v459
    %v500 = vsel %vm396, %v374, %v468
    %v501 = vsel %vm397, %v379, %v477
    %v502 = vsel %vm398, %v384, %v486
    %v503 = vsel %vm399, %v389, %v495
    %v512 = vcombine.high %v496, %v496
    %v514 = vunpack.c.l.s4 1983009808
    %v515 = vunpack.c.0.s8 %v514
    %v516 = vlaneseq
    %v517 = vshrl.u32 %v516, 7
    %v518 = vsub.s32 %v515, %v517
    %v519 = vrot.slane %v496, %v518
    %v521 = vunpack.c.l.s4 1983009808
    %v522 = vunpack.c.0.s8 %v521
    %v523 = vlaneseq
    %v524 = vshrl.u32 %v523, 7
    %v525 = vsub.s32 %v522, %v524
    %v526 = vrot.slane %v512, %v525
    %v527 = vcombine.high %v519, %v519
    %v528 = vcombine.high %v526, %v526
    %v529 = vcombine.high %v497, %v497
    %v531 = vunpack.c.l.s4 1983009808
    %v532 = vunpack.c.0.s8 %v531
    %v533 = vlaneseq
    %v534 = vshrl.u32 %v533, 7
    %v535 = vsub.s32 %v532, %v534
    %v536 = vrot.slane %v497, %v535
    %v538 = vunpack.c.l.s4 1983009808
    %v539 = vunpack.c.0.s8 %v538
    %v540 = vlaneseq
    %v541 = vshrl.u32 %v540, 7
    %v542 = vsub.s32 %v539, %v541
    %v543 = vrot.slane %v529, %v542
    %v544 = vcombine.high %v536, %v536
    %v545 = vcombine.high %v543, %v543
    %v546 = vcombine.high %v498, %v498
    %v548 = vunpack.c.l.s4 1983009808
    %v549 = vunpack.c.0.s8 %v548
    %v550 = vlaneseq
    %v551 = vshrl.u32 %v550, 7
    %v552 = vsub.s32 %v549, %v551
    %v553 = vrot.slane %v498, %v552
    %v555 = vunpack.c.l.s4 1983009808
    %v556 = vunpack.c.0.s8 %v555
    %v557 = vlaneseq
    %v558 = vshrl.u32 %v557, 7
    %v559 = vsub.s32 %v556, %v558
    %v560 = vrot.slane %v546, %v559
    %v561 = vcombine.high %v553, %v553
    %v562 = vcombine.high %v560, %v560
    %v563 = vcombine.high %v499, %v499
    %v565 = vunpack.c.l.s4 1983009808
    %v566 = vunpack.c.0.s8 %v565
    %v567 = vlaneseq
    %v568 = vshrl.u32 %v567, 7
    %v569 = vsub.s32 %v566, %v568
    %v570 = vrot.slane %v499, %v569
    %v572 = vunpack.c.l.s4 1983009808
    %v573 = vunpack.c.0.s8 %v572
    %v574 = vlaneseq
    %v575 = vshrl.u32 %v574, 7
    %v576 = vsub.s32 %v573, %v575
    %v577 = vrot.slane %v563, %v576
    %v578 = vcombine.high %v570, %v570
    %v579 = vcombine.high %v577, %v577
    %v580 = vcombine.high %v500, %v500
    %v582 = vunpack.c.l.s4 1983009808
    %v583 = vunpack.c.0.s8 %v582
    %v584 = vlaneseq
    %v585 = vshrl.u32 %v584, 7
    %v586 = vsub.s32 %v583, %v585
    %v587 = vrot.slane %v500, %v586
    %v589 = vunpack.c.l.s4 1983009808
    %v590 = vunpack.c.0.s8 %v589
    %v591 = vlaneseq
    %v592 = vshrl.u32 %v591, 7
    %v593 = vsub.s32 %v590, %v592
    %v594 = vrot.slane %v580, %v593
    %v595 = vcombine.high %v587, %v587
    %v596 = vcombine.high %v594, %v594
    %v597 = vcombine.high %v501, %v501
    %v599 = vunpack.c.l.s4 1983009808
    %v600 = vunpack.c.0.s8 %v599
    %v601 = vlaneseq
    %v602 = vshrl.u32 %v601, 7
    %v603 = vsub.s32 %v600, %v602
    %v604 = vrot.slane %v501, %v603
    %v606 = vunpack.c.l.s4 1983009808
    %v607 = vunpack.c.0.s8 %v606
    %v608 = vlaneseq
    %v609 = vshrl.u32 %v608, 7
    %v610 = vsub.s32 %v607, %v609
    %v611 = vrot.slane %v597, %v610
    %v612 = vcombine.high %v604, %v604
    %v613 = vcombine.high %v611, %v611
    %v614 = vcombine.high %v502, %v502
    %v616 = vunpack.c.l.s4 1983009808
    %v617 = vunpack.c.0.s8 %v616
    %v618 = vlaneseq
    %v619 = vshrl.u32 %v618, 7
    %v620 = vsub.s32 %v617, %v619
    %v621 = vrot.slane %v502, %v620
    %v623 = vunpack.c.l.s4 1983009808
    %v624 = vunpack.c.0.s8 %v623
    %v625 = vlaneseq
    %v626 = vshrl.u32 %v625, 7
    %v627 = vsub.s32 %v624, %v626
    %v628 = vrot.slane %v614, %v627
    %v629 = vcombine.high %v621, %v621
    %v630 = vcombine.high %v628, %v628
    %v631 = vcombine.high %v503, %v503
    %v633 = vunpack.c.l.s4 1983009808
    %v634 = vunpack.c.0.s8 %v633
    %v635 = vlaneseq
    %v636 = vshrl.u32 %v635, 7
    %v637 = vsub.s32 %v634, %v636
    %v638 = vrot.slane %v503, %v637
    %v640 = vunpack.c.l.s4 1983009808
    %v641 = vunpack.c.0.s8 %v640
    %v642 = vlaneseq
    %v643 = vshrl.u32 %v642, 7
    %v644 = vsub.s32 %v641, %v643
    %v645 = vrot.slane %v631, %v644
    %v646 = vcombine.high %v638, %v638
    %v647 = vcombine.high %v645, %v645
    %v680 = vrot.slane %v519, 7
    %v681 = vrot.slane %v680, 2
    %v682 = vrot.slane %v527, 7
    %v683 = vrot.slane %v682, 2
    %v684 = vrot.slane %v526, 7
    %v685 = vrot.slane %v684, 2
    %v686 = vrot.slane %v528, 7
    %v687 = vrot.slane %v686, 2
    %v688 = vrot.slane %v536, 7
    %v689 = vrot.slane %v688, 2
    %v690 = vrot.slane %v544, 7
    %v691 = vrot.slane %v690, 2
    %v692 = vrot.slane %v543, 7
    %v693 = vrot.slane %v692, 2
    %v694 = vrot.slane %v545, 7
    %v695 = vrot.slane %v694, 2
    %v696 = vrot.slane %v553, 7
    %v697 = vrot.slane %v696, 2
    %v698 = vrot.slane %v561, 7
    %v699 = vrot.slane %v698, 2
    %v700 = vrot.slane %v560, 7
    %v701 = vrot.slane %v700, 2
    %v702 = vrot.slane %v562, 7
    %v703 = vrot.slane %v702, 2
    %v704 = vrot.slane %v570, 7
    %v705 = vrot.slane %v704, 2
    %v706 = vrot.slane %v578, 7
    %v707 = vrot.slane %v706, 2
    %v708 = vrot.slane %v577, 7
    %v709 = vrot.slane %v708, 2
    %v710 = vrot.slane %v579, 7
    %v711 = vrot.slane %v710, 2
    %v712 = vrot.slane %v587, 7
    %v713 = vrot.slane %v712, 2
    %v714 = vrot.slane %v595, 7
    %v715 = vrot.slane %v714, 2
    %v716 = vrot.slane %v594, 7
    %v717 = vrot.slane %v716, 2
    %v718 = vrot.slane %v596, 7
    %v719 = vrot.slane %v718, 2
    %v720 = vrot.slane %v604, 7
    %v721 = vrot.slane %v720, 2
    %v722 = vrot.slane %v612, 7
    %v723 = vrot.slane %v722, 2
    %v724 = vrot.slane %v611, 7
    %v725 = vrot.slane %v724, 2
    %v726 = vrot.slane %v613, 7
    %v727 = vrot.slane %v726, 2
    %v728 = vrot.slane %v621, 7
    %v729 = vrot.slane %v728, 2
    %v730 = vrot.slane %v629, 7
    %v731 = vrot.slane %v730, 2
    %v732 = vrot.slane %v628, 7
    %v733 = vrot.slane %v732, 2
    %v734 = vrot.slane %v630, 7
    %v735 = vrot.slane %v734, 2
    %v736 = vrot.slane %v638, 7
    %v737 = vrot.slane %v736, 2
    %v738 = vrot.slane %v646, 7
    %v739 = vrot.slane %v738, 2
    %v740 = vrot.slane %v645, 7
    %v741 = vrot.slane %v740, 2
    %v742 = vrot.slane %v647, 7
    %v743 = vrot.slane %v742, 2
    %v776 = vadd.f32 %v519, %v681
    %v777 = vadd.f32 %v527, %v683
    %v778 = vadd.f32 %v526, %v685
    %v779 = vadd.f32 %v528, %v687
    %v780 = vadd.f32 %v536, %v689
    %v781 = vadd.f32 %v544, %v691
    %v782 = vadd.f32 %v543, %v693
    %v783 = vadd.f32 %v545, %v695
    %v784 = vadd.f32 %v553, %v697
    %v785 = vadd.f32 %v561, %v699
    %v786 = vadd.f32 %v560, %v701
    %v787 = vadd.f32 %v562, %v703
    %v788 = vadd.f32 %v570, %v705
    %v789 = vadd.f32 %v578, %v707
    %v790 = vadd.f32 %v577, %v709
    %v791 = vadd.f32 %v579, %v711
    %v792 = vadd.f32 %v587, %v713
    %v793 = vadd.f32 %v595, %v715
    %v794 = vadd.f32 %v594, %v717
    %v795 = vadd.f32 %v596, %v719
    %v796 = vadd.f32 %v604, %v721
    %v797 = vadd.f32 %v612, %v723
    %v798 = vadd.f32 %v611, %v725
    %v799 = vadd.f32 %v613, %v727
    %v800 = vadd.f32 %v621, %v729
    %v801 = vadd.f32 %v629, %v731
    %v802 = vadd.f32 %v628, %v733
    %v803 = vadd.f32 %v630, %v735
    %v804 = vadd.f32 %v638, %v737
    %v805 = vadd.f32 %v646, %v739
    %v806 = vadd.f32 %v645, %v741
    %v807 = vadd.f32 %v647, %v743
    %v808 = vmul.f32 %v776, 0.5
    %v809 = vmul.f32 %v777, 0.5
    %v810 = vmul.f32 %v778, 0.5
    %v811 = vmul.f32 %v779, 0.5
    %v812 = vmul.f32 %v780, 0.5
    %v813 = vmul.f32 %v781, 0.5
    %v814 = vmul.f32 %v782, 0.5
    %v815 = vmul.f32 %v783, 0.5
    %v816 = vmul.f32 %v784, 0.5
    %v817 = vmul.f32 %v785, 0.5
    %v818 = vmul.f32 %v786, 0.5
    %v819 = vmul.f32 %v787, 0.5
    %v820 = vmul.f32 %v788, 0.5
    %v821 = vmul.f32 %v789, 0.5
    %v822 = vmul.f32 %v790, 0.5
    %v823 = vmul.f32 %v791, 0.5
    %v824 = vmul.f32 %v792, 0.5
    %v825 = vmul.f32 %v793, 0.5
    %v826 = vmul.f32 %v794, 0.5
    %v827 = vmul.f32 %v795, 0.5
    %v828 = vmul.f32 %v796, 0.5
    %v829 = vmul.f32 %v797, 0.5
    %v830 = vmul.f32 %v798, 0.5
    %v831 = vmul.f32 %v799, 0.5
    %v832 = vmul.f32 %v800, 0.5
    %v833 = vmul.f32 %v801, 0.5
    %v834 = vmul.f32 %v802, 0.5
    %v835 = vmul.f32 %v803, 0.5
    %v836 = vmul.f32 %v804, 0.5
    %v837 = vmul.f32 %v805, 0.5
    %v838 = vmul.f32 %v806, 0.5
    %v839 = vmul.f32 %v807, 0.5
    %v872 = vlaneseq
    %v873 = vshrl.u32 %v872, 7
    %v874 = vsub.s32 0, %v873
    %v875 = vrot.slane %v808, %v874
    %v876 = vlaneseq
    %v877 = vshrl.u32 %v876, 7
    %v878 = vsub.s32 0, %v877
    %v879 = vrot.slane %v809, %v878
    %v880 = vlaneseq
    %v881 = vshrl.u32 %v880, 7
    %v882 = vsub.s32 0, %v881
    %v883 = vrot.slane %v810, %v882
    %v884 = vlaneseq
    %v885 = vshrl.u32 %v884, 7
    %v886 = vsub.s32 0, %v885
    %v887 = vrot.slane %v811, %v886
    %v888 = vlaneseq
    %v889 = vshrl.u32 %v888, 7
    %v890 = vsub.s32 0, %v889
    %v891 = vrot.slane %v812, %v890
    %v892 = vlaneseq
    %v893 = vshrl.u32 %v892, 7
    %v894 = vsub.s32 0, %v893
    %v895 = vrot.slane %v813, %v894
    %v896 = vlaneseq
    %v897 = vshrl.u32 %v896, 7
    %v898 = vsub.s32 0, %v897
    %v899 = vrot.slane %v814, %v898
    %v900 = vlaneseq
    %v901 = vshrl.u32 %v900, 7
    %v902 = vsub.s32 0, %v901
    %v903 = vrot.slane %v815, %v902
    %v904 = vlaneseq
    %v905 = vshrl.u32 %v904, 7
    %v906 = vsub.s32 0, %v905
    %v907 = vrot.slane %v816, %v906
    %v908 = vlaneseq
    %v909 = vshrl.u32 %v908, 7
    %v910 = vsub.s32 0, %v909
    %v911 = vrot.slane %v817, %v910
    %v912 = vlaneseq
    %v913 = vshrl.u32 %v912, 7
    %v914 = vsub.s32 0, %v913
    %v915 = vrot.slane %v818, %v914
    %v916 = vlaneseq
    %v917 = vshrl.u32 %v916, 7
    %v918 = vsub.s32 0, %v917
    %v919 = vrot.slane %v819, %v918
    %v920 = vlaneseq
    %v921 = vshrl.u32 %v920, 7
    %v922 = vsub.s32 0, %v921
    %v923 = vrot.slane %v820, %v922
    %v924 = vlaneseq
    %v925 = vshrl.u32 %v924, 7
    %v926 = vsub.s32 0, %v925
    %v927 = vrot.slane %v821, %v926
    %v928 = vlaneseq
    %v929 = vshrl.u32 %v928, 7
    %v930 = vsub.s32 0, %v929
    %v931 = vrot.slane %v822, %v930
    %v932 = vlaneseq
    %v933 = vshrl.u32 %v932, 7
    %v934 = vsub.s32 0, %v933
    %v935 = vrot.slane %v823, %v934
    %v936 = vlaneseq
    %v937 = vshrl.u32 %v936, 7
    %v938 = vsub.s32 0, %v937
    %v939 = vrot.slane %v824, %v938
    %v940 = vlaneseq
    %v941 = vshrl.u32 %v940, 7
    %v942 = vsub.s32 0, %v941
    %v943 = vrot.slane %v825, %v942
    %v944 = vlaneseq
    %v945 = vshrl.u32 %v944, 7
    %v946 = vsub.s32 0, %v945
    %v947 = vrot.slane %v826, %v946
    %v948 = vlaneseq
    %v949 = vshrl.u32 %v948, 7
    %v950 = vsub.s32 0, %v949
    %v951 = vrot.slane %v827, %v950
    %v952 = vlaneseq
    %v953 = vshrl.u32 %v952, 7
    %v954 = vsub.s32 0, %v953
    %v955 = vrot.slane %v828, %v954
    %v956 = vlaneseq
    %v957 = vshrl.u32 %v956, 7
    %v958 = vsub.s32 0, %v957
    %v959 = vrot.slane %v829, %v958
    %v960 = vlaneseq
    %v961 = vshrl.u32 %v960, 7
    %v962 = vsub.s32 0, %v961
    %v963 = vrot.slane %v830, %v962
    %v964 = vlaneseq
    %v965 = vshrl.u32 %v964, 7
    %v966 = vsub.s32 0, %v965
    %v967 = vrot.slane %v831, %v966
    %v968 = vlaneseq
    %v969 = vshrl.u32 %v968, 7
    %v970 = vsub.s32 0, %v969
    %v971 = vrot.slane %v832, %v970
    %v972 = vlaneseq
    %v973 = vshrl.u32 %v972, 7
    %v974 = vsub.s32 0, %v973
    %v975 = vrot.slane %v833, %v974
    %v976 = vlaneseq
    %v977 = vshrl.u32 %v976, 7
    %v978 = vsub.s32 0, %v977
    %v979 = vrot.slane %v834, %v978
    %v980 = vlaneseq
    %v981 = vshrl.u32 %v980, 7
    %v982 = vsub.s32 0, %v981
    %v983 = vrot.slane %v835, %v982
    %v984 = vlaneseq
    %v985 = vshrl.u32 %v984, 7
    %v986 = vsub.s32 0, %v985
    %v987 = vrot.slane %v836, %v986
    %v988 = vlaneseq
    %v989 = vshrl.u32 %v988, 7
    %v990 = vsub.s32 0, %v989
    %v991 = vrot.slane %v837, %v990
    %v992 = vlaneseq
    %v993 = vshrl.u32 %v992, 7
    %v994 = vsub.s32 0, %v993
    %v995 = vrot.slane %v838, %v994
    %v996 = vlaneseq
    %v997 = vshrl.u32 %v996, 7
    %v998 = vsub.s32 0, %v997
    %v999 = vrot.slane %v839, %v998
    %vm1000 = vcmask 1041409
    %v1001 = vsel %vm1000, %v879, %v875
    %vm1002 = vcmask 1042434
    %v1003 = vsel %vm1002, %v883, %v1001
    %vm1004 = vcmask 1043459
    %v1005 = vsel %vm1004, %v887, %v1003
    %vm1006 = vcmask 1044484
    %v1007 = vsel %vm1006, %v891, %v1005
    %vm1008 = vcmask 1045509
    %v1009 = vsel %vm1008, %v895, %v1007
    %vm1010 = vcmask 1046534
    %v1011 = vsel %vm1010, %v899, %v1009
    %vm1012 = vcmask 1047559
    %v1013 = vsel %vm1012, %v903, %v1011
    %v1014 = vsel %vm1000, %v911, %v907
    %v1015 = vsel %vm1002, %v915, %v1014
    %v1016 = vsel %vm1004, %v919, %v1015
    %v1017 = vsel %vm1006, %v923, %v1016
    %v1018 = vsel %vm1008, %v927, %v1017
    %v1019 = vsel %vm1010, %v931, %v1018
    %v1020 = vsel %vm1012, %v935, %v1019
    %v1021 = vsel %vm1000, %v943, %v939
    %v1022 = vsel %vm1002, %v947, %v1021
    %v1023 = vsel %vm1004, %v951, %v1022
    %v1024 = vsel %vm1006, %v955, %v1023
    %v1025 = vsel %vm1008, %v959, %v1024
    %v1026 = vsel %vm1010, %v963, %v1025
    %v1027 = vsel %vm1012, %v967, %v1026
    %v1028 = vsel %vm1000, %v975, %v971
    %v1029 = vsel %vm1002, %v979, %v1028
    %v1030 = vsel %vm1004, %v983, %v1029
    %v1031 = vsel %vm1006, %v987, %v1030
    %v1032 = vsel %vm1008, %v991, %v1031
    %v1033 = vsel %vm1010, %v995, %v1032
    %v1034 = vsel %vm1012, %v999, %v1033
    %v1039 = vsel %vm249, %v1013, 0.0
    %v1040 = vsel %vm249, %v1020, 0.0
    %v1041 = vadd.f32 %v1039, %v1040
    %v1042 = vsel %vm249, %v1027, 0.0
    %v1043 = vadd.f32 %v1041, %v1042
    %v1044 = vsel %vm249, %v1034, 0.0
    %v1045 = vadd.f32 %v1043, %v1044
    %v1046 = vrot.slane %v1045, 4
    %v1047 = vadd.f32 %v1045, %v1046
    %v1048 = vrot.slane %v1047, 2
    %v1049 = vadd.f32 %v1047, %v1048
    %v1050 = vrot.slane %v1049, 1
    %v1051 = vadd.f32 %v1049, %v1050
    %v1052 = vrcp.pop 32.0
    %v1053 = vmul.f32 %v1051, %v1052
    %v1054 = vlaneseq
    %v1055 = vshrl.u32 %v1054, 7
    %v1056 = vsub.s32 0, %v1055
    %v1057 = vrot.slane %v1053, %v1056
    %v1059 = vcombine.high %v1057, %v1057
    %v1061 = vunpack.c.l.s4 1983009808
    %v1062 = vunpack.c.0.s8 %v1061
    %v1063 = vlaneseq
    %v1064 = vshrl.u32 %v1063, 7
    %v1065 = vsub.s32 %v1062, %v1064
    %v1066 = vrot.slane %v1057, %v1065
    %v1068 = vunpack.c.l.s4 1983009808
    %v1069 = vunpack.c.0.s8 %v1068
    %v1070 = vlaneseq
    %v1071 = vshrl.u32 %v1070, 7
    %v1072 = vsub.s32 %v1069, %v1071
    %v1073 = vrot.slane %v1059, %v1072
    %v1074 = vcombine.high %v1066, %v1066
    %v1075 = vcombine.high %v1073, %v1073
    %v1076 = vrot.slane %v1066, 1
    %v1077 = vrot.slane %v1074, 1
    %v1078 = vrot.slane %v1073, 1
    %v1079 = vrot.slane %v1075, 1
    %v1088 = vsub.f32 %v808, %v1066
    %v1089 = vsub.f32 %v809, %v1076
    %v1090 = vsub.f32 %v810, %v1074
    %v1091 = vsub.f32 %v811, %v1077
    %v1092 = vsub.f32 %v812, %v1073
    %v1093 = vsub.f32 %v813, %v1078
    %v1094 = vsub.f32 %v814, %v1075
    %v1095 = vsub.f32 %v815, %v1079
    %v1096 = vsub.f32 %v816, %v1066
    %v1097 = vsub.f32 %v817, %v1076
    %v1098 = vsub.f32 %v818, %v1074
    %v1099 = vsub.f32 %v819, %v1077
    %v1100 = vsub.f32 %v820, %v1073
    %v1101 = vsub.f32 %v821, %v1078
    %v1102 = vsub.f32 %v822, %v1075
    %v1103 = vsub.f32 %v823, %v1079
    %v1104 = vsub.f32 %v824, %v1066
    %v1105 = vsub.f32 %v825, %v1076
    %v1106 = vsub.f32 %v826, %v1074
    %v1107 = vsub.f32 %v827, %v1077
    %v1108 = vsub.f32 %v828, %v1073
    %v1109 = vsub.f32 %v829, %v1078
    %v1110 = vsub.f32 %v830, %v1075
    %v1111 = vsub.f32 %v831, %v1079
    %v1112 = vsub.f32 %v832, %v1066
    %v1113 = vsub.f32 %v833, %v1076
    %v1114 = vsub.f32 %v834, %v1074
    %v1115 = vsub.f32 %v835, %v1077
    %v1116 = vsub.f32 %v836, %v1073
    %v1117 = vsub.f32 %v837, %v1078
    %v1118 = vsub.f32 %v838, %v1075
    %v1119 = vsub.f32 %v839, %v1079
    %v1120 = vmul.f32 %v1088, %v1088
    %v1121 = vmul.f32 %v1089, %v1089
    %v1122 = vmul.f32 %v1090, %v1090
    %v1123 = vmul.f32 %v1091, %v1091
    %v1124 = vmul.f32 %v1092, %v1092
    %v1125 = vmul.f32 %v1093, %v1093
    %v1126 = vmul.f32 %v1094, %v1094
    %v1127 = vmul.f32 %v1095, %v1095
    %v1128 = vmul.f32 %v1096, %v1096
    %v1129 = vmul.f32 %v1097, %v1097
    %v1130 = vmul.f32 %v1098, %v1098
    %v1131 = vmul.f32 %v1099, %v1099
    %v1132 = vmul.f32 %v1100, %v1100
    %v1133 = vmul.f32 %v1101, %v1101
    %v1134 = vmul.f32 %v1102, %v1102
    %v1135 = vmul.f32 %v1103, %v1103
    %v1136 = vmul.f32 %v1104, %v1104
    %v1137 = vmul.f32 %v1105, %v1105
    %v1138 = vmul.f32 %v1106, %v1106
    %v1139 = vmul.f32 %v1107, %v1107
    %v1140 = vmul.f32 %v1108, %v1108
    %v1141 = vmul.f32 %v1109, %v1109
    %v1142 = vmul.f32 %v1110, %v1110
    %v1143 = vmul.f32 %v1111, %v1111
    %v1144 = vmul.f32 %v1112, %v1112
    %v1145 = vmul.f32 %v1113, %v1113
    %v1146 = vmul.f32 %v1114, %v1114
    %v1147 = vmul.f32 %v1115, %v1115
    %v1148 = vmul.f32 %v1116, %v1116
    %v1149 = vmul.f32 %v1117, %v1117
    %v1150 = vmul.f32 %v1118, %v1118
    %v1151 = vmul.f32 %v1119, %v1119
    %v1184 = vlaneseq
    %v1185 = vshrl.u32 %v1184, 7
    %v1186 = vsub.s32 0, %v1185
    %v1187 = vrot.slane %v1120, %v1186
    %v1188 = vlaneseq
    %v1189 = vshrl.u32 %v1188, 7
    %v1190 = vsub.s32 0, %v1189
    %v1191 = vrot.slane %v1121, %v1190
    %v1192 = vlaneseq
    %v1193 = vshrl.u32 %v1192, 7
    %v1194 = vsub.s32 0, %v1193
    %v1195 = vrot.slane %v1122, %v1194
    %v1196 = vlaneseq
    %v1197 = vshrl.u32 %v1196, 7
    %v1198 = vsub.s32 0, %v1197
    %v1199 = vrot.slane %v1123, %v1198
    %v1200 = vlaneseq
    %v1201 = vshrl.u32 %v1200, 7
    %v1202 = vsub.s32 0, %v1201
    %v1203 = vrot.slane %v1124, %v1202
    %v1204 = vlaneseq
    %v1205 = vshrl.u32 %v1204, 7
    %v1206 = vsub.s32 0, %v1205
    %v1207 = vrot.slane %v1125, %v1206
    %v1208 = vlaneseq
    %v1209 = vshrl.u32 %v1208, 7
    %v1210 = vsub.s32 0, %v1209
    %v1211 = vrot.slane %v1126, %v1210
    %v1212 = vlaneseq
    %v1213 = vshrl.u32 %v1212, 7
    %v1214 = vsub.s32 0, %v1213
    %v1215 = vrot.slane %v1127, %v1214
    %v1216 = vlaneseq
    %v1217 = vshrl.u32 %v1216, 7
    %v1218 = vsub.s32 0, %v1217
    %v1219 = vrot.slane %v1128, %v1218
    %v1220 = vlaneseq
    %v1221 = vshrl.u32 %v1220, 7
    %v1222 = vsub.s32 0, %v1221
    %v1223 = vrot.slane %v1129, %v1222
    %v1224 = vlaneseq
    %v1225 = vshrl.u32 %v1224, 7
    %v1226 = vsub.s32 0, %v1225
    %v1227 = vrot.slane %v1130, %v1226
    %v1228 = vlaneseq
    %v1229 = vshrl.u32 %v1228, 7
    %v1230 = vsub.s32 0, %v1229
    %v1231 = vrot.slane %v1131, %v1230
    %v1232 = vlaneseq
    %v1233 = vshrl.u32 %v1232, 7
    %v1234 = vsub.s32 0, %v1233
    %v1235 = vrot.slane %v1132, %v1234
    %v1236 = vlaneseq
    %v1237 = vshrl.u32 %v1236, 7
    %v1238 = vsub.s32 0, %v1237
    %v1239 = vrot.slane %v1133, %v1238
    %v1240 = vlaneseq
    %v1241 = vshrl.u32 %v1240, 7
    %v1242 = vsub.s32 0, %v1241
    %v1243 = vrot.slane %v1134, %v1242
    %v1244 = vlaneseq
    %v1245 = vshrl.u32 %v1244, 7
    %v1246 = vsub.s32 0, %v1245
    %v1247 = vrot.slane %v1135, %v1246
    %v1248 = vlaneseq
    %v1249 = vshrl.u32 %v1248, 7
    %v1250 = vsub.s32 0, %v1249
    %v1251 = vrot.slane %v1136, %v1250
    %v1252 = vlaneseq
    %v1253 = vshrl.u32 %v1252, 7
    %v1254 = vsub.s32 0, %v1253
    %v1255 = vrot.slane %v1137, %v1254
    %v1256 = vlaneseq
    %v1257 = vshrl.u32 %v1256, 7
    %v1258 = vsub.s32 0, %v1257
    %v1259 = vrot.slane %v1138, %v1258
    %v1260 = vlaneseq
    %v1261 = vshrl.u32 %v1260, 7
    %v1262 = vsub.s32 0, %v1261
    %v1263 = vrot.slane %v1139, %v1262
    %v1264 = vlaneseq
    %v1265 = vshrl.u32 %v1264, 7
    %v1266 = vsub.s32 0, %v1265
    %v1267 = vrot.slane %v1140, %v1266
    %v1268 = vlaneseq
    %v1269 = vshrl.u32 %v1268, 7
    %v1270 = vsub.s32 0, %v1269
    %v1271 = vrot.slane %v1141, %v1270
    %v1272 = vlaneseq
    %v1273 = vshrl.u32 %v1272, 7
    %v1274 = vsub.s32 0, %v1273
    %v1275 = vrot.slane %v1142, %v1274
    %v1276 = vlaneseq
    %v1277 = vshrl.u32 %v1276, 7
    %v1278 = vsub.s32 0, %v1277
    %v1279 = vrot.slane %v1143, %v1278
    %v1280 = vlaneseq
    %v1281 = vshrl.u32 %v1280, 7
    %v1282 = vsub.s32 0, %v1281
    %v1283 = vrot.slane %v1144, %v1282
    %v1284 = vlaneseq
    %v1285 = vshrl.u32 %v1284, 7
    %v1286 = vsub.s32 0, %v1285
    %v1287 = vrot.slane %v1145, %v1286
    %v1288 = vlaneseq
    %v1289 = vshrl.u32 %v1288, 7
    %v1290 = vsub.s32 0, %v1289
    %v1291 = vrot.slane %v1146, %v1290
    %v1292 = vlaneseq
    %v1293 = vshrl.u32 %v1292, 7
    %v1294 = vsub.s32 0, %v1293
    %v1295 = vrot.slane %v1147, %v1294
    %v1296 = vlaneseq
    %v1297 = vshrl.u32 %v1296, 7
    %v1298 = vsub.s32 0, %v1297
    %v1299 = vrot.slane %v1148, %v1298
    %v1300 = vlaneseq
    %v1301 = vshrl.u32 %v1300, 7
    %v1302 = vsub.s32 0, %v1301
    %v1303 = vrot.slane %v1149, %v1302
    %v1304 = vlaneseq
    %v1305 = vshrl.u32 %v1304, 7
    %v1306 = vsub.s32 0, %v1305
    %v1307 = vrot.slane %v1150, %v1306
    %v1308 = vlaneseq
    %v1309 = vshrl.u32 %v1308, 7
    %v1310 = vsub.s32 0, %v1309
    %v1311 = vrot.slane %v1151, %v1310
    %v1312 = vsel %vm1000, %v1191, %v1187
    %v1313 = vsel %vm1002, %v1195, %v1312
    %v1314 = vsel %vm1004, %v1199, %v1313
    %v1315 = vsel %vm1006, %v1203, %v1314
    %v1316 = vsel %vm1008, %v1207, %v1315
    %v1317 = vsel %vm1010, %v1211, %v1316
    %v1318 = vsel %vm1012, %v1215, %v1317
    %v1319 = vsel %vm1000, %v1223, %v1219
    %v1320 = vsel %vm1002, %v1227, %v1319
    %v1321 = vsel %vm1004, %v1231, %v1320
    %v1322 = vsel %vm1006, %v1235, %v1321
    %v1323 = vsel %vm1008, %v1239, %v1322
    %v1324 = vsel %vm1010, %v1243, %v1323
    %v1325 = vsel %vm1012, %v1247, %v1324
    %v1326 = vsel %vm1000, %v1255, %v1251
    %v1327 = vsel %vm1002, %v1259, %v1326
    %v1328 = vsel %vm1004, %v1263, %v1327
    %v1329 = vsel %vm1006, %v1267, %v1328
    %v1330 = vsel %vm1008, %v1271, %v1329
    %v1331 = vsel %vm1010, %v1275, %v1330
    %v1332 = vsel %vm1012, %v1279, %v1331
    %v1333 = vsel %vm1000, %v1287, %v1283
    %v1334 = vsel %vm1002, %v1291, %v1333
    %v1335 = vsel %vm1004, %v1295, %v1334
    %v1336 = vsel %vm1006, %v1299, %v1335
    %v1337 = vsel %vm1008, %v1303, %v1336
    %v1338 = vsel %vm1010, %v1307, %v1337
    %v1339 = vsel %vm1012, %v1311, %v1338
    %v1344 = vsel %vm249, %v1318, 0.0
    %v1345 = vsel %vm249, %v1325, 0.0
    %v1346 = vadd.f32 %v1344, %v1345
    %v1347 = vsel %vm249, %v1332, 0.0
    %v1348 = vadd.f32 %v1346, %v1347
    %v1349 = vsel %vm249, %v1339, 0.0
    %v1350 = vadd.f32 %v1348, %v1349
    %v1351 = vrot.slane %v1350, 4
    %v1352 = vadd.f32 %v1350, %v1351
    %v1353 = vrot.slane %v1352, 2
    %v1354 = vadd.f32 %v1352, %v1353
    %v1355 = vrot.slane %v1354, 1
    %v1356 = vadd.f32 %v1354, %v1355
    %v1357 = vmul.f32 %v1356, %v1052
    %v1358 = vadd.f32 %v1357, 1e-05
    %v1359 = vrsqrt.pop %v1358
    %v1360 = vlaneseq
    %v1361 = vshrl.u32 %v1360, 7
    %v1362 = vsub.s32 0, %v1361
    %v1363 = vrot.slane %v1359, %v1362
    %v1365 = vcombine.high %v1363, %v1363
    %v1367 = vunpack.c.l.s4 1983009808
    %v1368 = vunpack.c.0.s8 %v1367
    %v1369 = vlaneseq
    %v1370 = vshrl.u32 %v1369, 7
    %v1371 = vsub.s32 %v1368, %v1370
    %v1372 = vrot.slane %v1363, %v1371
    %v1374 = vunpack.c.l.s4 1983009808
    %v1375 = vunpack.c.0.s8 %v1374
    %v1376 = vlaneseq
    %v1377 = vshrl.u32 %v1376, 7
    %v1378 = vsub.s32 %v1375, %v1377
    %v1379 = vrot.slane %v1365, %v1378
    %v1380 = vcombine.high %v1372, %v1372
    %v1381 = vcombine.high %v1379, %v1379
    %v1382 = vrot.slane %v1372, 1
    %v1383 = vrot.slane %v1380, 1
    %v1384 = vrot.slane %v1379, 1
    %v1385 = vrot.slane %v1381, 1
    %v1394 = vmul.f32 %v1088, %v1372
    %v1395 = vmul.f32 %v1089, %v1382
    %v1396 = vmul.f32 %v1090, %v1380
    %v1397 = vmul.f32 %v1091, %v1383
    %v1398 = vmul.f32 %v1092, %v1379
    %v1399 = vmul.f32 %v1093, %v1384
    %v1400 = vmul.f32 %v1094, %v1381
    %v1401 = vmul.f32 %v1095, %v1385
    %v1402 = vmul.f32 %v1096, %v1372
    %v1403 = vmul.f32 %v1097, %v1382
    %v1404 = vmul.f32 %v1098, %v1380
    %v1405 = vmul.f32 %v1099, %v1383
    %v1406 = vmul.f32 %v1100, %v1379
    %v1407 = vmul.f32 %v1101, %v1384
    %v1408 = vmul.f32 %v1102, %v1381
    %v1409 = vmul.f32 %v1103, %v1385
    %v1410 = vmul.f32 %v1104, %v1372
    %v1411 = vmul.f32 %v1105, %v1382
    %v1412 = vmul.f32 %v1106, %v1380
    %v1413 = vmul.f32 %v1107, %v1383
    %v1414 = vmul.f32 %v1108, %v1379
    %v1415 = vmul.f32 %v1109, %v1384
    %v1416 = vmul.f32 %v1110, %v1381
    %v1417 = vmul.f32 %v1111, %v1385
    %v1418 = vmul.f32 %v1112, %v1372
    %v1419 = vmul.f32 %v1113, %v1382
    %v1420 = vmul.f32 %v1114, %v1380
    %v1421 = vmul.f32 %v1115, %v1383
    %v1422 = vmul.f32 %v1116, %v1379
    %v1423 = vmul.f32 %v1117, %v1384
    %v1424 = vmul.f32 %v1118, %v1381
    %v1425 = vmul.f32 %v1119, %v1385
    %v1427 = vcombine.high %v132, %v132
    %v1429 = vunpack.c.l.s4 1983009808
    %v1430 = vunpack.c.0.s8 %v1429
    %v1431 = vlaneseq
    %v1432 = vshrl.u32 %v1431, 7
    %v1433 = vsub.s32 %v1430, %v1432
    %v1434 = vrot.slane %v132, %v1433
    %v1436 = vunpack.c.l.s4 1983009808
    %v1437 = vunpack.c.0.s8 %v1436
    %v1438 = vlaneseq
    %v1439 = vshrl.u32 %v1438, 7
    %v1440 = vsub.s32 %v1437, %v1439
    %v1441 = vrot.slane %v1427, %v1440
    %v1442 = vcombine.high %v1434, %v1434
    %v1443 = vcombine.high %v1441, %v1441
    %v1444 = vrot.slane %v1434, 1
    %v1445 = vrot.slane %v1442, 1
    %v1446 = vrot.slane %v1441, 1
    %v1447 = vrot.slane %v1443, 1
    %v1456 = vmul.f32 %v1394, %v1434
    %v1457 = vmul.f32 %v1395, %v1444
    %v1458 = vmul.f32 %v1396, %v1442
    %v1459 = vmul.f32 %v1397, %v1445
    %v1460 = vmul.f32 %v1398, %v1441
    %v1461 = vmul.f32 %v1399, %v1446
    %v1462 = vmul.f32 %v1400, %v1443
    %v1463 = vmul.f32 %v1401, %v1447
    %v1464 = vmul.f32 %v1402, %v1434
    %v1465 = vmul.f32 %v1403, %v1444
    %v1466 = vmul.f32 %v1404, %v1442
    %v1467 = vmul.f32 %v1405, %v1445
    %v1468 = vmul.f32 %v1406, %v1441
    %v1469 = vmul.f32 %v1407, %v1446
    %v1470 = vmul.f32 %v1408, %v1443
    %v1471 = vmul.f32 %v1409, %v1447
    %v1472 = vmul.f32 %v1410, %v1434
    %v1473 = vmul.f32 %v1411, %v1444
    %v1474 = vmul.f32 %v1412, %v1442
    %v1475 = vmul.f32 %v1413, %v1445
    %v1476 = vmul.f32 %v1414, %v1441
    %v1477 = vmul.f32 %v1415, %v1446
    %v1478 = vmul.f32 %v1416, %v1443
    %v1479 = vmul.f32 %v1417, %v1447
    %v1480 = vmul.f32 %v1418, %v1434
    %v1481 = vmul.f32 %v1419, %v1444
    %v1482 = vmul.f32 %v1420, %v1442
    %v1483 = vmul.f32 %v1421, %v1445
    %v1484 = vmul.f32 %v1422, %v1441
    %v1485 = vmul.f32 %v1423, %v1446
    %v1486 = vmul.f32 %v1424, %v1443
    %v1487 = vmul.f32 %v1425, %v1447
    %v1489 = vcombine.high %v133, %v133
    %v1491 = vunpack.c.l.s4 1983009808
    %v1492 = vunpack.c.0.s8 %v1491
    %v1493 = vlaneseq
    %v1494 = vshrl.u32 %v1493, 7
    %v1495 = vsub.s32 %v1492, %v1494
    %v1496 = vrot.slane %v133, %v1495
    %v1498 = vunpack.c.l.s4 1983009808
    %v1499 = vunpack.c.0.s8 %v1498
    %v1500 = vlaneseq
    %v1501 = vshrl.u32 %v1500, 7
    %v1502 = vsub.s32 %v1499, %v1501
    %v1503 = vrot.slane %v1489, %v1502
    %v1504 = vcombine.high %v1496, %v1496
    %v1505 = vcombine.high %v1503, %v1503
    %v1506 = vrot.slane %v1496, 1
    %v1507 = vrot.slane %v1504, 1
    %v1508 = vrot.slane %v1503, 1
    %v1509 = vrot.slane %v1505, 1
    %v1518 = vadd.f32 %v1456, %v1496
    %v1519 = vadd.f32 %v1457, %v1506
    %v1520 = vadd.f32 %v1458, %v1504
    %v1521 = vadd.f32 %v1459, %v1507
    %v1522 = vadd.f32 %v1460, %v1503
    %v1523 = vadd.f32 %v1461, %v1508
    %v1524 = vadd.f32 %v1462, %v1505
    %v1525 = vadd.f32 %v1463, %v1509
    %v1526 = vadd.f32 %v1464, %v1496
    %v1527 = vadd.f32 %v1465, %v1506
    %v1528 = vadd.f32 %v1466, %v1504
    %v1529 = vadd.f32 %v1467, %v1507
    %v1530 = vadd.f32 %v1468, %v1503
    %v1531 = vadd.f32 %v1469, %v1508
    %v1532 = vadd.f32 %v1470, %v1505
    %v1533 = vadd.f32 %v1471, %v1509
    %v1534 = vadd.f32 %v1472, %v1496
    %v1535 = vadd.f32 %v1473, %v1506
    %v1536 = vadd.f32 %v1474, %v1504
    %v1537 = vadd.f32 %v1475, %v1507
    %v1538 = vadd.f32 %v1476, %v1503
    %v1539 = vadd.f32 %v1477, %v1508
    %v1540 = vadd.f32 %v1478, %v1505
    %v1541 = vadd.f32 %v1479, %v1509
    %v1542 = vadd.f32 %v1480, %v1496
    %v1543 = vadd.f32 %v1481, %v1506
    %v1544 = vadd.f32 %v1482, %v1504
    %v1545 = vadd.f32 %v1483, %v1507
    %v1546 = vadd.f32 %v1484, %v1503
    %v1547 = vadd.f32 %v1485, %v1508
    %v1548 = vadd.f32 %v1486, %v1505
    %v1549 = vadd.f32 %v1487, %v1509
    %v1550 = vld [vmem:[#allocation6 + $0x10] sm:$0xff]
    %v1551 = vld [vmem:[#allocation6 + $0x18] sm:$0xff]
    %v1552 = vld [vmem:[#allocation6 + $0x20] sm:$0xff]
    %v1553 = vld [vmem:[#allocation8 + $0x3] ss:$0 sm:$0xff]
    %v1554 = vld [vmem:[#allocation8 + $0x4] ss:$0 sm:$0xff]
    %v1555 = vld [vmem:[#allocation8 + $0x5] ss:$0 sm:$0xff]
    %v1586 = vlaneseq
    %v1587 = vshrl.u32 %v1586, 7
    %v1588 = vsub.s32 0, %v1587
    %v1589 = vrot.slane %v1518, %v1588
    %v1590 = vlaneseq
    %v1591 = vshrl.u32 %v1590, 7
    %v1592 = vsub.s32 0, %v1591
    %v1593 = vrot.slane %v1519, %v1592
    %v1594 = vlaneseq
    %v1595 = vshrl.u32 %v1594, 7
    %v1596 = vsub.s32 0, %v1595
    %v1597 = vrot.slane %v1520, %v1596
    %v1598 = vlaneseq
    %v1599 = vshrl.u32 %v1598, 7
    %v1600 = vsub.s32 0, %v1599
    %v1601 = vrot.slane %v1521, %v1600
    %v1602 = vlaneseq
    %v1603 = vshrl.u32 %v1602, 7
    %v1604 = vsub.s32 0, %v1603
    %v1605 = vrot.slane %v1522, %v1604
    %v1606 = vlaneseq
    %v1607 = vshrl.u32 %v1606, 7
    %v1608 = vsub.s32 0, %v1607
    %v1609 = vrot.slane %v1523, %v1608
    %v1610 = vlaneseq
    %v1611 = vshrl.u32 %v1610, 7
    %v1612 = vsub.s32 0, %v1611
    %v1613 = vrot.slane %v1524, %v1612
    %v1614 = vlaneseq
    %v1615 = vshrl.u32 %v1614, 7
    %v1616 = vsub.s32 0, %v1615
    %v1617 = vrot.slane %v1525, %v1616
    %v1618 = vlaneseq
    %v1619 = vshrl.u32 %v1618, 7
    %v1620 = vsub.s32 0, %v1619
    %v1621 = vrot.slane %v1526, %v1620
    %v1622 = vlaneseq
    %v1623 = vshrl.u32 %v1622, 7
    %v1624 = vsub.s32 0, %v1623
    %v1625 = vrot.slane %v1527, %v1624
    %v1626 = vlaneseq
    %v1627 = vshrl.u32 %v1626, 7
    %v1628 = vsub.s32 0, %v1627
    %v1629 = vrot.slane %v1528, %v1628
    %v1630 = vlaneseq
    %v1631 = vshrl.u32 %v1630, 7
    %v1632 = vsub.s32 0, %v1631
    %v1633 = vrot.slane %v1529, %v1632
    %v1634 = vlaneseq
    %v1635 = vshrl.u32 %v1634, 7
    %v1636 = vsub.s32 0, %v1635
    %v1637 = vrot.slane %v1530, %v1636
    %v1638 = vlaneseq
    %v1639 = vshrl.u32 %v1638, 7
    %v1640 = vsub.s32 0, %v1639
    %v1641 = vrot.slane %v1531, %v1640
    %v1642 = vlaneseq
    %v1643 = vshrl.u32 %v1642, 7
    %v1644 = vsub.s32 0, %v1643
    %v1645 = vrot.slane %v1532, %v1644
    %v1646 = vlaneseq
    %v1647 = vshrl.u32 %v1646, 7
    %v1648 = vsub.s32 0, %v1647
    %v1649 = vrot.slane %v1534, %v1648
    %v1650 = vlaneseq
    %v1651 = vshrl.u32 %v1650, 7
    %v1652 = vsub.s32 0, %v1651
    %v1653 = vrot.slane %v1535, %v1652
    %v1654 = vlaneseq
    %v1655 = vshrl.u32 %v1654, 7
    %v1656 = vsub.s32 0, %v1655
    %v1657 = vrot.slane %v1536, %v1656
    %v1658 = vlaneseq
    %v1659 = vshrl.u32 %v1658, 7
    %v1660 = vsub.s32 0, %v1659
    %v1661 = vrot.slane %v1537, %v1660
    %v1662 = vlaneseq
    %v1663 = vshrl.u32 %v1662, 7
    %v1664 = vsub.s32 0, %v1663
    %v1665 = vrot.slane %v1538, %v1664
    %v1666 = vlaneseq
    %v1667 = vshrl.u32 %v1666, 7
    %v1668 = vsub.s32 0, %v1667
    %v1669 = vrot.slane %v1539, %v1668
    %v1670 = vlaneseq
    %v1671 = vshrl.u32 %v1670, 7
    %v1672 = vsub.s32 0, %v1671
    %v1673 = vrot.slane %v1540, %v1672
    %v1674 = vlaneseq
    %v1675 = vshrl.u32 %v1674, 7
    %v1676 = vsub.s32 0, %v1675
    %v1677 = vrot.slane %v1541, %v1676
    %v1678 = vlaneseq
    %v1679 = vshrl.u32 %v1678, 7
    %v1680 = vsub.s32 0, %v1679
    %v1681 = vrot.slane %v1542, %v1680
    %v1682 = vlaneseq
    %v1683 = vshrl.u32 %v1682, 7
    %v1684 = vsub.s32 0, %v1683
    %v1685 = vrot.slane %v1543, %v1684
    %v1686 = vlaneseq
    %v1687 = vshrl.u32 %v1686, 7
    %v1688 = vsub.s32 0, %v1687
    %v1689 = vrot.slane %v1544, %v1688
    %v1690 = vlaneseq
    %v1691 = vshrl.u32 %v1690, 7
    %v1692 = vsub.s32 0, %v1691
    %v1693 = vrot.slane %v1545, %v1692
    %v1694 = vlaneseq
    %v1695 = vshrl.u32 %v1694, 7
    %v1696 = vsub.s32 0, %v1695
    %v1697 = vrot.slane %v1546, %v1696
    %v1698 = vlaneseq
    %v1699 = vshrl.u32 %v1698, 7
    %v1700 = vsub.s32 0, %v1699
    %v1701 = vrot.slane %v1547, %v1700
    %v1702 = vlaneseq
    %v1703 = vshrl.u32 %v1702, 7
    %v1704 = vsub.s32 0, %v1703
    %v1705 = vrot.slane %v1548, %v1704
    %v1706 = vsel %vm1002, %v1593, %v1589
    %v1707 = vsel %vm1004, %v1597, %v1706
    %v1708 = vsel %vm1006, %v1601, %v1707
    %v1709 = vsel %vm1008, %v1605, %v1708
    %v1710 = vsel %vm1010, %v1609, %v1709
    %v1711 = vsel %vm1012, %v1613, %v1710
    %v1712 = vsel %vm1000, %v1621, %v1617
    %v1713 = vsel %vm1002, %v1625, %v1712
    %v1714 = vsel %vm1004, %v1629, %v1713
    %v1715 = vsel %vm1006, %v1633, %v1714
    %v1716 = vsel %vm1008, %v1637, %v1715
    %v1717 = vsel %vm1010, %v1641, %v1716
    %v1718 = vsel %vm1012, %v1645, %v1717
    %v1719 = vsel %vm1002, %v1653, %v1649
    %v1720 = vsel %vm1004, %v1657, %v1719
    %v1721 = vsel %vm1006, %v1661, %v1720
    %v1722 = vsel %vm1008, %v1665, %v1721
    %v1723 = vsel %vm1010, %v1669, %v1722
    %v1724 = vsel %vm1012, %v1673, %v1723
    %v1725 = vsel %vm1000, %v1681, %v1677
    %v1726 = vsel %vm1002, %v1685, %v1725
    %v1727 = vsel %vm1004, %v1689, %v1726
    %v1728 = vsel %vm1006, %v1693, %v1727
    %v1729 = vsel %vm1008, %v1697, %v1728
    %v1730 = vsel %vm1010, %v1701, %v1729
    %v1731 = vsel %vm1012, %v1705, %v1730
    %v1736 = vsel %vm146, %v1533, %v1711
    %v1737 = vsel %vm146, %v1549, %v1724
    %v1740 = vlaneseq
    %v1741 = vshrl.u32 %v1740, 7
    %v1742 = vsub.s32 0, %v1741
    %v1743 = vrot.slane %v1533, %v1742
    %v1744 = vlaneseq
    %v1745 = vshrl.u32 %v1744, 7
    %v1746 = vsub.s32 0, %v1745
    %v1747 = vrot.slane %v1549, %v1746
    %v1748 = vsel %vm1000, %v1597, %v1593
    %v1749 = vsel %vm1002, %v1601, %v1748
    %v1750 = vsel %vm1004, %v1605, %v1749
    %v1751 = vsel %vm1006, %v1609, %v1750
    %v1752 = vsel %vm1008, %v1613, %v1751
    %v1753 = vsel %vm1010, %v1617, %v1752
    %v1754 = vsel %vm1012, %v1621, %v1753
    %v1755 = vsel %vm1000, %v1629, %v1625
    %v1756 = vsel %vm1002, %v1633, %v1755
    %v1757 = vsel %vm1004, %v1637, %v1756
    %v1758 = vsel %vm1006, %v1641, %v1757
    %v1759 = vsel %vm1008, %v1645, %v1758
    %v1760 = vsel %vm1010, %v1743, %v1759
    %v1761 = vsel %vm1000, %v1657, %v1653
    %v1762 = vsel %vm1002, %v1661, %v1761
    %v1763 = vsel %vm1004, %v1665, %v1762
    %v1764 = vsel %vm1006, %v1669, %v1763
    %v1765 = vsel %vm1008, %v1673, %v1764
    %v1766 = vsel %vm1010, %v1677, %v1765
    %v1767 = vsel %vm1012, %v1681, %v1766
    %v1768 = vsel %vm1000, %v1689, %v1685
    %v1769 = vsel %vm1002, %v1693, %v1768
    %v1770 = vsel %vm1004, %v1697, %v1769
    %v1771 = vsel %vm1006, %v1701, %v1770
    %v1772 = vsel %vm1008, %v1705, %v1771
    %v1773 = vsel %vm1010, %v1747, %v1772
    %v1778 = vsel %vm169, %v1760, %v1589
    %v1779 = vsel %vm169, %v1773, %v1649
    %v1780 = vsel %vm1000, %v1593, %v1589
    %v1781 = vsel %vm1002, %v1597, %v1780
    %v1782 = vsel %vm1004, %v1601, %v1781
    %v1783 = vsel %vm1006, %v1605, %v1782
    %v1784 = vsel %vm1008, %v1609, %v1783
    %v1785 = vsel %vm1010, %v1613, %v1784
    %v1786 = vsel %vm1012, %v1617, %v1785
    %v1787 = vsel %vm1000, %v1625, %v1621
    %v1788 = vsel %vm1002, %v1629, %v1787
    %v1789 = vsel %vm1004, %v1633, %v1788
    %v1790 = vsel %vm1006, %v1637, %v1789
    %v1791 = vsel %vm1008, %v1641, %v1790
    %v1792 = vsel %vm1010, %v1645, %v1791
    %v1793 = vsel %vm1012, %v1743, %v1792
    %v1794 = vsel %vm1000, %v1653, %v1649
    %v1795 = vsel %vm1002, %v1657, %v1794
    %v1796 = vsel %vm1004, %v1661, %v1795
    %v1797 = vsel %vm1006, %v1665, %v1796
    %v1798 = vsel %vm1008, %v1669, %v1797
    %v1799 = vsel %vm1010, %v1673, %v1798
    %v1800 = vsel %vm1012, %v1677, %v1799
    %v1801 = vsel %vm1000, %v1685, %v1681
    %v1802 = vsel %vm1002, %v1689, %v1801
    %v1803 = vsel %vm1004, %v1693, %v1802
    %v1804 = vsel %vm1006, %v1697, %v1803
    %v1805 = vsel %vm1008, %v1701, %v1804
    %v1806 = vsel %vm1010, %v1705, %v1805
    %v1807 = vsel %vm1012, %v1747, %v1806
    %1808 = vrot.lane.b32.xlu0 %v1786, 8
    %v1809 = vpop.permute.xlu0 %1808
    %1810 = vrot.lane.b32.xlu0 %v1793, 8
    %v1811 = vpop.permute.xlu0 %1810
    %1812 = vrot.lane.b32.xlu0 %v1800, 8
    %v1813 = vpop.permute.xlu0 %1812
    %1814 = vrot.lane.b32.xlu0 %v1807, 8
    %v1815 = vpop.permute.xlu0 %1814
    %1822 = vrot.lane.b32.xlu0 %v1754, 16
    %v1823 = vpop.permute.xlu0 %1822
    %1824 = vrot.lane.b32.xlu0 %v1778, 16
    %v1825 = vpop.permute.xlu0 %1824
    %1826 = vrot.lane.b32.xlu0 %v1767, 16
    %v1827 = vpop.permute.xlu0 %1826
    %1828 = vrot.lane.b32.xlu0 %v1779, 16
    %v1829 = vpop.permute.xlu0 %1828
    %v1834 = vsel %vm249, %v1736, %v1809
    %v1835 = vsel %vm249, %v1718, %v1811
    %v1836 = vsel %vm249, %v1737, %v1813
    %v1837 = vsel %vm249, %v1731, %v1815
    %vm1838 = vcmask 130048
    %v1839 = vsel %vm1838, %v1834, %v1823
    %v1840 = vsel %vm1838, %v1835, %v1825
    %v1841 = vsel %vm1838, %v1836, %v1827
    %v1842 = vsel %vm1838, %v1837, %v1829
    %vm1843 = vcmask 195584
    %v1845 = vsel %vm1843, %v1839, 0
    %v1848 = vsel %vm1843, %v1840, 0
    %v1851 = vsel %vm1843, %v1841, 0
    %v1854 = vsel %vm1843, %v1842, 0
    %1856 = vmatprep.subr.mxu0 0.0
    %1857 = vmatpush1.msra.mxu0 %v1550
    %1858 = vmatprep.subr.mxu0 0.0
    %1859 = vmatpush1.msra.mxu0 %v1551
    %1860 = vmatprep.subr.mxu0 0.0
    %1861 = vmatpush1.msra.mxu0 %v1552
    %1862 = vmatprep.subr.mxu0 0.0
    %1863 = vmatpush1.msra.mxu0 0.0
    %1864 = vmatprep.subr.mxu0 0.0
    %1865 = vmatpush1.msra.mxu0 0.0
    %1866 = vmatprep.subr.mxu0 0.0
    %1867 = vmatpush1.msra.mxu0 0.0
    %1868 = vmatprep.subr.mxu0 0.0
    %1869 = vmatpush1.msra.mxu0 0.0
    %1870 = vmatprep.subr.mxu0 0.0
    %1871 = vmatpush1.msra.mxu0 0.0
    %1872 = vmatprep.subr.mxu0 0.0
    %1873 = vmatpush1.msra.mxu0 0.0
    %1874 = vmatprep.subr.mxu0 0.0
    %1875 = vmatpush1.msra.mxu0 0.0
    %1876 = vmatprep.subr.mxu0 0.0
    %1877 = vmatpush1.msra.mxu0 0.0
    %1878 = vmatprep.subr.mxu0 0.0
    %1879 = vmatpush1.msra.mxu0 0.0
    %1880 = vmatprep.subr.mxu0 0.0
    %1881 = vmatpush1.msra.mxu0 0.0
    %1882 = vmatprep.subr.mxu0 0.0
    %1883 = vmatpush1.msra.mxu0 0.0
    %1884 = vmatprep.subr.mxu0 0.0
    %1885 = vmatpush1.msra.mxu0 0.0
    %1886 = vmatprep.subr.mxu0 0.0
    %1887 = vmatpush1.msra.mxu0 0.0
    %1888 = vmatprep.subr.mxu0 0.0
    %1889 = vmatpush1.msra.mxu0 0.0
    %1890 = vmatprep.subr.mxu0 0.0
    %1891 = vmatpush1.msra.mxu0 0.0
    %1892 = vmatprep.subr.mxu0 0.0
    %1893 = vmatpush1.msra.mxu0 0.0
    %1894 = vmatprep.subr.mxu0 0.0
    %1895 = vmatpush1.msra.mxu0 0.0
    %1896 = vmatprep.subr.mxu0 0.0
    %1897 = vmatpush1.msra.mxu0 0.0
    %1898 = vmatprep.subr.mxu0 0.0
    %1899 = vmatpush1.msra.mxu0 0.0
    %1900 = vmatprep.subr.mxu0 0.0
    %1901 = vmatpush1.msra.mxu0 0.0
    %1902 = vmatprep.subr.mxu0 0.0
    %1903 = vmatpush1.msra.mxu0 0.0
    %1904 = vmatprep.subr.mxu0 0.0
    %1905 = vmatpush1.msra.mxu0 0.0
    %1906 = vmatprep.subr.mxu0 0.0
    %1907 = vmatpush1.msra.mxu0 0.0
    %1908 = vmatprep.subr.mxu0 0.0
    %1909 = vmatpush1.msra.mxu0 0.0
    %1910 = vmatprep.subr.mxu0 0.0
    %1911 = vmatpush1.msra.mxu0 0.0
    %1912 = vmatprep.subr.mxu0 0.0
    %1913 = vmatpush1.msra.mxu0 0.0
    %1914 = vmatprep.subr.mxu0 0.0
    %1915 = vmatpush1.msra.mxu0 0.0
    %1916 = vmatprep.subr.mxu0 0.0
    %1917 = vmatpush1.msra.mxu0 0.0
    %1918 = vmatprep.subr.mxu0 0.0
    %1919 = vmatpush1.msra.mxu0 0.0
    %1920 = vmatprep.mubr.f32.mxu0 0.0
    %1921 = vmatmul.mubr.f32.gmra.mrb[0].mxu0 %v1845
    %v1922 = vpop.f32.mrb[0].mxu0
    %v1923 = vadd.f32 %v1553, %v1922
    %v1924 = vpop.f32.mrb[0].mxu0
    %1925 = vmatprep.mubr.f32.mxu0 0.0
    %1926 = vmatmul.mubr.f32.gmra.mrb[0].mxu0 %v1848
    %v1927 = vpop.f32.mrb[0].mxu0
    %v1928 = vadd.f32 %v1553, %v1927
    %v1929 = vpop.f32.mrb[0].mxu0
    %1930 = vmatprep.mubr.f32.mxu0 0.0
    %1931 = vmatmul.mubr.f32.gmra.mrb[0].mxu0 %v1851
    %v1932 = vpop.f32.mrb[0].mxu0
    %v1933 = vadd.f32 %v1553, %v1932
    %v1934 = vpop.f32.mrb[0].mxu0
    %1935 = vmatprep.mubr.f32.mxu0 0.0
    %1936 = vmatmul.mubr.f32.gmra.mrb[0].mxu0 %v1854
    %v1937 = vpop.f32.mrb[0].mxu0
    %v1938 = vadd.f32 %v1553, %v1937
    %v1939 = vpop.f32.mrb[0].mxu0
    %1940 = vdwg.mxu0
    %vm1941 = vcmp.gt.f32.partialorder %v1923, 20.0
    %vm1942 = vcmp.gt.f32.partialorder %v1928, 20.0
    %vm1943 = vcmp.gt.f32.partialorder %v1933, 20.0
    %vm1944 = vcmp.gt.f32.partialorder %v1938, 20.0
    %v1945 = vmin.f32 %v1923, 20.0
    %v1946 = vmin.f32 %v1928, 20.0
    %v1947 = vmin.f32 %v1933, 20.0
    %v1948 = vmin.f32 %v1938, 20.0
    %v1949 = vmul.f32 %v1945, 1.442695
    %v1950 = vpow.pop %v1949
    %v1951 = vmul.f32 %v1946, 1.442695
    %v1952 = vpow.pop %v1951
    %v1953 = vmul.f32 %v1947, 1.442695
    %v1954 = vpow.pop %v1953
    %v1955 = vmul.f32 %v1948, 1.442695
    %v1956 = vpow.pop %v1955
    %v1957 = vadd.f32 %v1950, 1.0
    %v1958 = vlog2.pop %v1957
    %v1959 = vmul.f32 %v1958, 0.6931472
    %v1960 = vmul.f32 -0.5, %v1950
    %v1961 = vadd.f32 %v1960, 1.0
    %v1962 = vmul.f32 %v1961, %v1950
    %v1963 = vand.u32 2147483647, %v1950
    %vm1964 = vcmp.lt.f32.partialorder %v1963, 0.0004427343
    %v1965 = vsel %vm1964, %v1962, %v1959
    %v1966 = vadd.f32 %v1952, 1.0
    %v1967 = vlog2.pop %v1966
    %v1968 = vmul.f32 %v1967, 0.6931472
    %v1969 = vmul.f32 -0.5, %v1952
    %v1970 = vadd.f32 %v1969, 1.0
    %v1971 = vmul.f32 %v1970, %v1952
    %v1972 = vand.u32 2147483647, %v1952
    %vm1973 = vcmp.lt.f32.partialorder %v1972, 0.0004427343
    %v1974 = vsel %vm1973, %v1971, %v1968
    %v1975 = vadd.f32 %v1954, 1.0
    %v1976 = vlog2.pop %v1975
    %v1977 = vmul.f32 %v1976, 0.6931472
    %v1978 = vmul.f32 -0.5, %v1954
    %v1979 = vadd.f32 %v1978, 1.0
    %v1980 = vmul.f32 %v1979, %v1954
    %v1981 = vand.u32 2147483647, %v1954
    %vm1982 = vcmp.lt.f32.partialorder %v1981, 0.0004427343
    %v1983 = vsel %vm1982, %v1980, %v1977
    %v1984 = vadd.f32 %v1956, 1.0
    %v1985 = vlog2.pop %v1984
    %v1986 = vmul.f32 %v1985, 0.6931472
    %v1987 = vmul.f32 -0.5, %v1956
    %v1988 = vadd.f32 %v1987, 1.0
    %v1989 = vmul.f32 %v1988, %v1956
    %v1990 = vand.u32 2147483647, %v1956
    %vm1991 = vcmp.lt.f32.partialorder %v1990, 0.0004427343
    %v1992 = vsel %vm1991, %v1989, %v1986
    %v1993 = vsel %vm1941, %v1923, %v1965
    %v1994 = vsel %vm1942, %v1928, %v1974
    %v1995 = vsel %vm1943, %v1933, %v1983
    %v1996 = vsel %vm1944, %v1938, %v1992
    %v2001 = vcombine.high %v1993, %v1993
    %v2003 = vunpack.c.l.s4 1983009808
    %v2004 = vunpack.c.0.s8 %v2003
    %v2005 = vlaneseq
    %v2006 = vshrl.u32 %v2005, 7
    %v2007 = vsub.s32 %v2004, %v2006
    %v2008 = vrot.slane %v1993, %v2007
    %v2010 = vunpack.c.l.s4 1983009808
    %v2011 = vunpack.c.0.s8 %v2010
    %v2012 = vlaneseq
    %v2013 = vshrl.u32 %v2012, 7
    %v2014 = vsub.s32 %v2011, %v2013
    %v2015 = vrot.slane %v2001, %v2014
    %v2016 = vcombine.high %v2008, %v2008
    %v2017 = vcombine.high %v2015, %v2015
    %v2018 = vcombine.high %v1994, %v1994
    %v2020 = vunpack.c.l.s4 1983009808
    %v2021 = vunpack.c.0.s8 %v2020
    %v2022 = vlaneseq
    %v2023 = vshrl.u32 %v2022, 7
    %v2024 = vsub.s32 %v2021, %v2023
    %v2025 = vrot.slane %v1994, %v2024
    %v2027 = vunpack.c.l.s4 1983009808
    %v2028 = vunpack.c.0.s8 %v2027
    %v2029 = vlaneseq
    %v2030 = vshrl.u32 %v2029, 7
    %v2031 = vsub.s32 %v2028, %v2030
    %v2032 = vrot.slane %v2018, %v2031
    %v2033 = vcombine.high %v2025, %v2025
    %v2034 = vcombine.high %v2032, %v2032
    %v2035 = vcombine.high %v1995, %v1995
    %v2037 = vunpack.c.l.s4 1983009808
    %v2038 = vunpack.c.0.s8 %v2037
    %v2039 = vlaneseq
    %v2040 = vshrl.u32 %v2039, 7
    %v2041 = vsub.s32 %v2038, %v2040
    %v2042 = vrot.slane %v1995, %v2041
    %v2044 = vunpack.c.l.s4 1983009808
    %v2045 = vunpack.c.0.s8 %v2044
    %v2046 = vlaneseq
    %v2047 = vshrl.u32 %v2046, 7
    %v2048 = vsub.s32 %v2045, %v2047
    %v2049 = vrot.slane %v2035, %v2048
    %v2050 = vcombine.high %v2042, %v2042
    %v2051 = vcombine.high %v2049, %v2049
    %v2052 = vcombine.high %v1996, %v1996
    %v2054 = vunpack.c.l.s4 1983009808
    %v2055 = vunpack.c.0.s8 %v2054
    %v2056 = vlaneseq
    %v2057 = vshrl.u32 %v2056, 7
    %v2058 = vsub.s32 %v2055, %v2057
    %v2059 = vrot.slane %v1996, %v2058
    %v2061 = vunpack.c.l.s4 1983009808
    %v2062 = vunpack.c.0.s8 %v2061
    %v2063 = vlaneseq
    %v2064 = vshrl.u32 %v2063, 7
    %v2065 = vsub.s32 %v2062, %v2064
    %v2066 = vrot.slane %v2052, %v2065
    %v2067 = vcombine.high %v2059, %v2059
    %v2068 = vcombine.high %v2066, %v2066
    %v2085 = vrot.slane %v2008, 7
    %v2086 = vrot.slane %v2085, 2
    %v2087 = vrot.slane %v2016, 7
    %v2088 = vrot.slane %v2087, 2
    %v2089 = vrot.slane %v2015, 7
    %v2090 = vrot.slane %v2089, 2
    %v2091 = vrot.slane %v2017, 7
    %v2092 = vrot.slane %v2091, 2
    %v2093 = vrot.slane %v2025, 7
    %v2094 = vrot.slane %v2093, 2
    %v2095 = vrot.slane %v2033, 7
    %v2096 = vrot.slane %v2095, 2
    %v2097 = vrot.slane %v2032, 7
    %v2098 = vrot.slane %v2097, 2
    %v2099 = vrot.slane %v2034, 7
    %v2100 = vrot.slane %v2099, 2
    %v2101 = vrot.slane %v2042, 7
    %v2102 = vrot.slane %v2101, 2
    %v2103 = vrot.slane %v2050, 7
    %v2104 = vrot.slane %v2103, 2
    %v2105 = vrot.slane %v2049, 7
    %v2106 = vrot.slane %v2105, 2
    %v2107 = vrot.slane %v2051, 7
    %v2108 = vrot.slane %v2107, 2
    %v2109 = vrot.slane %v2059, 7
    %v2110 = vrot.slane %v2109, 2
    %v2111 = vrot.slane %v2067, 7
    %v2112 = vrot.slane %v2111, 2
    %v2113 = vrot.slane %v2066, 7
    %v2114 = vrot.slane %v2113, 2
    %v2115 = vrot.slane %v2068, 7
    %v2116 = vrot.slane %v2115, 2
    %v2133 = vadd.f32 %v2008, %v2086
    %v2134 = vadd.f32 %v2016, %v2088
    %v2135 = vadd.f32 %v2015, %v2090
    %v2136 = vadd.f32 %v2017, %v2092
    %v2137 = vadd.f32 %v2025, %v2094
    %v2138 = vadd.f32 %v2033, %v2096
    %v2139 = vadd.f32 %v2032, %v2098
    %v2140 = vadd.f32 %v2034, %v2100
    %v2141 = vadd.f32 %v2042, %v2102
    %v2142 = vadd.f32 %v2050, %v2104
    %v2143 = vadd.f32 %v2049, %v2106
    %v2144 = vadd.f32 %v2051, %v2108
    %v2145 = vadd.f32 %v2059, %v2110
    %v2146 = vadd.f32 %v2067, %v2112
    %v2147 = vadd.f32 %v2066, %v2114
    %v2148 = vadd.f32 %v2068, %v2116
    %v2149 = vmul.f32 %v2133, 0.5
    %v2150 = vmul.f32 %v2134, 0.5
    %v2151 = vmul.f32 %v2135, 0.5
    %v2152 = vmul.f32 %v2136, 0.5
    %v2153 = vmul.f32 %v2137, 0.5
    %v2154 = vmul.f32 %v2138, 0.5
    %v2155 = vmul.f32 %v2139, 0.5
    %v2156 = vmul.f32 %v2140, 0.5
    %v2157 = vmul.f32 %v2141, 0.5
    %v2158 = vmul.f32 %v2142, 0.5
    %v2159 = vmul.f32 %v2143, 0.5
    %v2160 = vmul.f32 %v2144, 0.5
    %v2161 = vmul.f32 %v2145, 0.5
    %v2162 = vmul.f32 %v2146, 0.5
    %v2163 = vmul.f32 %v2147, 0.5
    %v2164 = vmul.f32 %v2148, 0.5
    %v2181 = vlaneseq
    %v2182 = vshrl.u32 %v2181, 7
    %v2183 = vsub.s32 0, %v2182
    %v2184 = vrot.slane %v2149, %v2183
    %v2185 = vlaneseq
    %v2186 = vshrl.u32 %v2185, 7
    %v2187 = vsub.s32 0, %v2186
    %v2188 = vrot.slane %v2150, %v2187
    %v2189 = vlaneseq
    %v2190 = vshrl.u32 %v2189, 7
    %v2191 = vsub.s32 0, %v2190
    %v2192 = vrot.slane %v2151, %v2191
    %v2193 = vlaneseq
    %v2194 = vshrl.u32 %v2193, 7
    %v2195 = vsub.s32 0, %v2194
    %v2196 = vrot.slane %v2152, %v2195
    %v2197 = vlaneseq
    %v2198 = vshrl.u32 %v2197, 7
    %v2199 = vsub.s32 0, %v2198
    %v2200 = vrot.slane %v2153, %v2199
    %v2201 = vlaneseq
    %v2202 = vshrl.u32 %v2201, 7
    %v2203 = vsub.s32 0, %v2202
    %v2204 = vrot.slane %v2154, %v2203
    %v2205 = vlaneseq
    %v2206 = vshrl.u32 %v2205, 7
    %v2207 = vsub.s32 0, %v2206
    %v2208 = vrot.slane %v2155, %v2207
    %v2209 = vlaneseq
    %v2210 = vshrl.u32 %v2209, 7
    %v2211 = vsub.s32 0, %v2210
    %v2212 = vrot.slane %v2156, %v2211
    %v2213 = vlaneseq
    %v2214 = vshrl.u32 %v2213, 7
    %v2215 = vsub.s32 0, %v2214
    %v2216 = vrot.slane %v2157, %v2215
    %v2217 = vlaneseq
    %v2218 = vshrl.u32 %v2217, 7
    %v2219 = vsub.s32 0, %v2218
    %v2220 = vrot.slane %v2158, %v2219
    %v2221 = vlaneseq
    %v2222 = vshrl.u32 %v2221, 7
    %v2223 = vsub.s32 0, %v2222
    %v2224 = vrot.slane %v2159, %v2223
    %v2225 = vlaneseq
    %v2226 = vshrl.u32 %v2225, 7
    %v2227 = vsub.s32 0, %v2226
    %v2228 = vrot.slane %v2160, %v2227
    %v2229 = vlaneseq
    %v2230 = vshrl.u32 %v2229, 7
    %v2231 = vsub.s32 0, %v2230
    %v2232 = vrot.slane %v2161, %v2231
    %v2233 = vlaneseq
    %v2234 = vshrl.u32 %v2233, 7
    %v2235 = vsub.s32 0, %v2234
    %v2236 = vrot.slane %v2162, %v2235
    %v2237 = vlaneseq
    %v2238 = vshrl.u32 %v2237, 7
    %v2239 = vsub.s32 0, %v2238
    %v2240 = vrot.slane %v2163, %v2239
    %v2241 = vlaneseq
    %v2242 = vshrl.u32 %v2241, 7
    %v2243 = vsub.s32 0, %v2242
    %v2244 = vrot.slane %v2164, %v2243
    %v2245 = vsel %vm1000, %v2188, %v2184
    %v2246 = vsel %vm1002, %v2192, %v2245
    %v2247 = vsel %vm1004, %v2196, %v2246
    %v2248 = vsel %vm1006, %v2200, %v2247
    %v2249 = vsel %vm1008, %v2204, %v2248
    %v2250 = vsel %vm1010, %v2208, %v2249
    %v2251 = vsel %vm1012, %v2212, %v2250
    %v2252 = vsel %vm1000, %v2220, %v2216
    %v2253 = vsel %vm1002, %v2224, %v2252
    %v2254 = vsel %vm1004, %v2228, %v2253
    %v2255 = vsel %vm1006, %v2232, %v2254
    %v2256 = vsel %vm1008, %v2236, %v2255
    %v2257 = vsel %vm1010, %v2240, %v2256
    %v2258 = vsel %vm1012, %v2244, %v2257
    %v2261 = vsel %vm1838, %v2251, 0.0
    %v2262 = vsel %vm1838, %v2258, 0.0
    %v2263 = vadd.f32 %v2261, %v2262
    %v2264 = vrot.slane %v2263, 4
    %v2265 = vadd.f32 %v2263, %v2264
    %v2266 = vrot.slane %v2265, 2
    %v2267 = vadd.f32 %v2265, %v2266
    %v2268 = vrot.slane %v2267, 1
    %v2269 = vadd.f32 %v2267, %v2268
    %v2270 = vrcp.pop 16.0
    %v2271 = vmul.f32 %v2269, %v2270
    %v2272 = vlaneseq
    %v2273 = vshrl.u32 %v2272, 7
    %v2274 = vsub.s32 0, %v2273
    %v2275 = vrot.slane %v2271, %v2274
    %v2277 = vcombine.high %v2275, %v2275
    %v2279 = vunpack.c.l.s4 1983009808
    %v2280 = vunpack.c.0.s8 %v2279
    %v2281 = vlaneseq
    %v2282 = vshrl.u32 %v2281, 7
    %v2283 = vsub.s32 %v2280, %v2282
    %v2284 = vrot.slane %v2275, %v2283
    %v2286 = vunpack.c.l.s4 1983009808
    %v2287 = vunpack.c.0.s8 %v2286
    %v2288 = vlaneseq
    %v2289 = vshrl.u32 %v2288, 7
    %v2290 = vsub.s32 %v2287, %v2289
    %v2291 = vrot.slane %v2277, %v2290
    %v2292 = vcombine.high %v2284, %v2284
    %v2293 = vcombine.high %v2291, %v2291
    %v2294 = vrot.slane %v2284, 1
    %v2295 = vrot.slane %v2292, 1
    %v2296 = vrot.slane %v2291, 1
    %v2297 = vrot.slane %v2293, 1
    %v2306 = vsub.f32 %v2149, %v2284
    %v2307 = vsub.f32 %v2150, %v2294
    %v2308 = vsub.f32 %v2151, %v2292
    %v2309 = vsub.f32 %v2152, %v2295
    %v2310 = vsub.f32 %v2153, %v2291
    %v2311 = vsub.f32 %v2154, %v2296
    %v2312 = vsub.f32 %v2155, %v2293
    %v2313 = vsub.f32 %v2156, %v2297
    %v2314 = vsub.f32 %v2157, %v2284
    %v2315 = vsub.f32 %v2158, %v2294
    %v2316 = vsub.f32 %v2159, %v2292
    %v2317 = vsub.f32 %v2160, %v2295
    %v2318 = vsub.f32 %v2161, %v2291
    %v2319 = vsub.f32 %v2162, %v2296
    %v2320 = vsub.f32 %v2163, %v2293
    %v2321 = vsub.f32 %v2164, %v2297
    %v2322 = vmul.f32 %v2306, %v2306
    %v2323 = vmul.f32 %v2307, %v2307
    %v2324 = vmul.f32 %v2308, %v2308
    %v2325 = vmul.f32 %v2309, %v2309
    %v2326 = vmul.f32 %v2310, %v2310
    %v2327 = vmul.f32 %v2311, %v2311
    %v2328 = vmul.f32 %v2312, %v2312
    %v2329 = vmul.f32 %v2313, %v2313
    %v2330 = vmul.f32 %v2314, %v2314
    %v2331 = vmul.f32 %v2315, %v2315
    %v2332 = vmul.f32 %v2316, %v2316
    %v2333 = vmul.f32 %v2317, %v2317
    %v2334 = vmul.f32 %v2318, %v2318
    %v2335 = vmul.f32 %v2319, %v2319
    %v2336 = vmul.f32 %v2320, %v2320
    %v2337 = vmul.f32 %v2321, %v2321
    %v2354 = vlaneseq
    %v2355 = vshrl.u32 %v2354, 7
    %v2356 = vsub.s32 0, %v2355
    %v2357 = vrot.slane %v2322, %v2356
    %v2358 = vlaneseq
    %v2359 = vshrl.u32 %v2358, 7
    %v2360 = vsub.s32 0, %v2359
    %v2361 = vrot.slane %v2323, %v2360
    %v2362 = vlaneseq
    %v2363 = vshrl.u32 %v2362, 7
    %v2364 = vsub.s32 0, %v2363
    %v2365 = vrot.slane %v2324, %v2364
    %v2366 = vlaneseq
    %v2367 = vshrl.u32 %v2366, 7
    %v2368 = vsub.s32 0, %v2367
    %v2369 = vrot.slane %v2325, %v2368
    %v2370 = vlaneseq
    %v2371 = vshrl.u32 %v2370, 7
    %v2372 = vsub.s32 0, %v2371
    %v2373 = vrot.slane %v2326, %v2372
    %v2374 = vlaneseq
    %v2375 = vshrl.u32 %v2374, 7
    %v2376 = vsub.s32 0, %v2375
    %v2377 = vrot.slane %v2327, %v2376
    %v2378 = vlaneseq
    %v2379 = vshrl.u32 %v2378, 7
    %v2380 = vsub.s32 0, %v2379
    %v2381 = vrot.slane %v2328, %v2380
    %v2382 = vlaneseq
    %v2383 = vshrl.u32 %v2382, 7
    %v2384 = vsub.s32 0, %v2383
    %v2385 = vrot.slane %v2329, %v2384
    %v2386 = vlaneseq
    %v2387 = vshrl.u32 %v2386, 7
    %v2388 = vsub.s32 0, %v2387
    %v2389 = vrot.slane %v2330, %v2388
    %v2390 = vlaneseq
    %v2391 = vshrl.u32 %v2390, 7
    %v2392 = vsub.s32 0, %v2391
    %v2393 = vrot.slane %v2331, %v2392
    %v2394 = vlaneseq
    %v2395 = vshrl.u32 %v2394, 7
    %v2396 = vsub.s32 0, %v2395
    %v2397 = vrot.slane %v2332, %v2396
    %v2398 = vlaneseq
    %v2399 = vshrl.u32 %v2398, 7
    %v2400 = vsub.s32 0, %v2399
    %v2401 = vrot.slane %v2333, %v2400
    %v2402 = vlaneseq
    %v2403 = vshrl.u32 %v2402, 7
    %v2404 = vsub.s32 0, %v2403
    %v2405 = vrot.slane %v2334, %v2404
    %v2406 = vlaneseq
    %v2407 = vshrl.u32 %v2406, 7
    %v2408 = vsub.s32 0, %v2407
    %v2409 = vrot.slane %v2335, %v2408
    %v2410 = vlaneseq
    %v2411 = vshrl.u32 %v2410, 7
    %v2412 = vsub.s32 0, %v2411
    %v2413 = vrot.slane %v2336, %v2412
    %v2414 = vlaneseq
    %v2415 = vshrl.u32 %v2414, 7
    %v2416 = vsub.s32 0, %v2415
    %v2417 = vrot.slane %v2337, %v2416
    %v2418 = vsel %vm1000, %v2361, %v2357
    %v2419 = vsel %vm1002, %v2365, %v2418
    %v2420 = vsel %vm1004, %v2369, %v2419
    %v2421 = vsel %vm1006, %v2373, %v2420
    %v2422 = vsel %vm1008, %v2377, %v2421
    %v2423 = vsel %vm1010, %v2381, %v2422
    %v2424 = vsel %vm1012, %v2385, %v2423
    %v2425 = vsel %vm1000, %v2393, %v2389
    %v2426 = vsel %vm1002, %v2397, %v2425
    %v2427 = vsel %vm1004, %v2401, %v2426
    %v2428 = vsel %vm1006, %v2405, %v2427
    %v2429 = vsel %vm1008, %v2409, %v2428
    %v2430 = vsel %vm1010, %v2413, %v2429
    %v2431 = vsel %vm1012, %v2417, %v2430
    %v2434 = vsel %vm1838, %v2424, 0.0
    %v2435 = vsel %vm1838, %v2431, 0.0
    %v2436 = vadd.f32 %v2434, %v2435
    %v2437 = vrot.slane %v2436, 4
    %v2438 = vadd.f32 %v2436, %v2437
    %v2439 = vrot.slane %v2438, 2
    %v2440 = vadd.f32 %v2438, %v2439
    %v2441 = vrot.slane %v2440, 1
    %v2442 = vadd.f32 %v2440, %v2441
    %v2443 = vmul.f32 %v2442, %v2270
    %v2444 = vadd.f32 %v2443, 1e-05
    %v2445 = vrsqrt.pop %v2444
    %v2446 = vlaneseq
    %v2447 = vshrl.u32 %v2446, 7
    %v2448 = vsub.s32 0, %v2447
    %v2449 = vrot.slane %v2445, %v2448
    %v2451 = vcombine.high %v2449, %v2449
    %v2453 = vunpack.c.l.s4 1983009808
    %v2454 = vunpack.c.0.s8 %v2453
    %v2455 = vlaneseq
    %v2456 = vshrl.u32 %v2455, 7
    %v2457 = vsub.s32 %v2454, %v2456
    %v2458 = vrot.slane %v2449, %v2457
    %v2460 = vunpack.c.l.s4 1983009808
    %v2461 = vunpack.c.0.s8 %v2460
    %v2462 = vlaneseq
    %v2463 = vshrl.u32 %v2462, 7
    %v2464 = vsub.s32 %v2461, %v2463
    %v2465 = vrot.slane %v2451, %v2464
    %v2466 = vcombine.high %v2458, %v2458
    %v2467 = vcombine.high %v2465, %v2465
    %v2468 = vrot.slane %v2458, 1
    %v2469 = vrot.slane %v2466, 1
    %v2470 = vrot.slane %v2465, 1
    %v2471 = vrot.slane %v2467, 1
    %v2480 = vmul.f32 %v2306, %v2458
    %v2481 = vmul.f32 %v2307, %v2468
    %v2482 = vmul.f32 %v2308, %v2466
    %v2483 = vmul.f32 %v2309, %v2469
    %v2484 = vmul.f32 %v2310, %v2465
    %v2485 = vmul.f32 %v2311, %v2470
    %v2486 = vmul.f32 %v2312, %v2467
    %v2487 = vmul.f32 %v2313, %v2471
    %v2488 = vmul.f32 %v2314, %v2458
    %v2489 = vmul.f32 %v2315, %v2468
    %v2490 = vmul.f32 %v2316, %v2466
    %v2491 = vmul.f32 %v2317, %v2469
    %v2492 = vmul.f32 %v2318, %v2465
    %v2493 = vmul.f32 %v2319, %v2470
    %v2494 = vmul.f32 %v2320, %v2467
    %v2495 = vmul.f32 %v2321, %v2471
    %v2497 = vcombine.high %v1554, %v1554
    %v2499 = vunpack.c.l.s4 1983009808
    %v2500 = vunpack.c.0.s8 %v2499
    %v2501 = vlaneseq
    %v2502 = vshrl.u32 %v2501, 7
    %v2503 = vsub.s32 %v2500, %v2502
    %v2504 = vrot.slane %v1554, %v2503
    %v2506 = vunpack.c.l.s4 1983009808
    %v2507 = vunpack.c.0.s8 %v2506
    %v2508 = vlaneseq
    %v2509 = vshrl.u32 %v2508, 7
    %v2510 = vsub.s32 %v2507, %v2509
    %v2511 = vrot.slane %v2497, %v2510
    %v2512 = vcombine.high %v2504, %v2504
    %v2513 = vcombine.high %v2511, %v2511
    %v2514 = vrot.slane %v2504, 1
    %v2515 = vrot.slane %v2512, 1
    %v2516 = vrot.slane %v2511, 1
    %v2517 = vrot.slane %v2513, 1
    %v2526 = vmul.f32 %v2480, %v2504
    %v2527 = vmul.f32 %v2481, %v2514
    %v2528 = vmul.f32 %v2482, %v2512
    %v2529 = vmul.f32 %v2483, %v2515
    %v2530 = vmul.f32 %v2484, %v2511
    %v2531 = vmul.f32 %v2485, %v2516
    %v2532 = vmul.f32 %v2486, %v2513
    %v2533 = vmul.f32 %v2487, %v2517
    %v2534 = vmul.f32 %v2488, %v2504
    %v2535 = vmul.f32 %v2489, %v2514
    %v2536 = vmul.f32 %v2490, %v2512
    %v2537 = vmul.f32 %v2491, %v2515
    %v2538 = vmul.f32 %v2492, %v2511
    %v2539 = vmul.f32 %v2493, %v2516
    %v2540 = vmul.f32 %v2494, %v2513
    %v2541 = vmul.f32 %v2495, %v2517
    %v2543 = vcombine.high %v1555, %v1555
    %v2545 = vunpack.c.l.s4 1983009808
    %v2546 = vunpack.c.0.s8 %v2545
    %v2547 = vlaneseq
    %v2548 = vshrl.u32 %v2547, 7
    %v2549 = vsub.s32 %v2546, %v2548
    %v2550 = vrot.slane %v1555, %v2549
    %v2552 = vunpack.c.l.s4 1983009808
    %v2553 = vunpack.c.0.s8 %v2552
    %v2554 = vlaneseq
    %v2555 = vshrl.u32 %v2554, 7
    %v2556 = vsub.s32 %v2553, %v2555
    %v2557 = vrot.slane %v2543, %v2556
    %v2558 = vcombine.high %v2550, %v2550
    %v2559 = vcombine.high %v2557, %v2557
    %v2560 = vrot.slane %v2550, 1
    %v2561 = vrot.slane %v2558, 1
    %v2562 = vrot.slane %v2557, 1
    %v2563 = vrot.slane %v2559, 1
    %v2572 = vadd.f32 %v2526, %v2550
    %v2573 = vadd.f32 %v2527, %v2560
    %v2574 = vadd.f32 %v2528, %v2558
    %v2575 = vadd.f32 %v2529, %v2561
    %v2576 = vadd.f32 %v2530, %v2557
    %v2577 = vadd.f32 %v2531, %v2562
    %v2578 = vadd.f32 %v2532, %v2559
    %v2579 = vadd.f32 %v2533, %v2563
    %v2580 = vadd.f32 %v2534, %v2550
    %v2581 = vadd.f32 %v2535, %v2560
    %v2582 = vadd.f32 %v2536, %v2558
    %v2583 = vadd.f32 %v2537, %v2561
    %v2584 = vadd.f32 %v2538, %v2557
    %v2585 = vadd.f32 %v2539, %v2562
    %v2586 = vadd.f32 %v2540, %v2559
    %v2587 = vadd.f32 %v2541, %v2563
    %v2588 = vld [vmem:[#allocation6 + $0x28] sm:$0xff]
    %v2589 = vld [vmem:[#allocation6 + $0x30] sm:$0xff]
    %v2590 = vld [vmem:[#allocation6 + $0x38] sm:$0xff]
    %v2591 = vld [vmem:[#allocation6 + $0x40] sm:$0xff]
    %v2592 = vld [vmem:[#allocation6 + $0x48] sm:$0xff]
    %v2593 = vld [vmem:[#allocation6 + $0x50] sm:$0xff]
    %v2594 = vld [vmem:[#allocation8 + $0x6] ss:$0 sm:$0xff]
    %v2595 = vld [vmem:[#allocation8 + $0x7] ss:$0 sm:$0xff]
    %v2596 = vld [vmem:[#allocation8 + $0x10] ss:$0 sm:$0xff]
    %v2611 = vlaneseq
    %v2612 = vshrl.u32 %v2611, 7
    %v2613 = vsub.s32 0, %v2612
    %v2614 = vrot.slane %v2572, %v2613
    %v2615 = vlaneseq
    %v2616 = vshrl.u32 %v2615, 7
    %v2617 = vsub.s32 0, %v2616
    %v2618 = vrot.slane %v2573, %v2617
    %v2619 = vlaneseq
    %v2620 = vshrl.u32 %v2619, 7
    %v2621 = vsub.s32 0, %v2620
    %v2622 = vrot.slane %v2574, %v2621
    %v2623 = vlaneseq
    %v2624 = vshrl.u32 %v2623, 7
    %v2625 = vsub.s32 0, %v2624
    %v2626 = vrot.slane %v2575, %v2625
    %v2627 = vlaneseq
    %v2628 = vshrl.u32 %v2627, 7
    %v2629 = vsub.s32 0, %v2628
    %v2630 = vrot.slane %v2576, %v2629
    %v2631 = vlaneseq
    %v2632 = vshrl.u32 %v2631, 7
    %v2633 = vsub.s32 0, %v2632
    %v2634 = vrot.slane %v2577, %v2633
    %v2635 = vlaneseq
    %v2636 = vshrl.u32 %v2635, 7
    %v2637 = vsub.s32 0, %v2636
    %v2638 = vrot.slane %v2578, %v2637
    %v2639 = vlaneseq
    %v2640 = vshrl.u32 %v2639, 7
    %v2641 = vsub.s32 0, %v2640
    %v2642 = vrot.slane %v2580, %v2641
    %v2643 = vlaneseq
    %v2644 = vshrl.u32 %v2643, 7
    %v2645 = vsub.s32 0, %v2644
    %v2646 = vrot.slane %v2581, %v2645
    %v2647 = vlaneseq
    %v2648 = vshrl.u32 %v2647, 7
    %v2649 = vsub.s32 0, %v2648
    %v2650 = vrot.slane %v2582, %v2649
    %v2651 = vlaneseq
    %v2652 = vshrl.u32 %v2651, 7
    %v2653 = vsub.s32 0, %v2652
    %v2654 = vrot.slane %v2583, %v2653
    %v2655 = vlaneseq
    %v2656 = vshrl.u32 %v2655, 7
    %v2657 = vsub.s32 0, %v2656
    %v2658 = vrot.slane %v2584, %v2657
    %v2659 = vlaneseq
    %v2660 = vshrl.u32 %v2659, 7
    %v2661 = vsub.s32 0, %v2660
    %v2662 = vrot.slane %v2585, %v2661
    %v2663 = vlaneseq
    %v2664 = vshrl.u32 %v2663, 7
    %v2665 = vsub.s32 0, %v2664
    %v2666 = vrot.slane %v2586, %v2665
    %v2667 = vsel %vm1002, %v2618, %v2614
    %v2668 = vsel %vm1004, %v2622, %v2667
    %v2669 = vsel %vm1006, %v2626, %v2668
    %v2670 = vsel %vm1008, %v2630, %v2669
    %v2671 = vsel %vm1010, %v2634, %v2670
    %v2672 = vsel %vm1012, %v2638, %v2671
    %v2673 = vsel %vm1002, %v2646, %v2642
    %v2674 = vsel %vm1004, %v2650, %v2673
    %v2675 = vsel %vm1006, %v2654, %v2674
    %v2676 = vsel %vm1008, %v2658, %v2675
    %v2677 = vsel %vm1010, %v2662, %v2676
    %v2678 = vsel %vm1012, %v2666, %v2677
    %v2681 = vsel %vm146, %v2579, %v2672
    %v2682 = vsel %vm146, %v2587, %v2678
    %v2685 = vlaneseq
    %v2686 = vshrl.u32 %v2685, 7
    %v2687 = vsub.s32 0, %v2686
    %v2688 = vrot.slane %v2579, %v2687
    %v2689 = vlaneseq
    %v2690 = vshrl.u32 %v2689, 7
    %v2691 = vsub.s32 0, %v2690
    %v2692 = vrot.slane %v2587, %v2691
    %v2693 = vsel %vm1000, %v2622, %v2618
    %v2694 = vsel %vm1002, %v2626, %v2693
    %v2695 = vsel %vm1004, %v2630, %v2694
    %v2696 = vsel %vm1006, %v2634, %v2695
    %v2697 = vsel %vm1008, %v2638, %v2696
    %v2698 = vsel %vm1010, %v2688, %v2697
    %v2699 = vsel %vm1000, %v2650, %v2646
    %v2700 = vsel %vm1002, %v2654, %v2699
    %v2701 = vsel %vm1004, %v2658, %v2700
    %v2702 = vsel %vm1006, %v2662, %v2701
    %v2703 = vsel %vm1008, %v2666, %v2702
    %v2704 = vsel %vm1010, %v2692, %v2703
    %v2709 = vsel %vm169, %v2698, %v2614
    %v2710 = vsel %vm169, %v2704, %v2642
    %v2711 = vsel %vm1000, %v2618, %v2614
    %v2712 = vsel %vm1002, %v2622, %v2711
    %v2713 = vsel %vm1004, %v2626, %v2712
    %v2714 = vsel %vm1006, %v2630, %v2713
    %v2715 = vsel %vm1008, %v2634, %v2714
    %v2716 = vsel %vm1010, %v2638, %v2715
    %v2717 = vsel %vm1012, %v2688, %v2716
    %v2718 = vsel %vm1000, %v2646, %v2642
    %v2719 = vsel %vm1002, %v2650, %v2718
    %v2720 = vsel %vm1004, %v2654, %v2719
    %v2721 = vsel %vm1006, %v2658, %v2720
    %v2722 = vsel %vm1008, %v2662, %v2721
    %v2723 = vsel %vm1010, %v2666, %v2722
    %v2724 = vsel %vm1012, %v2692, %v2723
    %2725 = vrot.lane.b32.xlu0 %v2717, 16
    %v2726 = vpop.permute.xlu0 %2725
    %2727 = vrot.lane.b32.xlu0 %v2724, 16
    %v2728 = vpop.permute.xlu0 %2727
    %2733 = vrot.lane.b32.xlu0 %v2709, 32
    %v2734 = vpop.permute.xlu0 %2733
    %2735 = vrot.lane.b32.xlu0 %v2710, 32
    %v2736 = vpop.permute.xlu0 %2735
    %v2739 = vsel %vm1838, %v2681, %v2726
    %v2740 = vsel %vm1838, %v2682, %v2728
    %vm2741 = vcmask 261120
    %v2742 = vsel %vm2741, %v2739, %v2734
    %v2743 = vsel %vm2741, %v2740, %v2736
    %vm2744 = vcmask 392192
    %v2746 = vsel %vm2744, %v2742, 0
    %v2749 = vsel %vm2744, %v2743, 0
    %2751 = vmatprep.subr.mxu0 0.0
    %2752 = vmatpush1.msra.mxu0 %v2588
    %2753 = vmatprep.subr.mxu0 0.0
    %2754 = vmatpush1.msra.mxu0 %v2589
    %2755 = vmatprep.subr.mxu0 0.0
    %2756 = vmatpush1.msra.mxu0 %v2590
    %2757 = vmatprep.subr.mxu0 0.0
    %2758 = vmatpush1.msra.mxu0 %v2591
    %2759 = vmatprep.subr.mxu0 0.0
    %2760 = vmatpush1.msra.mxu0 %v2592
    %2761 = vmatprep.subr.mxu0 0.0
    %2762 = vmatpush1.msra.mxu0 %v2593
    %2763 = vmatprep.subr.mxu0 0.0
    %2764 = vmatpush1.msra.mxu0 0.0
    %2765 = vmatprep.subr.mxu0 0.0
    %2766 = vmatpush1.msra.mxu0 0.0
    %2767 = vmatprep.subr.mxu0 0.0
    %2768 = vmatpush1.msra.mxu0 0.0
    %2769 = vmatprep.subr.mxu0 0.0
    %2770 = vmatpush1.msra.mxu0 0.0
    %2771 = vmatprep.subr.mxu0 0.0
    %2772 = vmatpush1.msra.mxu0 0.0
    %2773 = vmatprep.subr.mxu0 0.0
    %2774 = vmatpush1.msra.mxu0 0.0
    %2775 = vmatprep.subr.mxu0 0.0
    %2776 = vmatpush1.msra.mxu0 0.0
    %2777 = vmatprep.subr.mxu0 0.0
    %2778 = vmatpush1.msra.mxu0 0.0
    %2779 = vmatprep.subr.mxu0 0.0
    %2780 = vmatpush1.msra.mxu0 0.0
    %2781 = vmatprep.subr.mxu0 0.0
    %2782 = vmatpush1.msra.mxu0 0.0
    %2783 = vmatprep.subr.mxu0 0.0
    %2784 = vmatpush1.msra.mxu0 0.0
    %2785 = vmatprep.subr.mxu0 0.0
    %2786 = vmatpush1.msra.mxu0 0.0
    %2787 = vmatprep.subr.mxu0 0.0
    %2788 = vmatpush1.msra.mxu0 0.0
    %2789 = vmatprep.subr.mxu0 0.0
    %2790 = vmatpush1.msra.mxu0 0.0
    %2791 = vmatprep.subr.mxu0 0.0
    %2792 = vmatpush1.msra.mxu0 0.0
    %2793 = vmatprep.subr.mxu0 0.0
    %2794 = vmatpush1.msra.mxu0 0.0
    %2795 = vmatprep.subr.mxu0 0.0
    %2796 = vmatpush1.msra.mxu0 0.0
    %2797 = vmatprep.subr.mxu0 0.0
    %2798 = vmatpush1.msra.mxu0 0.0
    %2799 = vmatprep.subr.mxu0 0.0
    %2800 = vmatpush1.msra.mxu0 0.0
    %2801 = vmatprep.subr.mxu0 0.0
    %2802 = vmatpush1.msra.mxu0 0.0
    %2803 = vmatprep.subr.mxu0 0.0
    %2804 = vmatpush1.msra.mxu0 0.0
    %2805 = vmatprep.subr.mxu0 0.0
    %2806 = vmatpush1.msra.mxu0 0.0
    %2807 = vmatprep.subr.mxu0 0.0
    %2808 = vmatpush1.msra.mxu0 0.0
    %2809 = vmatprep.subr.mxu0 0.0
    %2810 = vmatpush1.msra.mxu0 0.0
    %2811 = vmatprep.subr.mxu0 0.0
    %2812 = vmatpush1.msra.mxu0 0.0
    %2813 = vmatprep.subr.mxu0 0.0
    %2814 = vmatpush1.msra.mxu0 0.0
    %2815 = vmatprep.mubr.f32.mxu0 0.0
    %2816 = vmatmul.mubr.f32.gmra.mrb[0].mxu0 %v2746
    %v2817 = vpop.f32.mrb[0].mxu0
    %v2818 = vadd.f32 %v2594, %v2817
    %v2819 = vpop.f32.mrb[0].mxu0
    %2820 = vmatprep.mubr.f32.mxu0 0.0
    %2821 = vmatmul.mubr.f32.gmra.mrb[0].mxu0 %v2749
    %v2822 = vpop.f32.mrb[0].mxu0
    %v2823 = vadd.f32 %v2594, %v2822
    %v2824 = vpop.f32.mrb[0].mxu0
    %2825 = vdwg.mxu0
    %vm2826 = vcmp.gt.f32.partialorder %v2818, 20.0
    %vm2827 = vcmp.gt.f32.partialorder %v2823, 20.0
    %v2828 = vmin.f32 %v2818, 20.0
    %v2829 = vmin.f32 %v2823, 20.0
    %v2830 = vmul.f32 %v2828, 1.442695
    %v2831 = vpow.pop %v2830
    %v2832 = vmul.f32 %v2829, 1.442695
    %v2833 = vpow.pop %v2832
    %v2834 = vadd.f32 %v2831, 1.0
    %v2835 = vlog2.pop %v2834
    %v2836 = vmul.f32 %v2835, 0.6931472
    %v2837 = vmul.f32 -0.5, %v2831
    %v2838 = vadd.f32 %v2837, 1.0
    %v2839 = vmul.f32 %v2838, %v2831
    %v2840 = vand.u32 2147483647, %v2831
    %vm2841 = vcmp.lt.f32.partialorder %v2840, 0.0004427343
    %v2842 = vsel %vm2841, %v2839, %v2836
    %v2843 = vadd.f32 %v2833, 1.0
    %v2844 = vlog2.pop %v2843
    %v2845 = vmul.f32 %v2844, 0.6931472
    %v2846 = vmul.f32 -0.5, %v2833
    %v2847 = vadd.f32 %v2846, 1.0
    %v2848 = vmul.f32 %v2847, %v2833
    %v2849 = vand.u32 2147483647, %v2833
    %vm2850 = vcmp.lt.f32.partialorder %v2849, 0.0004427343
    %v2851 = vsel %vm2850, %v2848, %v2845
    %v2852 = vsel %vm2826, %v2818, %v2842
    %v2853 = vsel %vm2827, %v2823, %v2851
    %v2856 = vcombine.high %v2852, %v2852
    %v2858 = vunpack.c.l.s4 1983009808
    %v2859 = vunpack.c.0.s8 %v2858
    %v2860 = vlaneseq
    %v2861 = vshrl.u32 %v2860, 7
    %v2862 = vsub.s32 %v2859, %v2861
    %v2863 = vrot.slane %v2852, %v2862
    %v2865 = vunpack.c.l.s4 1983009808
    %v2866 = vunpack.c.0.s8 %v2865
    %v2867 = vlaneseq
    %v2868 = vshrl.u32 %v2867, 7
    %v2869 = vsub.s32 %v2866, %v2868
    %v2870 = vrot.slane %v2856, %v2869
    %v2871 = vcombine.high %v2863, %v2863
    %v2872 = vcombine.high %v2870, %v2870
    %v2873 = vcombine.high %v2853, %v2853
    %v2875 = vunpack.c.l.s4 1983009808
    %v2876 = vunpack.c.0.s8 %v2875
    %v2877 = vlaneseq
    %v2878 = vshrl.u32 %v2877, 7
    %v2879 = vsub.s32 %v2876, %v2878
    %v2880 = vrot.slane %v2853, %v2879
    %v2882 = vunpack.c.l.s4 1983009808
    %v2883 = vunpack.c.0.s8 %v2882
    %v2884 = vlaneseq
    %v2885 = vshrl.u32 %v2884, 7
    %v2886 = vsub.s32 %v2883, %v2885
    %v2887 = vrot.slane %v2873, %v2886
    %v2888 = vcombine.high %v2880, %v2880
    %v2889 = vcombine.high %v2887, %v2887
    %v2898 = vrot.slane %v2863, 7
    %v2899 = vrot.slane %v2898, 2
    %v2900 = vrot.slane %v2871, 7
    %v2901 = vrot.slane %v2900, 2
    %v2902 = vrot.slane %v2870, 7
    %v2903 = vrot.slane %v2902, 2
    %v2904 = vrot.slane %v2872, 7
    %v2905 = vrot.slane %v2904, 2
    %v2906 = vrot.slane %v2880, 7
    %v2907 = vrot.slane %v2906, 2
    %v2908 = vrot.slane %v2888, 7
    %v2909 = vrot.slane %v2908, 2
    %v2910 = vrot.slane %v2887, 7
    %v2911 = vrot.slane %v2910, 2
    %v2912 = vrot.slane %v2889, 7
    %v2913 = vrot.slane %v2912, 2
    %v2922 = vadd.f32 %v2863, %v2899
    %v2923 = vadd.f32 %v2871, %v2901
    %v2924 = vadd.f32 %v2870, %v2903
    %v2925 = vadd.f32 %v2872, %v2905
    %v2926 = vadd.f32 %v2880, %v2907
    %v2927 = vadd.f32 %v2888, %v2909
    %v2928 = vadd.f32 %v2887, %v2911
    %v2929 = vadd.f32 %v2889, %v2913
    %v2930 = vmul.f32 %v2922, 0.5
    %v2931 = vmul.f32 %v2923, 0.5
    %v2932 = vmul.f32 %v2924, 0.5
    %v2933 = vmul.f32 %v2925, 0.5
    %v2934 = vmul.f32 %v2926, 0.5
    %v2935 = vmul.f32 %v2927, 0.5
    %v2936 = vmul.f32 %v2928, 0.5
    %v2937 = vmul.f32 %v2929, 0.5
    %v2946 = vlaneseq
    %v2947 = vshrl.u32 %v2946, 7
    %v2948 = vsub.s32 0, %v2947
    %v2949 = vrot.slane %v2930, %v2948
    %v2950 = vlaneseq
    %v2951 = vshrl.u32 %v2950, 7
    %v2952 = vsub.s32 0, %v2951
    %v2953 = vrot.slane %v2931, %v2952
    %v2954 = vlaneseq
    %v2955 = vshrl.u32 %v2954, 7
    %v2956 = vsub.s32 0, %v2955
    %v2957 = vrot.slane %v2932, %v2956
    %v2958 = vlaneseq
    %v2959 = vshrl.u32 %v2958, 7
    %v2960 = vsub.s32 0, %v2959
    %v2961 = vrot.slane %v2933, %v2960
    %v2962 = vlaneseq
    %v2963 = vshrl.u32 %v2962, 7
    %v2964 = vsub.s32 0, %v2963
    %v2965 = vrot.slane %v2934, %v2964
    %v2966 = vlaneseq
    %v2967 = vshrl.u32 %v2966, 7
    %v2968 = vsub.s32 0, %v2967
    %v2969 = vrot.slane %v2935, %v2968
    %v2970 = vlaneseq
    %v2971 = vshrl.u32 %v2970, 7
    %v2972 = vsub.s32 0, %v2971
    %v2973 = vrot.slane %v2936, %v2972
    %v2974 = vlaneseq
    %v2975 = vshrl.u32 %v2974, 7
    %v2976 = vsub.s32 0, %v2975
    %v2977 = vrot.slane %v2937, %v2976
    %v2978 = vsel %vm1000, %v2953, %v2949
    %v2979 = vsel %vm1002, %v2957, %v2978
    %v2980 = vsel %vm1004, %v2961, %v2979
    %v2981 = vsel %vm1006, %v2965, %v2980
    %v2982 = vsel %vm1008, %v2969, %v2981
    %v2983 = vsel %vm1010, %v2973, %v2982
    %v2984 = vsel %vm1012, %v2977, %v2983
    %v2986 = vsel %vm2741, %v2984, 0.0
    %v2987 = vrot.slane %v2986, 4
    %v2988 = vadd.f32 %v2986, %v2987
    %v2989 = vrot.slane %v2988, 2
    %v2990 = vadd.f32 %v2988, %v2989
    %v2991 = vrot.slane %v2990, 1
    %v2992 = vadd.f32 %v2990, %v2991
    %v2993 = vrcp.pop 8.0
    %v2994 = vmul.f32 %v2992, %v2993
    %v2995 = vlaneseq
    %v2996 = vshrl.u32 %v2995, 7
    %v2997 = vsub.s32 0, %v2996
    %v2998 = vrot.slane %v2994, %v2997
    %v3000 = vcombine.high %v2998, %v2998
    %v3002 = vunpack.c.l.s4 1983009808
    %v3003 = vunpack.c.0.s8 %v3002
    %v3004 = vlaneseq
    %v3005 = vshrl.u32 %v3004, 7
    %v3006 = vsub.s32 %v3003, %v3005
    %v3007 = vrot.slane %v2998, %v3006
    %v3009 = vunpack.c.l.s4 1983009808
    %v3010 = vunpack.c.0.s8 %v3009
    %v3011 = vlaneseq
    %v3012 = vshrl.u32 %v3011, 7
    %v3013 = vsub.s32 %v3010, %v3012
    %v3014 = vrot.slane %v3000, %v3013
    %v3015 = vcombine.high %v3007, %v3007
    %v3016 = vcombine.high %v3014, %v3014
    %v3017 = vrot.slane %v3007, 1
    %v3018 = vrot.slane %v3015, 1
    %v3019 = vrot.slane %v3014, 1
    %v3020 = vrot.slane %v3016, 1
    %v3029 = vsub.f32 %v2930, %v3007
    %v3030 = vsub.f32 %v2931, %v3017
    %v3031 = vsub.f32 %v2932, %v3015
    %v3032 = vsub.f32 %v2933, %v3018
    %v3033 = vsub.f32 %v2934, %v3014
    %v3034 = vsub.f32 %v2935, %v3019
    %v3035 = vsub.f32 %v2936, %v3016
    %v3036 = vsub.f32 %v2937, %v3020
    %v3037 = vmul.f32 %v3029, %v3029
    %v3038 = vmul.f32 %v3030, %v3030
    %v3039 = vmul.f32 %v3031, %v3031
    %v3040 = vmul.f32 %v3032, %v3032
    %v3041 = vmul.f32 %v3033, %v3033
    %v3042 = vmul.f32 %v3034, %v3034
    %v3043 = vmul.f32 %v3035, %v3035
    %v3044 = vmul.f32 %v3036, %v3036
    %v3053 = vlaneseq
    %v3054 = vshrl.u32 %v3053, 7
    %v3055 = vsub.s32 0, %v3054
    %v3056 = vrot.slane %v3037, %v3055
    %v3057 = vlaneseq
    %v3058 = vshrl.u32 %v3057, 7
    %v3059 = vsub.s32 0, %v3058
    %v3060 = vrot.slane %v3038, %v3059
    %v3061 = vlaneseq
    %v3062 = vshrl.u32 %v3061, 7
    %v3063 = vsub.s32 0, %v3062
    %v3064 = vrot.slane %v3039, %v3063
    %v3065 = vlaneseq
    %v3066 = vshrl.u32 %v3065, 7
    %v3067 = vsub.s32 0, %v3066
    %v3068 = vrot.slane %v3040, %v3067
    %v3069 = vlaneseq
    %v3070 = vshrl.u32 %v3069, 7
    %v3071 = vsub.s32 0, %v3070
    %v3072 = vrot.slane %v3041, %v3071
    %v3073 = vlaneseq
    %v3074 = vshrl.u32 %v3073, 7
    %v3075 = vsub.s32 0, %v3074
    %v3076 = vrot.slane %v3042, %v3075
    %v3077 = vlaneseq
    %v3078 = vshrl.u32 %v3077, 7
    %v3079 = vsub.s32 0, %v3078
    %v3080 = vrot.slane %v3043, %v3079
    %v3081 = vlaneseq
    %v3082 = vshrl.u32 %v3081, 7
    %v3083 = vsub.s32 0, %v3082
    %v3084 = vrot.slane %v3044, %v3083
    %v3085 = vsel %vm1000, %v3060, %v3056
    %v3086 = vsel %vm1002, %v3064, %v3085
    %v3087 = vsel %vm1004, %v3068, %v3086
    %v3088 = vsel %vm1006, %v3072, %v3087
    %v3089 = vsel %vm1008, %v3076, %v3088
    %v3090 = vsel %vm1010, %v3080, %v3089
    %v3091 = vsel %vm1012, %v3084, %v3090
    %v3093 = vsel %vm2741, %v3091, 0.0
    %v3094 = vrot.slane %v3093, 4
    %v3095 = vadd.f32 %v3093, %v3094
    %v3096 = vrot.slane %v3095, 2
    %v3097 = vadd.f32 %v3095, %v3096
    %v3098 = vrot.slane %v3097, 1
    %v3099 = vadd.f32 %v3097, %v3098
    %v3100 = vmul.f32 %v3099, %v2993
    %v3101 = vadd.f32 %v3100, 1e-05
    %v3102 = vrsqrt.pop %v3101
    %v3103 = vlaneseq
    %v3104 = vshrl.u32 %v3103, 7
    %v3105 = vsub.s32 0, %v3104
    %v3106 = vrot.slane %v3102, %v3105
    %v3108 = vcombine.high %v3106, %v3106
    %v3110 = vunpack.c.l.s4 1983009808
    %v3111 = vunpack.c.0.s8 %v3110
    %v3112 = vlaneseq
    %v3113 = vshrl.u32 %v3112, 7
    %v3114 = vsub.s32 %v3111, %v3113
    %v3115 = vrot.slane %v3106, %v3114
    %v3117 = vunpack.c.l.s4 1983009808
    %v3118 = vunpack.c.0.s8 %v3117
    %v3119 = vlaneseq
    %v3120 = vshrl.u32 %v3119, 7
    %v3121 = vsub.s32 %v3118, %v3120
    %v3122 = vrot.slane %v3108, %v3121
    %v3123 = vcombine.high %v3115, %v3115
    %v3124 = vcombine.high %v3122, %v3122
    %v3125 = vrot.slane %v3115, 1
    %v3126 = vrot.slane %v3123, 1
    %v3127 = vrot.slane %v3122, 1
    %v3128 = vrot.slane %v3124, 1
    %v3137 = vmul.f32 %v3029, %v3115
    %v3138 = vmul.f32 %v3030, %v3125
    %v3139 = vmul.f32 %v3031, %v3123
    %v3140 = vmul.f32 %v3032, %v3126
    %v3141 = vmul.f32 %v3033, %v3122
    %v3142 = vmul.f32 %v3034, %v3127
    %v3143 = vmul.f32 %v3035, %v3124
    %v3144 = vmul.f32 %v3036, %v3128
    %v3146 = vcombine.high %v2595, %v2595
    %v3148 = vunpack.c.l.s4 1983009808
    %v3149 = vunpack.c.0.s8 %v3148
    %v3150 = vlaneseq
    %v3151 = vshrl.u32 %v3150, 7
    %v3152 = vsub.s32 %v3149, %v3151
    %v3153 = vrot.slane %v2595, %v3152
    %v3155 = vunpack.c.l.s4 1983009808
    %v3156 = vunpack.c.0.s8 %v3155
    %v3157 = vlaneseq
    %v3158 = vshrl.u32 %v3157, 7
    %v3159 = vsub.s32 %v3156, %v3158
    %v3160 = vrot.slane %v3146, %v3159
    %v3161 = vcombine.high %v3153, %v3153
    %v3162 = vcombine.high %v3160, %v3160
    %v3163 = vrot.slane %v3153, 1
    %v3164 = vrot.slane %v3161, 1
    %v3165 = vrot.slane %v3160, 1
    %v3166 = vrot.slane %v3162, 1
    %v3175 = vmul.f32 %v3137, %v3153
    %v3176 = vmul.f32 %v3138, %v3163
    %v3177 = vmul.f32 %v3139, %v3161
    %v3178 = vmul.f32 %v3140, %v3164
    %v3179 = vmul.f32 %v3141, %v3160
    %v3180 = vmul.f32 %v3142, %v3165
    %v3181 = vmul.f32 %v3143, %v3162
    %v3182 = vmul.f32 %v3144, %v3166
    %v3184 = vcombine.high %v2596, %v2596
    %v3186 = vunpack.c.l.s4 1983009808
    %v3187 = vunpack.c.0.s8 %v3186
    %v3188 = vlaneseq
    %v3189 = vshrl.u32 %v3188, 7
    %v3190 = vsub.s32 %v3187, %v3189
    %v3191 = vrot.slane %v2596, %v3190
    %v3193 = vunpack.c.l.s4 1983009808
    %v3194 = vunpack.c.0.s8 %v3193
    %v3195 = vlaneseq
    %v3196 = vshrl.u32 %v3195, 7
    %v3197 = vsub.s32 %v3194, %v3196
    %v3198 = vrot.slane %v3184, %v3197
    %v3199 = vcombine.high %v3191, %v3191
    %v3200 = vcombine.high %v3198, %v3198
    %v3201 = vrot.slane %v3191, 1
    %v3202 = vrot.slane %v3199, 1
    %v3203 = vrot.slane %v3198, 1
    %v3204 = vrot.slane %v3200, 1
    %v3213 = vadd.f32 %v3175, %v3191
    %v3214 = vadd.f32 %v3176, %v3201
    %v3215 = vadd.f32 %v3177, %v3199
    %v3216 = vadd.f32 %v3178, %v3202
    %v3217 = vadd.f32 %v3179, %v3198
    %v3218 = vadd.f32 %v3180, %v3203
    %v3219 = vadd.f32 %v3181, %v3200
    %v3220 = vadd.f32 %v3182, %v3204
    %v3223 = vlaneseq
    %v3224 = vshrl.u32 %v3223, 7
    %v3225 = vsub.s32 0, %v3224
    %v3226 = vrot.slane %v3213, %v3225
    %v3227 = vlaneseq
    %v3228 = vshrl.u32 %v3227, 7
    %v3229 = vsub.s32 0, %v3228
    %v3230 = vrot.slane %v3217, %v3229
    %v3231 = vsel %vm1000, %v3230, %v3226
    %v3235 = vlaneseq
    %v3236 = vshrl.u32 %v3235, 7
    %v3237 = vsub.s32 0, %v3236
    %v3238 = vrot.slane %v3214, %v3237
    %v3239 = vlaneseq
    %v3240 = vshrl.u32 %v3239, 7
    %v3241 = vsub.s32 0, %v3240
    %v3242 = vrot.slane %v3218, %v3241
    %v3243 = vsel %vm1000, %v3242, %v3238
    %3244 = vrot.lane.b32.xlu0 %v3243, 32
    %v3245 = vpop.permute.xlu0 %3244
    %v3249 = vlaneseq
    %v3250 = vshrl.u32 %v3249, 7
    %v3251 = vsub.s32 0, %v3250
    %v3252 = vrot.slane %v3215, %v3251
    %v3253 = vlaneseq
    %v3254 = vshrl.u32 %v3253, 7
    %v3255 = vsub.s32 0, %v3254
    %v3256 = vrot.slane %v3219, %v3255
    %v3257 = vsel %vm1000, %v3256, %v3252
    %3258 = vrot.lane.b32.xlu0 %v3257, 64
    %v3259 = vpop.permute.xlu0 %3258
    %v3263 = vlaneseq
    %v3264 = vshrl.u32 %v3263, 7
    %v3265 = vsub.s32 0, %v3264
    %v3266 = vrot.slane %v3216, %v3265
    %v3267 = vlaneseq
    %v3268 = vshrl.u32 %v3267, 7
    %v3269 = vsub.s32 0, %v3268
    %v3270 = vrot.slane %v3220, %v3269
    %v3271 = vsel %vm1000, %v3270, %v3266
    %3272 = vrot.lane.b32.xlu0 %v3271, 96
    %v3273 = vpop.permute.xlu0 %3272
    %v3275 = vsel %vm2741, %v3231, %v3245
    %vm3276 = vcmask 523264
    %v3277 = vsel %vm3276, %v3275, %v3259
    %vm3278 = vcmask 785408
    %v3279 = vsel %vm3278, %v3277, %v3273
    %v3280 = vld [vmem:[#allocation6 + $0x58] sm:$0xff]
    %v3281 = vld [vmem:[#allocation6 + $0x60] sm:$0xff]
    %v3282 = vld [vmem:[#allocation6 + $0x68] sm:$0xff]
    %v3283 = vld [vmem:[#allocation6 + $0x70] sm:$0xff]
    %v3284 = vld [vmem:[#allocation6 + $0x78] sm:$0xff]
    %v3285 = vld [vmem:[#allocation6 + $0x80] sm:$0xff]
    %v3286 = vld [vmem:[#allocation6 + $0x88] sm:$0xff]
    %v3287 = vld [vmem:[#allocation6 + $0x90] sm:$0xff]
    %v3288 = vld [vmem:[#allocation6 + $0x98] sm:$0xff]
    %v3289 = vld [vmem:[#allocation6 + $0xa0] sm:$0xff]
    %v3290 = vld [vmem:[#allocation6 + $0xa8] sm:$0xff]
    %v3291 = vld [vmem:[#allocation6 + $0xb0] sm:$0xff]
    %v3292 = vld [vmem:[#allocation6 + $0xb8] sm:$0xff]
    %v3293 = vld [vmem:[#allocation6 + $0xc0] sm:$0xff]
    %v3294 = vld [vmem:[#allocation6 + $0xc8] sm:$0xff]
    %v3295 = vld [vmem:[#allocation6 + $0xd0] sm:$0xff]
    %v3296 = vld [vmem:[#allocation6 + $0xd8] sm:$0xff]
    %v3297 = vld [vmem:[#allocation6 + $0xe0] sm:$0xff]
    %v3298 = vld [vmem:[#allocation6 + $0xe8] sm:$0xff]
    %v3299 = vld [vmem:[#allocation6 + $0xf0] sm:$0xff]
    %v3300 = vld [vmem:[#allocation6 + $0xf8] sm:$0xff]
    %v3301 = vld [vmem:[#allocation6 + $0x100] sm:$0xff]
    %v3302 = vld [vmem:[#allocation6 + $0x108] sm:$0xff]
    %v3303 = vld [vmem:[#allocation6 + $0x110] sm:$0xff]
    %v3304 = vld [vmem:[#allocation6 + $0x118] sm:$0xff]
    %s3305 = scalar_lea.vmem [#allocation8], 17
    %v3306 = vld [vmem:[%s3305] ss:$8 sm:$0x3]
    %v3308 = vlaneseq
    %v3309 = vshrl.u32 %v3308, 7
    %v3310 = vsub.s32 0, %v3309
    %v3311 = vrot.slane %v3306, %v3310
    %v3312 = vlaneseq
    %v3313 = vshrl.u32 %v3312, 7
    %v3314 = vsub.s32 1, %v3313
    %v3315 = vrot.slane %v3306, %v3314
    %3318 = vmatprep.subr.mxu0 0.0
    %3319 = vmatpush1.xpose.msra.mxu0 %v3280
    %3320 = vmatprep.subr.mxu0 0.0
    %3321 = vmatpush1.xpose.msra.mxu0 %v3281
    %3322 = vmatprep.subr.mxu0 0.0
    %3323 = vmatpush1.xpose.msra.mxu0 %v3282
    %3324 = vmatprep.subr.mxu0 0.0
    %3325 = vmatpush1.xpose.msra.mxu0 %v3283
    %3326 = vmatprep.subr.mxu0 0.0
    %3327 = vmatpush1.xpose.msra.mxu0 %v3284
    %3328 = vmatprep.subr.mxu0 0.0
    %3329 = vmatpush1.xpose.msra.mxu0 %v3285
    %3330 = vmatprep.subr.mxu0 0.0
    %3331 = vmatpush1.xpose.msra.mxu0 %v3286
    %3332 = vmatprep.subr.mxu0 0.0
    %3333 = vmatpush1.xpose.msra.mxu0 %v3287
    %3334 = vmatprep.subr.mxu0 0.0
    %3335 = vmatpush1.xpose.msra.mxu0 %v3288
    %3336 = vmatprep.subr.mxu0 0.0
    %3337 = vmatpush1.xpose.msra.mxu0 %v3289
    %3338 = vmatprep.subr.mxu0 0.0
    %3339 = vmatpush1.xpose.msra.mxu0 %v3290
    %3340 = vmatprep.subr.mxu0 0.0
    %3341 = vmatpush1.xpose.msra.mxu0 %v3291
    %3342 = vmatprep.subr.mxu0 0.0
    %3343 = vmatpush1.xpose.msra.mxu0 %v3292
    %3344 = vmatprep.subr.mxu0 0.0
    %3345 = vmatpush1.xpose.msra.mxu0 %v3293
    %3346 = vmatprep.subr.mxu0 0.0
    %3347 = vmatpush1.xpose.msra.mxu0 %v3294
    %3348 = vmatprep.subr.mxu0 0.0
    %3349 = vmatpush1.xpose.msra.mxu0 %v3295
    %3350 = vmatprep.subr.mxu0 0.0
    %3351 = vmatpush1.xpose.msra.mxu0 %v3296
    %3352 = vmatprep.subr.mxu0 0.0
    %3353 = vmatpush1.xpose.msra.mxu0 %v3297
    %3354 = vmatprep.subr.mxu0 0.0
    %3355 = vmatpush1.xpose.msra.mxu0 %v3298
    %3356 = vmatprep.subr.mxu0 0.0
    %3357 = vmatpush1.xpose.msra.mxu0 %v3299
    %3358 = vmatprep.subr.mxu0 0.0
    %3359 = vmatpush1.xpose.msra.mxu0 %v3300
    %3360 = vmatprep.subr.mxu0 0.0
    %3361 = vmatpush1.xpose.msra.mxu0 %v3301
    %3362 = vmatprep.subr.mxu0 0.0
    %3363 = vmatpush1.xpose.msra.mxu0 %v3302
    %3364 = vmatprep.subr.mxu0 0.0
    %3365 = vmatpush1.xpose.msra.mxu0 %v3303
    %3366 = vmatprep.subr.mxu0 0.0
    %3367 = vmatpush1.xpose.msra.mxu0 %v3304
    %3368 = vmatprep.subr.mxu0 0.0
    %3369 = vmatpush1.xpose.msra.mxu0 0.0
    %3370 = vmatprep.subr.mxu0 0.0
    %3371 = vmatpush1.xpose.msra.mxu0 0.0
    %3372 = vmatprep.subr.mxu0 0.0
    %3373 = vmatpush1.xpose.msra.mxu0 0.0
    %3374 = vmatprep.subr.mxu0 0.0
    %3375 = vmatpush1.xpose.msra.mxu0 0.0
    %3376 = vmatprep.subr.mxu0 0.0
    %3377 = vmatpush1.xpose.msra.mxu0 0.0
    %3378 = vmatprep.subr.mxu0 0.0
    %3379 = vmatpush1.xpose.msra.mxu0 0.0
    %3380 = vmatprep.subr.mxu0 0.0
    %3381 = vmatpush1.xpose.msra.mxu0 0.0
    %3382 = vmatprep.mubr.f32.mxu0 0.0
    %3383 = vmatmul.mubr.f32.gmra.mrb[0].mxu0 %v3279
    %v3384 = vpop.f32.mrb[0].mxu0
    %v3385 = vadd.f32 %v3311, %v3384
    %v3386 = vpop.f32.mrb[0].mxu0
    %v3387 = vadd.f32 %v3315, %v3386
    %3388 = vdwg.mxu0
    %vm3389 = vcmp.gt.f32.partialorder %v3385, 20.0
    %vm3390 = vcmp.gt.f32.partialorder %v3387, 20.0
    %v3391 = vmin.f32 %v3385, 20.0
    %v3392 = vmin.f32 %v3387, 20.0
    %v3393 = vmul.f32 %v3391, 1.442695
    %v3394 = vpow.pop %v3393
    %v3395 = vmul.f32 %v3392, 1.442695
    %v3396 = vpow.pop %v3395
    %v3397 = vadd.f32 %v3394, 1.0
    %v3398 = vlog2.pop %v3397
    %v3399 = vmul.f32 %v3398, 0.6931472
    %v3400 = vmul.f32 -0.5, %v3394
    %v3401 = vadd.f32 %v3400, 1.0
    %v3402 = vmul.f32 %v3401, %v3394
    %v3403 = vand.u32 2147483647, %v3394
    %vm3404 = vcmp.lt.f32.partialorder %v3403, 0.0004427343
    %v3405 = vsel %vm3404, %v3402, %v3399
    %v3406 = vadd.f32 %v3396, 1.0
    %v3407 = vlog2.pop %v3406
    %v3408 = vmul.f32 %v3407, 0.6931472
    %v3409 = vmul.f32 -0.5, %v3396
    %v3410 = vadd.f32 %v3409, 1.0
    %v3411 = vmul.f32 %v3410, %v3396
    %v3412 = vand.u32 2147483647, %v3396
    %vm3413 = vcmp.lt.f32.partialorder %v3412, 0.0004427343
    %v3414 = vsel %vm3413, %v3411, %v3408
    %v3415 = vsel %vm3389, %v3385, %v3405
    %v3416 = vsel %vm3390, %v3387, %v3414
    %v3417 = vld [vmem:[#allocation6 + $0x120] sm:$0xff]
    %v3418 = vld [vmem:[#allocation6 + $0x128] sm:$0xff]
    %v3419 = vld [vmem:[#allocation6 + $0x130] sm:$0xff]
    %v3420 = vld [vmem:[#allocation6 + $0x138] sm:$0xff]
    %v3421 = vld [vmem:[#allocation6 + $0x140] sm:$0xff]
    %v3422 = vld [vmem:[#allocation6 + $0x148] sm:$0xff]
    %v3423 = vld [vmem:[#allocation6 + $0x150] sm:$0xff]
    %v3424 = vld [vmem:[#allocation6 + $0x158] sm:$0xff]
    %v3425 = vld [vmem:[#allocation6 + $0x160] sm:$0xff]
    %v3426 = vld [vmem:[#allocation6 + $0x168] sm:$0xff]
    %v3427 = vld [vmem:[#allocation6 + $0x170] sm:$0xff]
    %v3428 = vld [vmem:[#allocation6 + $0x178] sm:$0xff]
    %v3429 = vld [vmem:[#allocation6 + $0x180] sm:$0xff]
    %v3430 = vld [vmem:[#allocation6 + $0x188] sm:$0xff]
    %v3431 = vld [vmem:[#allocation6 + $0x190] sm:$0xff]
    %v3432 = vld [vmem:[#allocation6 + $0x198] sm:$0xff]
    %v3433 = vld [vmem:[#allocation6 + $0x1a0] sm:$0xff]
    %v3434 = vld [vmem:[#allocation6 + $0x1a8] sm:$0xff]
    %v3435 = vld [vmem:[#allocation6 + $0x1b0] sm:$0xff]
    %v3436 = vld [vmem:[#allocation6 + $0x1b8] sm:$0xff]
    %v3437 = vld [vmem:[#allocation6 + $0x1c0] sm:$0xff]
    %v3438 = vld [vmem:[#allocation6 + $0x1c8] sm:$0xff]
    %v3439 = vld [vmem:[#allocation6 + $0x1d0] sm:$0xff]
    %v3440 = vld [vmem:[#allocation6 + $0x1d8] sm:$0xff]
    %v3441 = vld [vmem:[#allocation6 + $0x1e0] sm:$0xff]
    %v3442 = vld [vmem:[#allocation8 + $0x12] ss:$0 sm:$0xff]
    %vm3443 = vcmask 588800
    %v3445 = vsel %vm3443, %v3416, 0
    %3447 = vmatprep.subr.mxu0 0.0
    %3448 = vmatpush1.msra.mxu0 %v3417
    %3449 = vmatprep.subr.mxu0 0.0
    %3450 = vmatpush1.msra.mxu0 %v3418
    %3451 = vmatprep.subr.mxu0 0.0
    %3452 = vmatpush1.msra.mxu0 %v3419
    %3453 = vmatprep.subr.mxu0 0.0
    %3454 = vmatpush1.msra.mxu0 %v3420
    %3455 = vmatprep.subr.mxu0 0.0
    %3456 = vmatpush1.msra.mxu0 %v3421
    %3457 = vmatprep.subr.mxu0 0.0
    %3458 = vmatpush1.msra.mxu0 %v3422
    %3459 = vmatprep.subr.mxu0 0.0
    %3460 = vmatpush1.msra.mxu0 %v3423
    %3461 = vmatprep.subr.mxu0 0.0
    %3462 = vmatpush1.msra.mxu0 %v3424
    %3463 = vmatprep.subr.mxu0 0.0
    %3464 = vmatpush1.msra.mxu0 %v3425
    %3465 = vmatprep.subr.mxu0 0.0
    %3466 = vmatpush1.msra.mxu0 %v3426
    %3467 = vmatprep.subr.mxu0 0.0
    %3468 = vmatpush1.msra.mxu0 %v3427
    %3469 = vmatprep.subr.mxu0 0.0
    %3470 = vmatpush1.msra.mxu0 %v3428
    %3471 = vmatprep.subr.mxu0 0.0
    %3472 = vmatpush1.msra.mxu0 %v3429
    %3473 = vmatprep.subr.mxu0 0.0
    %3474 = vmatpush1.msra.mxu0 %v3430
    %3475 = vmatprep.subr.mxu0 0.0
    %3476 = vmatpush1.msra.mxu0 %v3431
    %3477 = vmatprep.subr.mxu0 0.0
    %3478 = vmatpush1.msra.mxu0 %v3432
    %3479 = vmatprep.subr.mxu0 0.0
    %3480 = vmatpush1.msra.mxu0 %v3433
    %3481 = vmatprep.subr.mxu0 0.0
    %3482 = vmatpush1.msra.mxu0 %v3434
    %3483 = vmatprep.subr.mxu0 0.0
    %3484 = vmatpush1.msra.mxu0 %v3435
    %3485 = vmatprep.subr.mxu0 0.0
    %3486 = vmatpush1.msra.mxu0 %v3436
    %3487 = vmatprep.subr.mxu0 0.0
    %3488 = vmatpush1.msra.mxu0 %v3437
    %3489 = vmatprep.subr.mxu0 0.0
    %3490 = vmatpush1.msra.mxu0 %v3438
    %3491 = vmatprep.subr.mxu0 0.0
    %3492 = vmatpush1.msra.mxu0 %v3439
    %3493 = vmatprep.subr.mxu0 0.0
    %3494 = vmatpush1.msra.mxu0 %v3440
    %3495 = vmatprep.subr.mxu0 0.0
    %3496 = vmatpush1.msra.mxu0 %v3441
    %3497 = vmatprep.subr.mxu0 0.0
    %3498 = vmatpush1.msra.mxu0 0.0
    %3499 = vmatprep.subr.mxu0 0.0
    %3500 = vmatpush1.msra.mxu0 0.0
    %3501 = vmatprep.subr.mxu0 0.0
    %3502 = vmatpush1.msra.mxu0 0.0
    %3503 = vmatprep.subr.mxu0 0.0
    %3504 = vmatpush1.msra.mxu0 0.0
    %3505 = vmatprep.subr.mxu0 0.0
    %3506 = vmatpush1.msra.mxu0 0.0
    %3507 = vmatprep.subr.mxu0 0.0
    %3508 = vmatpush1.msra.mxu0 0.0
    %3509 = vmatprep.subr.mxu0 0.0
    %3510 = vmatpush1.msra.mxu0 0.0
    %3511 = vmatprep.mubr.f32.mxu0 %v3445
    %3512 = vmatmul.mubr.f32.gmra.mrb[0].mxu0 %v3415
    %v3513 = vpop.f32.mrb[0].mxu0
    %v3514 = vadd.f32 %v3442, %v3513
    %v3515 = vpop.f32.mrb[0].mxu0
    %3516 = vdwg.mxu0
    %vm3517 = vcmp.gt.f32.partialorder %v3514, 20.0
    %v3518 = vmin.f32 %v3514, 20.0
    %v3519 = vmul.f32 %v3518, 1.442695
    %v3520 = vpow.pop %v3519
    %v3521 = vadd.f32 %v3520, 1.0
    %v3522 = vlog2.pop %v3521
    %v3523 = vmul.f32 %v3522, 0.6931472
    %v3524 = vmul.f32 -0.5, %v3520
    %v3525 = vadd.f32 %v3524, 1.0
    %v3526 = vmul.f32 %v3525, %v3520
    %v3527 = vand.u32 2147483647, %v3520
    %vm3528 = vcmp.lt.f32.partialorder %v3527, 0.0004427343
    %v3529 = vsel %vm3528, %v3526, %v3523
    %v3530 = vsel %vm3517, %v3514, %v3529
    %v3531 = vld [vmem:[#allocation6 + $0x1e8] sm:$0xff]
    %v3532 = vld [vmem:[#allocation6 + $0x1f0] sm:$0xff]
    %v3533 = vld [vmem:[#allocation6 + $0x1f8] sm:$0xff]
    %v3534 = vld [vmem:[#allocation6 + $0x200] sm:$0xff]
    %v3535 = vld [vmem:[#allocation6 + $0x208] sm:$0xff]
    %v3536 = vld [vmem:[#allocation6 + $0x210] sm:$0xff]
    %v3537 = vld [vmem:[#allocation6 + $0x218] sm:$0xff]
    %v3538 = vld [vmem:[#allocation6 + $0x220] sm:$0xff]
    %v3539 = vld [vmem:[#allocation6 + $0x228] sm:$0xff]
    %v3540 = vld [vmem:[#allocation6 + $0x230] sm:$0xff]
    %v3541 = vld [vmem:[#allocation6 + $0x238] sm:$0xff]
    %v3542 = vld [vmem:[#allocation6 + $0x240] sm:$0xff]
    %v3543 = vld [vmem:[#allocation6 + $0x248] sm:$0xf]
    %v3544 = vld [vmem:[#allocation8 + $0x13] ss:$0 sm:$0xff]
    %vm3545 = vcmask 818176
    %v3547 = vsel %vm3545, %v3530, 0
    %v3550 = vsel %vm283, %v3543, 0
    %3552 = vmatprep.subr.mxu0 0.0
    %3553 = vmatpush1.msra.mxu0 %v3531
    %3554 = vmatprep.subr.mxu0 0.0
    %3555 = vmatpush1.msra.mxu0 %v3532
    %3556 = vmatprep.subr.mxu0 0.0
    %3557 = vmatpush1.msra.mxu0 %v3533
    %3558 = vmatprep.subr.mxu0 0.0
    %3559 = vmatpush1.msra.mxu0 %v3534
    %3560 = vmatprep.subr.mxu0 0.0
    %3561 = vmatpush1.msra.mxu0 %v3535
    %3562 = vmatprep.subr.mxu0 0.0
    %3563 = vmatpush1.msra.mxu0 %v3536
    %3564 = vmatprep.subr.mxu0 0.0
    %3565 = vmatpush1.msra.mxu0 %v3537
    %3566 = vmatprep.subr.mxu0 0.0
    %3567 = vmatpush1.msra.mxu0 %v3538
    %3568 = vmatprep.subr.mxu0 0.0
    %3569 = vmatpush1.msra.mxu0 %v3539
    %3570 = vmatprep.subr.mxu0 0.0
    %3571 = vmatpush1.msra.mxu0 %v3540
    %3572 = vmatprep.subr.mxu0 0.0
    %3573 = vmatpush1.msra.mxu0 %v3541
    %3574 = vmatprep.subr.mxu0 0.0
    %3575 = vmatpush1.msra.mxu0 %v3542
    %3576 = vmatprep.subr.mxu0 0.0
    %3577 = vmatpush1.msra.mxu0 %v3550
    %3578 = vmatprep.subr.mxu0 0.0
    %3579 = vmatpush1.msra.mxu0 0.0
    %3580 = vmatprep.subr.mxu0 0.0
    %3581 = vmatpush1.msra.mxu0 0.0
    %3582 = vmatprep.subr.mxu0 0.0
    %3583 = vmatpush1.msra.mxu0 0.0
    %3584 = vmatprep.subr.mxu0 0.0
    %3585 = vmatpush1.msra.mxu0 0.0
    %3586 = vmatprep.subr.mxu0 0.0
    %3587 = vmatpush1.msra.mxu0 0.0
    %3588 = vmatprep.subr.mxu0 0.0
    %3589 = vmatpush1.msra.mxu0 0.0
    %3590 = vmatprep.subr.mxu0 0.0
    %3591 = vmatpush1.msra.mxu0 0.0
    %3592 = vmatprep.subr.mxu0 0.0
    %3593 = vmatpush1.msra.mxu0 0.0
    %3594 = vmatprep.subr.mxu0 0.0
    %3595 = vmatpush1.msra.mxu0 0.0
    %3596 = vmatprep.subr.mxu0 0.0
    %3597 = vmatpush1.msra.mxu0 0.0
    %3598 = vmatprep.subr.mxu0 0.0
    %3599 = vmatpush1.msra.mxu0 0.0
    %3600 = vmatprep.subr.mxu0 0.0
    %3601 = vmatpush1.msra.mxu0 0.0
    %3602 = vmatprep.subr.mxu0 0.0
    %3603 = vmatpush1.msra.mxu0 0.0
    %3604 = vmatprep.subr.mxu0 0.0
    %3605 = vmatpush1.msra.mxu0 0.0
    %3606 = vmatprep.subr.mxu0 0.0
    %3607 = vmatpush1.msra.mxu0 0.0
    %3608 = vmatprep.subr.mxu0 0.0
    %3609 = vmatpush1.msra.mxu0 0.0
    %3610 = vmatprep.subr.mxu0 0.0
    %3611 = vmatpush1.msra.mxu0 0.0
    %3612 = vmatprep.subr.mxu0 0.0
    %3613 = vmatpush1.msra.mxu0 0.0
    %3614 = vmatprep.subr.mxu0 0.0
    %3615 = vmatpush1.msra.mxu0 0.0
    %3616 = vmatprep.mubr.f32.mxu0 0.0
    %3617 = vmatmul.mubr.f32.gmra.mrb[0].mxu0 %v3547
    %v3618 = vpop.f32.mrb[0].mxu0
    %v3619 = vadd.f32 %v3544, %v3618
    %v3620 = vpop.f32.mrb[0].mxu0
    %3621 = vdwg.mxu0
    %vm3622 = vcmask 123904
    %3623 = vst.msk [vmem:[#allocation10] sm:$0x3] %vm3622, %v3619
    %3625 = vrot.lane.b32.xlu0 %v3619, 112
    %v3626 = vpop.permute.xlu0 %3625
    %3628 = vst.msk [vmem:[#allocation12] sm:$0x3] %vm3622, %v3626
    %v3629 = vmul.f32 %v3619, 0.5
    %v3630 = vmul.f32 %v3629, 1.442695
    %v3631 = vpow.pop %v3630
    %v3632 = vld [vmem:[%s1] sm:$0x3]
    %3634 = vrot.lane.b32.xlu0 %v3632, 16
    %v3635 = vpop.permute.xlu0 %3634
    %v3637 = vmul.f32 %v3631, %v3635
    %3639 = vrot.lane.b32.xlu0 %v3637, 112
    %v3640 = vpop.permute.xlu0 %3639
    %v3642 = vadd.f32 %v3619, %v3640
    %v3643 = vld [vmem:[#allocation6 + $0x250] sm:$0xff]
    %v3644 = vld [vmem:[#allocation6 + $0x258] sm:$0xff]
    %v3645 = vld [vmem:[#allocation8 + $0x14] ss:$0 sm:$0xff]
    %v3647 = vsel %vm1838, %v3642, 0
    %3649 = vmatprep.subr.mxu0 0.0
    %3650 = vmatpush1.msra.mxu0 %v3643
    %3651 = vmatprep.subr.mxu0 0.0
    %3652 = vmatpush1.msra.mxu0 %v3644
    %3653 = vmatprep.subr.mxu0 0.0
    %3654 = vmatpush1.msra.mxu0 0.0
    %3655 = vmatprep.subr.mxu0 0.0
    %3656 = vmatpush1.msra.mxu0 0.0
    %3657 = vmatprep.subr.mxu0 0.0
    %3658 = vmatpush1.msra.mxu0 0.0
    %3659 = vmatprep.subr.mxu0 0.0
    %3660 = vmatpush1.msra.mxu0 0.0
    %3661 = vmatprep.subr.mxu0 0.0
    %3662 = vmatpush1.msra.mxu0 0.0
    %3663 = vmatprep.subr.mxu0 0.0
    %3664 = vmatpush1.msra.mxu0 0.0
    %3665 = vmatprep.subr.mxu0 0.0
    %3666 = vmatpush1.msra.mxu0 0.0
    %3667 = vmatprep.subr.mxu0 0.0
    %3668 = vmatpush1.msra.mxu0 0.0
    %3669 = vmatprep.subr.mxu0 0.0
    %3670 = vmatpush1.msra.mxu0 0.0
    %3671 = vmatprep.subr.mxu0 0.0
    %3672 = vmatpush1.msra.mxu0 0.0
    %3673 = vmatprep.subr.mxu0 0.0
    %3674 = vmatpush1.msra.mxu0 0.0
    %3675 = vmatprep.subr.mxu0 0.0
    %3676 = vmatpush1.msra.mxu0 0.0
    %3677 = vmatprep.subr.mxu0 0.0
    %3678 = vmatpush1.msra.mxu0 0.0
    %3679 = vmatprep.subr.mxu0 0.0
    %3680 = vmatpush1.msra.mxu0 0.0
    %3681 = vmatprep.subr.mxu0 0.0
    %3682 = vmatpush1.msra.mxu0 0.0
    %3683 = vmatprep.subr.mxu0 0.0
    %3684 = vmatpush1.msra.mxu0 0.0
    %3685 = vmatprep.subr.mxu0 0.0
    %3686 = vmatpush1.msra.mxu0 0.0
    %3687 = vmatprep.subr.mxu0 0.0
    %3688 = vmatpush1.msra.mxu0 0.0
    %3689 = vmatprep.subr.mxu0 0.0
    %3690 = vmatpush1.msra.mxu0 0.0
    %3691 = vmatprep.subr.mxu0 0.0
    %3692 = vmatpush1.msra.mxu0 0.0
    %3693 = vmatprep.subr.mxu0 0.0
    %3694 = vmatpush1.msra.mxu0 0.0
    %3695 = vmatprep.subr.mxu0 0.0
    %3696 = vmatpush1.msra.mxu0 0.0
    %3697 = vmatprep.subr.mxu0 0.0
    %3698 = vmatpush1.msra.mxu0 0.0
    %3699 = vmatprep.subr.mxu0 0.0
    %3700 = vmatpush1.msra.mxu0 0.0
    %3701 = vmatprep.subr.mxu0 0.0
    %3702 = vmatpush1.msra.mxu0 0.0
    %3703 = vmatprep.subr.mxu0 0.0
    %3704 = vmatpush1.msra.mxu0 0.0
    %3705 = vmatprep.subr.mxu0 0.0
    %3706 = vmatpush1.msra.mxu0 0.0
    %3707 = vmatprep.subr.mxu0 0.0
    %3708 = vmatpush1.msra.mxu0 0.0
    %3709 = vmatprep.subr.mxu0 0.0
    %3710 = vmatpush1.msra.mxu0 0.0
    %3711 = vmatprep.subr.mxu0 0.0
    %3712 = vmatpush1.msra.mxu0 0.0
    %3713 = vmatprep.mubr.f32.mxu0 0.0
    %3714 = vmatmul.mubr.f32.gmra.mrb[0].mxu0 %v3647
    %v3715 = vpop.f32.mrb[0].mxu0
    %v3716 = vadd.f32 %v3645, %v3715
    %v3717 = vpop.f32.mrb[0].mxu0
    %3718 = vdwg.mxu0
    %v3721 = vunpack.c.l.s4 1966171168
    %v3722 = vunpack.c.0.s8 %v3721
    %v3723 = vlaneseq
    %v3724 = vshrl.u32 %v3723, 7
    %v3725 = vsub.s32 %v3722, %v3724
    %v3726 = vrot.slane %v3716, %v3725
    %v3727 = vcombine.high %v3726, %v3726
    %v3729 = vunpack.c.l.s4 1966171168
    %v3730 = vunpack.c.0.s8 %v3729
    %v3731 = vlaneseq
    %v3732 = vshrl.u32 %v3731, 7
    %v3733 = vsub.s32 %v3730, %v3732
    %v3734 = vrot.slane %v3726, %v3733
    %v3736 = vunpack.c.l.s4 1966171168
    %v3737 = vunpack.c.0.s8 %v3736
    %v3738 = vlaneseq
    %v3739 = vshrl.u32 %v3738, 7
    %v3740 = vsub.s32 %v3737, %v3739
    %v3741 = vrot.slane %v3727, %v3740
    %v3744 = vlaneseq
    %v3745 = vshrl.u32 %v3744, 7
    %v3746 = vsub.s32 0, %v3745
    %v3747 = vrot.slane %v3734, %v3746
    %v3748 = vlaneseq
    %v3749 = vshrl.u32 %v3748, 7
    %v3750 = vsub.s32 0, %v3749
    %v3751 = vrot.slane %v3741, %v3750
    %3752 = vrot.lane.b32.xlu0 %v3747, 96
    %v3753 = vpop.permute.xlu0 %3752
    %3754 = vrot.lane.b32.xlu0 %v3751, 96
    %v3755 = vpop.permute.xlu0 %3754
    %3758 = vrot.lane.b32.xlu0 %v3747, 64
    %v3759 = vpop.permute.xlu0 %3758
    %3760 = vrot.lane.b32.xlu0 %v3751, 64
    %v3761 = vpop.permute.xlu0 %3760
    %3764 = vrot.lane.b32.xlu0 %v3747, 32
    %v3765 = vpop.permute.xlu0 %3764
    %3766 = vrot.lane.b32.xlu0 %v3751, 32
    %v3767 = vpop.permute.xlu0 %3766
    %v3770 = vsel %vm146, %v3734, %v3753
    %v3771 = vsel %vm146, %v3741, %v3755
    %vm3772 = vcmask 1041408
    %v3773 = vsel %vm3772, %v3770, %v3759
    %v3774 = vsel %vm3772, %v3771, %v3761
    %vm3775 = vcmask 1042432
    %v3776 = vsel %vm3775, %v3773, %v3765
    %v3777 = vsel %vm3775, %v3774, %v3767
    %v3778 = vld [vmem:[#allocation6 + $0x260] sm:$0xff]
    %v3779 = vld [vmem:[#allocation6 + $0x268] sm:$0xff]
    %v3780 = vld [vmem:[#allocation6 + $0x270] sm:$0xff]
    %v3781 = vld [vmem:[#allocation6 + $0x278] sm:$0xff]
    %v3782 = vld [vmem:[#allocation6 + $0x280] sm:$0xff]
    %v3783 = vld [vmem:[#allocation6 + $0x288] sm:$0xff]
    %v3784 = vld [vmem:[#allocation6 + $0x290] sm:$0xff]
    %v3785 = vld [vmem:[#allocation6 + $0x298] sm:$0xff]
    %v3786 = vld [vmem:[#allocation6 + $0x2a0] sm:$0xff]
    %v3787 = vld [vmem:[#allocation6 + $0x2a8] sm:$0xff]
    %v3788 = vld [vmem:[#allocation6 + $0x2b0] sm:$0xff]
    %v3789 = vld [vmem:[#allocation6 + $0x2b8] sm:$0xff]
    %v3790 = vld [vmem:[#allocation8 + $0x15] ss:$0 sm:$0xff]
    %v3793 = vrot.slane %v3776, 7
    %v3794 = vrot.slane %v3777, 7
    %v3797 = vsel %vm146, 0.0, %v3793
    %v3798 = vsel %vm146, 0.0, %v3794
    %v3799 = vrot.slane %v3776, 1
    %v3800 = vrot.slane %v3777, 1
    %v3803 = vsel %vm3775, %v3799, 0.0
    %v3804 = vsel %vm3775, %v3800, 0.0
    %3805 = vrot.lane.b32.xlu0 %v3776, 32
    %v3806 = vpop.permute.xlu0 %3805
    %3807 = vrot.lane.b32.xlu0 %v3777, 32
    %v3808 = vpop.permute.xlu0 %3807
    %3813 = vrot.lane.b32.xlu0 %v3803, 64
    %v3814 = vpop.permute.xlu0 %3813
    %3815 = vrot.lane.b32.xlu0 %v3804, 64
    %v3816 = vpop.permute.xlu0 %3815
    %v3819 = vsel %vm2741, %v3797, %v3806
    %v3820 = vsel %vm2741, %v3798, %v3808
    %v3821 = vsel %vm3276, %v3819, %v3814
    %v3822 = vsel %vm3276, %v3820, %v3816
    %v3825 = vcombine.low %v3821, %v3822
    %v3826 = vsel %vm3278, %v3825, 0
    %3828 = vmatprep.subr.mxu0 0.0
    %3829 = vmatpush1.msra.mxu0 %v3778
    %3830 = vmatprep.subr.mxu0 0.0
    %3831 = vmatpush1.msra.mxu0 %v3779
    %3832 = vmatprep.subr.mxu0 0.0
    %3833 = vmatpush1.msra.mxu0 %v3780
    %3834 = vmatprep.subr.mxu0 0.0
    %3835 = vmatpush1.msra.mxu0 %v3781
    %3836 = vmatprep.subr.mxu0 0.0
    %3837 = vmatpush1.msra.mxu0 %v3782
    %3838 = vmatprep.subr.mxu0 0.0
    %3839 = vmatpush1.msra.mxu0 %v3783
    %3840 = vmatprep.subr.mxu0 0.0
    %3841 = vmatpush1.msra.mxu0 %v3784
    %3842 = vmatprep.subr.mxu0 0.0
    %3843 = vmatpush1.msra.mxu0 %v3785
    %3844 = vmatprep.subr.mxu0 0.0
    %3845 = vmatpush1.msra.mxu0 %v3786
    %3846 = vmatprep.subr.mxu0 0.0
    %3847 = vmatpush1.msra.mxu0 %v3787
    %3848 = vmatprep.subr.mxu0 0.0
    %3849 = vmatpush1.msra.mxu0 %v3788
    %3850 = vmatprep.subr.mxu0 0.0
    %3851 = vmatpush1.msra.mxu0 %v3789
    %3852 = vmatprep.subr.mxu0 0.0
    %3853 = vmatpush1.msra.mxu0 0.0
    %3854 = vmatprep.subr.mxu0 0.0
    %3855 = vmatpush1.msra.mxu0 0.0
    %3856 = vmatprep.subr.mxu0 0.0
    %3857 = vmatpush1.msra.mxu0 0.0
    %3858 = vmatprep.subr.mxu0 0.0
    %3859 = vmatpush1.msra.mxu0 0.0
    %3860 = vmatprep.subr.mxu0 0.0
    %3861 = vmatpush1.msra.mxu0 0.0
    %3862 = vmatprep.subr.mxu0 0.0
    %3863 = vmatpush1.msra.mxu0 0.0
    %3864 = vmatprep.subr.mxu0 0.0
    %3865 = vmatpush1.msra.mxu0 0.0
    %3866 = vmatprep.subr.mxu0 0.0
    %3867 = vmatpush1.msra.mxu0 0.0
    %3868 = vmatprep.subr.mxu0 0.0
    %3869 = vmatpush1.msra.mxu0 0.0
    %3870 = vmatprep.subr.mxu0 0.0
    %3871 = vmatpush1.msra.mxu0 0.0
    %3872 = vmatprep.subr.mxu0 0.0
    %3873 = vmatpush1.msra.mxu0 0.0
    %3874 = vmatprep.subr.mxu0 0.0
    %3875 = vmatpush1.msra.mxu0 0.0
    %3876 = vmatprep.subr.mxu0 0.0
    %3877 = vmatpush1.msra.mxu0 0.0
    %3878 = vmatprep.subr.mxu0 0.0
    %3879 = vmatpush1.msra.mxu0 0.0
    %3880 = vmatprep.subr.mxu0 0.0
    %3881 = vmatpush1.msra.mxu0 0.0
    %3882 = vmatprep.subr.mxu0 0.0
    %3883 = vmatpush1.msra.mxu0 0.0
    %3884 = vmatprep.subr.mxu0 0.0
    %3885 = vmatpush1.msra.mxu0 0.0
    %3886 = vmatprep.subr.mxu0 0.0
    %3887 = vmatpush1.msra.mxu0 0.0
    %3888 = vmatprep.subr.mxu0 0.0
    %3889 = vmatpush1.msra.mxu0 0.0
    %3890 = vmatprep.subr.mxu0 0.0
    %3891 = vmatpush1.msra.mxu0 0.0
    %3892 = vmatprep.mubr.f32.mxu0 0.0
    %3893 = vmatmul.mubr.f32.gmra.mrb[0].mxu0 %v3826
    %v3894 = vpop.f32.mrb[0].mxu0
    %v3895 = vadd.f32 %v3790, %v3894
    %v3896 = vpop.f32.mrb[0].mxu0
    %3897 = vdwg.mxu0
    %v3899 = vcombine.high %v3895, %v3895
    %v3901 = vunpack.c.l.s4 1966171168
    %v3902 = vunpack.c.0.s8 %v3901
    %v3903 = vlaneseq
    %v3904 = vshrl.u32 %v3903, 7
    %v3905 = vsub.s32 %v3902, %v3904
    %v3906 = vrot.slane %v3895, %v3905
    %v3908 = vunpack.c.l.s4 1966171168
    %v3909 = vunpack.c.0.s8 %v3908
    %v3910 = vlaneseq
    %v3911 = vshrl.u32 %v3910, 7
    %v3912 = vsub.s32 %v3909, %v3911
    %v3913 = vrot.slane %v3899, %v3912
    %v3914 = vcombine.high %v3906, %v3906
    %v3915 = vcombine.high %v3913, %v3913
    %v3917 = vunpack.c.l.s4 1966171168
    %v3918 = vunpack.c.0.s8 %v3917
    %v3919 = vlaneseq
    %v3920 = vshrl.u32 %v3919, 7
    %v3921 = vsub.s32 %v3918, %v3920
    %v3922 = vrot.slane %v3906, %v3921
    %v3924 = vunpack.c.l.s4 1966171168
    %v3925 = vunpack.c.0.s8 %v3924
    %v3926 = vlaneseq
    %v3927 = vshrl.u32 %v3926, 7
    %v3928 = vsub.s32 %v3925, %v3927
    %v3929 = vrot.slane %v3913, %v3928
    %v3931 = vunpack.c.l.s4 1966171168
    %v3932 = vunpack.c.0.s8 %v3931
    %v3933 = vlaneseq
    %v3934 = vshrl.u32 %v3933, 7
    %v3935 = vsub.s32 %v3932, %v3934
    %v3936 = vrot.slane %v3914, %v3935
    %v3938 = vunpack.c.l.s4 1966171168
    %v3939 = vunpack.c.0.s8 %v3938
    %v3940 = vlaneseq
    %v3941 = vshrl.u32 %v3940, 7
    %v3942 = vsub.s32 %v3939, %v3941
    %v3943 = vrot.slane %v3915, %v3942
    %v3944 = vcombine.high %v3922, %v3922
    %v3945 = vcombine.high %v3929, %v3929
    %v3946 = vcombine.high %v3936, %v3936
    %v3947 = vcombine.high %v3943, %v3943
    %vm3956 = vcmask 122880
    %3957 = vst.msk [vmem:[#allocation2] sm:$0x1] %vm3956, %v3922
    %3958 = vst.msk [vmem:[#allocation2 + $0x2] sm:$0x1] %vm3956, %v3936
    %3959 = vst.msk [vmem:[#allocation2 + $0x4] sm:$0x1] %vm3956, %v3944
    %3960 = vst.msk [vmem:[#allocation2 + $0x6] sm:$0x1] %vm3956, %v3946
    %3961 = vst.msk [vmem:[#allocation2 + $0x8] sm:$0x1] %vm3956, %v3929
    %3962 = vst.msk [vmem:[#allocation2 + $0xa] sm:$0x1] %vm3956, %v3943
    %3963 = vst.msk [vmem:[#allocation2 + $0xc] sm:$0x1] %vm3956, %v3945
    %3964 = vst.msk [vmem:[#allocation2 + $0xe] sm:$0x1] %vm3956, %v3947
    %v3965 = vlaneseq
    %v3966 = vshrl.u32 %v3965, 7
    %v3967 = vsub.s32 0, %v3966
    %v3968 = vrot.slane %v3922, %v3967
    %v3969 = vlaneseq
    %v3970 = vshrl.u32 %v3969, 7
    %v3971 = vsub.s32 0, %v3970
    %v3972 = vrot.slane %v3936, %v3971
    %v3973 = vlaneseq
    %v3974 = vshrl.u32 %v3973, 7
    %v3975 = vsub.s32 0, %v3974
    %v3976 = vrot.slane %v3944, %v3975
    %v3977 = vlaneseq
    %v3978 = vshrl.u32 %v3977, 7
    %v3979 = vsub.s32 0, %v3978
    %v3980 = vrot.slane %v3946, %v3979
    %v3981 = vlaneseq
    %v3982 = vshrl.u32 %v3981, 7
    %v3983 = vsub.s32 0, %v3982
    %v3984 = vrot.slane %v3929, %v3983
    %v3985 = vlaneseq
    %v3986 = vshrl.u32 %v3985, 7
    %v3987 = vsub.s32 0, %v3986
    %v3988 = vrot.slane %v3943, %v3987
    %v3989 = vlaneseq
    %v3990 = vshrl.u32 %v3989, 7
    %v3991 = vsub.s32 0, %v3990
    %v3992 = vrot.slane %v3945, %v3991
    %v3993 = vlaneseq
    %v3994 = vshrl.u32 %v3993, 7
    %v3995 = vsub.s32 0, %v3994
    %v3996 = vrot.slane %v3947, %v3995
    %3997 = vrot.lane.b32.xlu0 %v3968, 112
    %v3998 = vpop.permute.xlu0 %3997
    %3999 = vrot.lane.b32.xlu0 %v3972, 112
    %v4000 = vpop.permute.xlu0 %3999
    %4001 = vrot.lane.b32.xlu0 %v3976, 112
    %v4002 = vpop.permute.xlu0 %4001
    %4003 = vrot.lane.b32.xlu0 %v3980, 112
    %v4004 = vpop.permute.xlu0 %4003
    %4005 = vrot.lane.b32.xlu0 %v3984, 112
    %v4006 = vpop.permute.xlu0 %4005
    %4007 = vrot.lane.b32.xlu0 %v3988, 112
    %v4008 = vpop.permute.xlu0 %4007
    %4009 = vrot.lane.b32.xlu0 %v3992, 112
    %v4010 = vpop.permute.xlu0 %4009
    %4011 = vrot.lane.b32.xlu0 %v3996, 112
    %v4012 = vpop.permute.xlu0 %4011
    %4021 = vst.msk [vmem:[#allocation2 + $0x1] sm:$0x1] %vm3956, %v3998
    %4022 = vst.msk [vmem:[#allocation2 + $0x3] sm:$0x1] %vm3956, %v4000
    %4023 = vst.msk [vmem:[#allocation2 + $0x5] sm:$0x1] %vm3956, %v4002
    %4024 = vst.msk [vmem:[#allocation2 + $0x7] sm:$0x1] %vm3956, %v4004
    %4025 = vst.msk [vmem:[#allocation2 + $0x9] sm:$0x1] %vm3956, %v4006
    %4026 = vst.msk [vmem:[#allocation2 + $0xb] sm:$0x1] %vm3956, %v4008
    %4027 = vst.msk [vmem:[#allocation2 + $0xd] sm:$0x1] %vm3956, %v4010
    %4028 = vst.msk [vmem:[#allocation2 + $0xf] sm:$0x1] %vm3956, %v4012
    %v4029 = vld [vmem:[#allocation2] sm:$0x3]
    %v4030 = vld [vmem:[#allocation2 + $0x2] sm:$0x3]
    %v4031 = vld [vmem:[#allocation2 + $0x4] sm:$0x3]
    %v4032 = vld [vmem:[#allocation2 + $0x6] sm:$0x3]
    %v4033 = vld [vmem:[#allocation2 + $0x8] sm:$0x3]
    %v4034 = vld [vmem:[#allocation2 + $0xa] sm:$0x3]
    %v4035 = vld [vmem:[#allocation2 + $0xc] sm:$0x3]
    %v4036 = vld [vmem:[#allocation2 + $0xe] sm:$0x3]
    %v4037 = vmax.f32 %v4029, 0.0
    %v4038 = vmax.f32 %v4030, 0.0
    %v4039 = vmax.f32 %v4031, 0.0
    %v4040 = vmax.f32 %v4032, 0.0
    %v4041 = vmax.f32 %v4033, 0.0
    %v4042 = vmax.f32 %v4034, 0.0
    %v4043 = vmax.f32 %v4035, 0.0
    %v4044 = vmax.f32 %v4036, 0.0
    %v4045 = vld [vmem:[#allocation8 + $0x16] ss:$0 sm:$0xff]
    %v4046 = vld [vmem:[#allocation8 + $0x17] ss:$0 sm:$0xff]
    %v4055 = vcombine.low %v4037, %v4038
    %v4056 = vcombine.low %v4039, %v4040
    %v4058 = vunpack.c.l.s4 1983009808
    %v4059 = vunpack.c.0.s8 %v4058
    %v4060 = vlaneseq
    %v4061 = vshrl.u32 %v4060, 7
    %v4062 = vsub.s32 %v4059, %v4061
    %v4063 = vrot.slane %v4055, %v4062
    %v4065 = vunpack.c.l.s4 1983009808
    %v4066 = vunpack.c.0.s8 %v4065
    %v4067 = vlaneseq
    %v4068 = vshrl.u32 %v4067, 7
    %v4069 = vsub.s32 %v4066, %v4068
    %v4070 = vrot.slane %v4056, %v4069
    %v4071 = vcombine.low %v4063, %v4070
    %v4072 = vcombine.low %v4041, %v4042
    %v4073 = vcombine.low %v4043, %v4044
    %v4075 = vunpack.c.l.s4 1983009808
    %v4076 = vunpack.c.0.s8 %v4075
    %v4077 = vlaneseq
    %v4078 = vshrl.u32 %v4077, 7
    %v4079 = vsub.s32 %v4076, %v4078
    %v4080 = vrot.slane %v4072, %v4079
    %v4082 = vunpack.c.l.s4 1983009808
    %v4083 = vunpack.c.0.s8 %v4082
    %v4084 = vlaneseq
    %v4085 = vshrl.u32 %v4084, 7
    %v4086 = vsub.s32 %v4083, %v4085
    %v4087 = vrot.slane %v4073, %v4086
    %v4088 = vcombine.low %v4080, %v4087
    %v4091 = vsel %vm1838, %v4071, 0.0
    %v4092 = vsel %vm1838, %v4088, 0.0
    %v4093 = vadd.f32 %v4091, %v4092
    %v4094 = vrot.slane %v4093, 4
    %v4095 = vadd.f32 %v4093, %v4094
    %v4096 = vrot.slane %v4095, 2
    %v4097 = vadd.f32 %v4095, %v4096
    %v4098 = vrot.slane %v4097, 1
    %v4099 = vadd.f32 %v4097, %v4098
    %v4100 = vmul.f32 %v4099, %v2270
    %v4102 = vcombine.high %v4100, %v4100
    %v4104 = vunpack.c.l.s4 1983009808
    %v4105 = vunpack.c.0.s8 %v4104
    %v4106 = vlaneseq
    %v4107 = vshrl.u32 %v4106, 7
    %v4108 = vsub.s32 %v4105, %v4107
    %v4109 = vrot.slane %v4100, %v4108
    %v4111 = vunpack.c.l.s4 1983009808
    %v4112 = vunpack.c.0.s8 %v4111
    %v4113 = vlaneseq
    %v4114 = vshrl.u32 %v4113, 7
    %v4115 = vsub.s32 %v4112, %v4114
    %v4116 = vrot.slane %v4102, %v4115
    %v4117 = vcombine.high %v4109, %v4109
    %v4118 = vcombine.high %v4116, %v4116
    %v4123 = vsub.f32 %v4037, %v4109
    %v4124 = vsub.f32 %v4038, %v4117
    %v4125 = vsub.f32 %v4039, %v4116
    %v4126 = vsub.f32 %v4040, %v4118
    %v4127 = vsub.f32 %v4041, %v4109
    %v4128 = vsub.f32 %v4042, %v4117
    %v4129 = vsub.f32 %v4043, %v4116
    %v4130 = vsub.f32 %v4044, %v4118
    %v4131 = vmul.f32 %v4123, %v4123
    %v4132 = vmul.f32 %v4124, %v4124
    %v4133 = vmul.f32 %v4125, %v4125
    %v4134 = vmul.f32 %v4126, %v4126
    %v4135 = vmul.f32 %v4127, %v4127
    %v4136 = vmul.f32 %v4128, %v4128
    %v4137 = vmul.f32 %v4129, %v4129
    %v4138 = vmul.f32 %v4130, %v4130
    %v4147 = vcombine.low %v4131, %v4132
    %v4148 = vcombine.low %v4133, %v4134
    %v4150 = vunpack.c.l.s4 1983009808
    %v4151 = vunpack.c.0.s8 %v4150
    %v4152 = vlaneseq
    %v4153 = vshrl.u32 %v4152, 7
    %v4154 = vsub.s32 %v4151, %v4153
    %v4155 = vrot.slane %v4147, %v4154
    %v4157 = vunpack.c.l.s4 1983009808
    %v4158 = vunpack.c.0.s8 %v4157
    %v4159 = vlaneseq
    %v4160 = vshrl.u32 %v4159, 7
    %v4161 = vsub.s32 %v4158, %v4160
    %v4162 = vrot.slane %v4148, %v4161
    %v4163 = vcombine.low %v4155, %v4162
    %v4164 = vcombine.low %v4135, %v4136
    %v4165 = vcombine.low %v4137, %v4138
    %v4167 = vunpack.c.l.s4 1983009808
    %v4168 = vunpack.c.0.s8 %v4167
    %v4169 = vlaneseq
    %v4170 = vshrl.u32 %v4169, 7
    %v4171 = vsub.s32 %v4168, %v4170
    %v4172 = vrot.slane %v4164, %v4171
    %v4174 = vunpack.c.l.s4 1983009808
    %v4175 = vunpack.c.0.s8 %v4174
    %v4176 = vlaneseq
    %v4177 = vshrl.u32 %v4176, 7
    %v4178 = vsub.s32 %v4175, %v4177
    %v4179 = vrot.slane %v4165, %v4178
    %v4180 = vcombine.low %v4172, %v4179
    %v4183 = vsel %vm1838, %v4163, 0.0
    %v4184 = vsel %vm1838, %v4180, 0.0
    %v4185 = vadd.f32 %v4183, %v4184
    %v4186 = vrot.slane %v4185, 4
    %v4187 = vadd.f32 %v4185, %v4186
    %v4188 = vrot.slane %v4187, 2
    %v4189 = vadd.f32 %v4187, %v4188
    %v4190 = vrot.slane %v4189, 1
    %v4191 = vadd.f32 %v4189, %v4190
    %v4192 = vmul.f32 %v4191, %v2270
    %v4193 = vadd.f32 %v4192, 1e-05
    %v4194 = vrsqrt.pop %v4193
    %v4196 = vcombine.high %v4194, %v4194
    %v4198 = vunpack.c.l.s4 1983009808
    %v4199 = vunpack.c.0.s8 %v4198
    %v4200 = vlaneseq
    %v4201 = vshrl.u32 %v4200, 7
    %v4202 = vsub.s32 %v4199, %v4201
    %v4203 = vrot.slane %v4194, %v4202
    %v4205 = vunpack.c.l.s4 1983009808
    %v4206 = vunpack.c.0.s8 %v4205
    %v4207 = vlaneseq
    %v4208 = vshrl.u32 %v4207, 7
    %v4209 = vsub.s32 %v4206, %v4208
    %v4210 = vrot.slane %v4196, %v4209
    %v4211 = vcombine.high %v4203, %v4203
    %v4212 = vcombine.high %v4210, %v4210
    %v4217 = vmul.f32 %v4123, %v4203
    %v4218 = vmul.f32 %v4124, %v4211
    %v4219 = vmul.f32 %v4125, %v4210
    %v4220 = vmul.f32 %v4126, %v4212
    %v4221 = vmul.f32 %v4127, %v4203
    %v4222 = vmul.f32 %v4128, %v4211
    %v4223 = vmul.f32 %v4129, %v4210
    %v4224 = vmul.f32 %v4130, %v4212
    %v4226 = vcombine.high %v4045, %v4045
    %v4228 = vunpack.c.l.s4 1983009808
    %v4229 = vunpack.c.0.s8 %v4228
    %v4230 = vlaneseq
    %v4231 = vshrl.u32 %v4230, 7
    %v4232 = vsub.s32 %v4229, %v4231
    %v4233 = vrot.slane %v4045, %v4232
    %v4235 = vunpack.c.l.s4 1983009808
    %v4236 = vunpack.c.0.s8 %v4235
    %v4237 = vlaneseq
    %v4238 = vshrl.u32 %v4237, 7
    %v4239 = vsub.s32 %v4236, %v4238
    %v4240 = vrot.slane %v4226, %v4239
    %v4241 = vcombine.high %v4233, %v4233
    %v4242 = vcombine.high %v4240, %v4240
    %v4247 = vmul.f32 %v4217, %v4233
    %v4248 = vmul.f32 %v4218, %v4241
    %v4249 = vmul.f32 %v4219, %v4240
    %v4250 = vmul.f32 %v4220, %v4242
    %v4251 = vmul.f32 %v4221, %v4233
    %v4252 = vmul.f32 %v4222, %v4241
    %v4253 = vmul.f32 %v4223, %v4240
    %v4254 = vmul.f32 %v4224, %v4242
    %v4256 = vcombine.high %v4046, %v4046
    %v4258 = vunpack.c.l.s4 1983009808
    %v4259 = vunpack.c.0.s8 %v4258
    %v4260 = vlaneseq
    %v4261 = vshrl.u32 %v4260, 7
    %v4262 = vsub.s32 %v4259, %v4261
    %v4263 = vrot.slane %v4046, %v4262
    %v4265 = vunpack.c.l.s4 1983009808
    %v4266 = vunpack.c.0.s8 %v4265
    %v4267 = vlaneseq
    %v4268 = vshrl.u32 %v4267, 7
    %v4269 = vsub.s32 %v4266, %v4268
    %v4270 = vrot.slane %v4256, %v4269
    %v4271 = vcombine.high %v4263, %v4263
    %v4272 = vcombine.high %v4270, %v4270
    %v4277 = vadd.f32 %v4247, %v4263
    %v4278 = vadd.f32 %v4248, %v4271
    %v4279 = vadd.f32 %v4249, %v4270
    %v4280 = vadd.f32 %v4250, %v4272
    %v4281 = vadd.f32 %v4251, %v4263
    %v4282 = vadd.f32 %v4252, %v4271
    %v4283 = vadd.f32 %v4253, %v4270
    %v4284 = vadd.f32 %v4254, %v4272
    %v4285 = vld [vmem:[#allocation6 + $0x2c0] sm:$0xff]
    %v4286 = vld [vmem:[#allocation6 + $0x2c8] sm:$0xff]
    %v4287 = vld [vmem:[#allocation6 + $0x2d0] sm:$0xff]
    %v4288 = vld [vmem:[#allocation6 + $0x2d8] sm:$0xff]
    %v4289 = vld [vmem:[#allocation6 + $0x2e0] sm:$0xff]
    %v4290 = vld [vmem:[#allocation6 + $0x2e8] sm:$0xff]
    %v4291 = vld [vmem:[#allocation8 + $0x20] ss:$0 sm:$0xff]
    %v4300 = vcombine.low %v4277, %v4278
    %v4301 = vcombine.low %v4279, %v4280
    %v4303 = vunpack.c.l.s4 1983009808
    %v4304 = vunpack.c.0.s8 %v4303
    %v4305 = vlaneseq
    %v4306 = vshrl.u32 %v4305, 7
    %v4307 = vsub.s32 %v4304, %v4306
    %v4308 = vrot.slane %v4300, %v4307
    %v4310 = vunpack.c.l.s4 1983009808
    %v4311 = vunpack.c.0.s8 %v4310
    %v4312 = vlaneseq
    %v4313 = vshrl.u32 %v4312, 7
    %v4314 = vsub.s32 %v4311, %v4313
    %v4315 = vrot.slane %v4301, %v4314
    %v4316 = vcombine.low %v4308, %v4315
    %v4317 = vcombine.low %v4281, %v4282
    %v4318 = vcombine.low %v4283, %v4284
    %v4320 = vunpack.c.l.s4 1983009808
    %v4321 = vunpack.c.0.s8 %v4320
    %v4322 = vlaneseq
    %v4323 = vshrl.u32 %v4322, 7
    %v4324 = vsub.s32 %v4321, %v4323
    %v4325 = vrot.slane %v4317, %v4324
    %v4327 = vunpack.c.l.s4 1983009808
    %v4328 = vunpack.c.0.s8 %v4327
    %v4329 = vlaneseq
    %v4330 = vshrl.u32 %v4329, 7
    %v4331 = vsub.s32 %v4328, %v4330
    %v4332 = vrot.slane %v4318, %v4331
    %v4333 = vcombine.low %v4325, %v4332
    %v4334 = vrot.slane %v4316, 7
    %v4335 = vrot.slane %v4333, 7
    %v4338 = vsel %vm146, 0.0, %v4334
    %v4339 = vsel %vm146, 0.0, %v4335
    %v4340 = vrot.slane %v4316, 1
    %v4341 = vrot.slane %v4333, 1
    %v4344 = vsel %vm169, %v4340, 0.0
    %v4345 = vsel %vm169, %v4341, 0.0
    %4346 = vrot.lane.b32.xlu0 %v4316, 16
    %v4347 = vpop.permute.xlu0 %4346
    %4348 = vrot.lane.b32.xlu0 %v4333, 16
    %v4349 = vpop.permute.xlu0 %4348
    %4354 = vrot.lane.b32.xlu0 %v4344, 32
    %v4355 = vpop.permute.xlu0 %4354
    %4356 = vrot.lane.b32.xlu0 %v4345, 32
    %v4357 = vpop.permute.xlu0 %4356
    %v4360 = vsel %vm1838, %v4338, %v4347
    %v4361 = vsel %vm1838, %v4339, %v4349
    %v4362 = vsel %vm2741, %v4360, %v4355
    %v4363 = vsel %vm2741, %v4361, %v4357
    %v4365 = vsel %vm2744, %v4362, 0
    %v4368 = vsel %vm2744, %v4363, 0
    %4370 = vmatprep.subr.mxu0 0.0
    %4371 = vmatpush1.msra.mxu0 %v4285
    %4372 = vmatprep.subr.mxu0 0.0
    %4373 = vmatpush1.msra.mxu0 %v4286
    %4374 = vmatprep.subr.mxu0 0.0
    %4375 = vmatpush1.msra.mxu0 %v4287
    %4376 = vmatprep.subr.mxu0 0.0
    %4377 = vmatpush1.msra.mxu0 %v4288
    %4378 = vmatprep.subr.mxu0 0.0
    %4379 = vmatpush1.msra.mxu0 %v4289
    %4380 = vmatprep.subr.mxu0 0.0
    %4381 = vmatpush1.msra.mxu0 %v4290
    %4382 = vmatprep.subr.mxu0 0.0
    %4383 = vmatpush1.msra.mxu0 0.0
    %4384 = vmatprep.subr.mxu0 0.0
    %4385 = vmatpush1.msra.mxu0 0.0
    %4386 = vmatprep.subr.mxu0 0.0
    %4387 = vmatpush1.msra.mxu0 0.0
    %4388 = vmatprep.subr.mxu0 0.0
    %4389 = vmatpush1.msra.mxu0 0.0
    %4390 = vmatprep.subr.mxu0 0.0
    %4391 = vmatpush1.msra.mxu0 0.0
    %4392 = vmatprep.subr.mxu0 0.0
    %4393 = vmatpush1.msra.mxu0 0.0
    %4394 = vmatprep.subr.mxu0 0.0
    %4395 = vmatpush1.msra.mxu0 0.0
    %4396 = vmatprep.subr.mxu0 0.0
    %4397 = vmatpush1.msra.mxu0 0.0
    %4398 = vmatprep.subr.mxu0 0.0
    %4399 = vmatpush1.msra.mxu0 0.0
    %4400 = vmatprep.subr.mxu0 0.0
    %4401 = vmatpush1.msra.mxu0 0.0
    %4402 = vmatprep.subr.mxu0 0.0
    %4403 = vmatpush1.msra.mxu0 0.0
    %4404 = vmatprep.subr.mxu0 0.0
    %4405 = vmatpush1.msra.mxu0 0.0
    %4406 = vmatprep.subr.mxu0 0.0
    %4407 = vmatpush1.msra.mxu0 0.0
    %4408 = vmatprep.subr.mxu0 0.0
    %4409 = vmatpush1.msra.mxu0 0.0
    %4410 = vmatprep.subr.mxu0 0.0
    %4411 = vmatpush1.msra.mxu0 0.0
    %4412 = vmatprep.subr.mxu0 0.0
    %4413 = vmatpush1.msra.mxu0 0.0
    %4414 = vmatprep.subr.mxu0 0.0
    %4415 = vmatpush1.msra.mxu0 0.0
    %4416 = vmatprep.subr.mxu0 0.0
    %4417 = vmatpush1.msra.mxu0 0.0
    %4418 = vmatprep.subr.mxu0 0.0
    %4419 = vmatpush1.msra.mxu0 0.0
    %4420 = vmatprep.subr.mxu0 0.0
    %4421 = vmatpush1.msra.mxu0 0.0
    %4422 = vmatprep.subr.mxu0 0.0
    %4423 = vmatpush1.msra.mxu0 0.0
    %4424 = vmatprep.subr.mxu0 0.0
    %4425 = vmatpush1.msra.mxu0 0.0
    %4426 = vmatprep.subr.mxu0 0.0
    %4427 = vmatpush1.msra.mxu0 0.0
    %4428 = vmatprep.subr.mxu0 0.0
    %4429 = vmatpush1.msra.mxu0 0.0
    %4430 = vmatprep.subr.mxu0 0.0
    %4431 = vmatpush1.msra.mxu0 0.0
    %4432 = vmatprep.subr.mxu0 0.0
    %4433 = vmatpush1.msra.mxu0 0.0
    %4434 = vmatprep.mubr.f32.mxu0 0.0
    %4435 = vmatmul.mubr.f32.gmra.mrb[0].mxu0 %v4365
    %v4436 = vpop.f32.mrb[0].mxu0
    %v4437 = vadd.f32 %v4291, %v4436
    %v4438 = vpop.f32.mrb[0].mxu0
    %4439 = vmatprep.mubr.f32.mxu0 0.0
    %4440 = vmatmul.mubr.f32.gmra.mrb[0].mxu0 %v4368
    %v4441 = vpop.f32.mrb[0].mxu0
    %v4442 = vadd.f32 %v4291, %v4441
    %v4443 = vpop.f32.mrb[0].mxu0
    %4444 = vdwg.mxu0
    %v4447 = vcombine.high %v4437, %v4437
    %v4449 = vunpack.c.l.s4 1966171168
    %v4450 = vunpack.c.0.s8 %v4449
    %v4451 = vlaneseq
    %v4452 = vshrl.u32 %v4451, 7
    %v4453 = vsub.s32 %v4450, %v4452
    %v4454 = vrot.slane %v4437, %v4453
    %v4456 = vunpack.c.l.s4 1966171168
    %v4457 = vunpack.c.0.s8 %v4456
    %v4458 = vlaneseq
    %v4459 = vshrl.u32 %v4458, 7
    %v4460 = vsub.s32 %v4457, %v4459
    %v4461 = vrot.slane %v4447, %v4460
    %v4462 = vcombine.high %v4454, %v4454
    %v4463 = vcombine.high %v4461, %v4461
    %v4465 = vunpack.c.l.s4 1966171168
    %v4466 = vunpack.c.0.s8 %v4465
    %v4467 = vlaneseq
    %v4468 = vshrl.u32 %v4467, 7
    %v4469 = vsub.s32 %v4466, %v4468
    %v4470 = vrot.slane %v4454, %v4469
    %v4472 = vunpack.c.l.s4 1966171168
    %v4473 = vunpack.c.0.s8 %v4472
    %v4474 = vlaneseq
    %v4475 = vshrl.u32 %v4474, 7
    %v4476 = vsub.s32 %v4473, %v4475
    %v4477 = vrot.slane %v4461, %v4476
    %v4479 = vunpack.c.l.s4 1966171168
    %v4480 = vunpack.c.0.s8 %v4479
    %v4481 = vlaneseq
    %v4482 = vshrl.u32 %v4481, 7
    %v4483 = vsub.s32 %v4480, %v4482
    %v4484 = vrot.slane %v4462, %v4483
    %v4486 = vunpack.c.l.s4 1966171168
    %v4487 = vunpack.c.0.s8 %v4486
    %v4488 = vlaneseq
    %v4489 = vshrl.u32 %v4488, 7
    %v4490 = vsub.s32 %v4487, %v4489
    %v4491 = vrot.slane %v4463, %v4490
    %v4492 = vcombine.high %v4470, %v4470
    %v4493 = vcombine.high %v4477, %v4477
    %v4494 = vcombine.high %v4484, %v4484
    %v4495 = vcombine.high %v4491, %v4491
    %v4496 = vcombine.high %v4442, %v4442
    %v4498 = vunpack.c.l.s4 1966171168
    %v4499 = vunpack.c.0.s8 %v4498
    %v4500 = vlaneseq
    %v4501 = vshrl.u32 %v4500, 7
    %v4502 = vsub.s32 %v4499, %v4501
    %v4503 = vrot.slane %v4442, %v4502
    %v4505 = vunpack.c.l.s4 1966171168
    %v4506 = vunpack.c.0.s8 %v4505
    %v4507 = vlaneseq
    %v4508 = vshrl.u32 %v4507, 7
    %v4509 = vsub.s32 %v4506, %v4508
    %v4510 = vrot.slane %v4496, %v4509
    %v4511 = vcombine.high %v4503, %v4503
    %v4512 = vcombine.high %v4510, %v4510
    %v4514 = vunpack.c.l.s4 1966171168
    %v4515 = vunpack.c.0.s8 %v4514
    %v4516 = vlaneseq
    %v4517 = vshrl.u32 %v4516, 7
    %v4518 = vsub.s32 %v4515, %v4517
    %v4519 = vrot.slane %v4503, %v4518
    %v4521 = vunpack.c.l.s4 1966171168
    %v4522 = vunpack.c.0.s8 %v4521
    %v4523 = vlaneseq
    %v4524 = vshrl.u32 %v4523, 7
    %v4525 = vsub.s32 %v4522, %v4524
    %v4526 = vrot.slane %v4510, %v4525
    %v4528 = vunpack.c.l.s4 1966171168
    %v4529 = vunpack.c.0.s8 %v4528
    %v4530 = vlaneseq
    %v4531 = vshrl.u32 %v4530, 7
    %v4532 = vsub.s32 %v4529, %v4531
    %v4533 = vrot.slane %v4511, %v4532
    %v4535 = vunpack.c.l.s4 1966171168
    %v4536 = vunpack.c.0.s8 %v4535
    %v4537 = vlaneseq
    %v4538 = vshrl.u32 %v4537, 7
    %v4539 = vsub.s32 %v4536, %v4538
    %v4540 = vrot.slane %v4512, %v4539
    %v4541 = vcombine.high %v4519, %v4519
    %v4542 = vcombine.high %v4526, %v4526
    %v4543 = vcombine.high %v4533, %v4533
    %v4544 = vcombine.high %v4540, %v4540
    %vm4561 = vcmask 57344
    %4562 = vst.msk [vmem:[#allocation2] sm:$0x1] %vm4561, %v4470
    %4563 = vst.msk [vmem:[#allocation2 + $0x2] sm:$0x1] %vm4561, %v4484
    %4564 = vst.msk [vmem:[#allocation2 + $0x4] sm:$0x1] %vm4561, %v4492
    %4565 = vst.msk [vmem:[#allocation2 + $0x6] sm:$0x1] %vm4561, %v4494
    %4566 = vst.msk [vmem:[#allocation2 + $0x8] sm:$0x1] %vm4561, %v4477
    %4567 = vst.msk [vmem:[#allocation2 + $0xa] sm:$0x1] %vm4561, %v4491
    %4568 = vst.msk [vmem:[#allocation2 + $0xc] sm:$0x1] %vm4561, %v4493
    %4569 = vst.msk [vmem:[#allocation2 + $0xe] sm:$0x1] %vm4561, %v4495
    %4570 = vst.msk [vmem:[#allocation2 + $0x10] sm:$0x1] %vm4561, %v4519
    %4571 = vst.msk [vmem:[#allocation2 + $0x12] sm:$0x1] %vm4561, %v4533
    %4572 = vst.msk [vmem:[#allocation2 + $0x14] sm:$0x1] %vm4561, %v4541
    %4573 = vst.msk [vmem:[#allocation2 + $0x16] sm:$0x1] %vm4561, %v4543
    %4574 = vst.msk [vmem:[#allocation2 + $0x18] sm:$0x1] %vm4561, %v4526
    %4575 = vst.msk [vmem:[#allocation2 + $0x1a] sm:$0x1] %vm4561, %v4540
    %4576 = vst.msk [vmem:[#allocation2 + $0x1c] sm:$0x1] %vm4561, %v4542
    %4577 = vst.msk [vmem:[#allocation2 + $0x1e] sm:$0x1] %vm4561, %v4544
    %v4578 = vlaneseq
    %v4579 = vshrl.u32 %v4578, 7
    %v4580 = vsub.s32 0, %v4579
    %v4581 = vrot.slane %v4470, %v4580
    %v4582 = vlaneseq
    %v4583 = vshrl.u32 %v4582, 7
    %v4584 = vsub.s32 0, %v4583
    %v4585 = vrot.slane %v4484, %v4584
    %v4586 = vlaneseq
    %v4587 = vshrl.u32 %v4586, 7
    %v4588 = vsub.s32 0, %v4587
    %v4589 = vrot.slane %v4492, %v4588
    %v4590 = vlaneseq
    %v4591 = vshrl.u32 %v4590, 7
    %v4592 = vsub.s32 0, %v4591
    %v4593 = vrot.slane %v4494, %v4592
    %v4594 = vlaneseq
    %v4595 = vshrl.u32 %v4594, 7
    %v4596 = vsub.s32 0, %v4595
    %v4597 = vrot.slane %v4477, %v4596
    %v4598 = vlaneseq
    %v4599 = vshrl.u32 %v4598, 7
    %v4600 = vsub.s32 0, %v4599
    %v4601 = vrot.slane %v4491, %v4600
    %v4602 = vlaneseq
    %v4603 = vshrl.u32 %v4602, 7
    %v4604 = vsub.s32 0, %v4603
    %v4605 = vrot.slane %v4493, %v4604
    %v4606 = vlaneseq
    %v4607 = vshrl.u32 %v4606, 7
    %v4608 = vsub.s32 0, %v4607
    %v4609 = vrot.slane %v4495, %v4608
    %v4610 = vlaneseq
    %v4611 = vshrl.u32 %v4610, 7
    %v4612 = vsub.s32 0, %v4611
    %v4613 = vrot.slane %v4519, %v4612
    %v4614 = vlaneseq
    %v4615 = vshrl.u32 %v4614, 7
    %v4616 = vsub.s32 0, %v4615
    %v4617 = vrot.slane %v4533, %v4616
    %v4618 = vlaneseq
    %v4619 = vshrl.u32 %v4618, 7
    %v4620 = vsub.s32 0, %v4619
    %v4621 = vrot.slane %v4541, %v4620
    %v4622 = vlaneseq
    %v4623 = vshrl.u32 %v4622, 7
    %v4624 = vsub.s32 0, %v4623
    %v4625 = vrot.slane %v4543, %v4624
    %v4626 = vlaneseq
    %v4627 = vshrl.u32 %v4626, 7
    %v4628 = vsub.s32 0, %v4627
    %v4629 = vrot.slane %v4526, %v4628
    %v4630 = vlaneseq
    %v4631 = vshrl.u32 %v4630, 7
    %v4632 = vsub.s32 0, %v4631
    %v4633 = vrot.slane %v4540, %v4632
    %v4634 = vlaneseq
    %v4635 = vshrl.u32 %v4634, 7
    %v4636 = vsub.s32 0, %v4635
    %v4637 = vrot.slane %v4542, %v4636
    %v4638 = vlaneseq
    %v4639 = vshrl.u32 %v4638, 7
    %v4640 = vsub.s32 0, %v4639
    %v4641 = vrot.slane %v4544, %v4640
    %4642 = vrot.lane.b32.xlu0 %v4581, 120
    %v4643 = vpop.permute.xlu0 %4642
    %4644 = vrot.lane.b32.xlu0 %v4585, 120
    %v4645 = vpop.permute.xlu0 %4644
    %4646 = vrot.lane.b32.xlu0 %v4589, 120
    %v4647 = vpop.permute.xlu0 %4646
    %4648 = vrot.lane.b32.xlu0 %v4593, 120
    %v4649 = vpop.permute.xlu0 %4648
    %4650 = vrot.lane.b32.xlu0 %v4597, 120
    %v4651 = vpop.permute.xlu0 %4650
    %4652 = vrot.lane.b32.xlu0 %v4601, 120
    %v4653 = vpop.permute.xlu0 %4652
    %4654 = vrot.lane.b32.xlu0 %v4605, 120
    %v4655 = vpop.permute.xlu0 %4654
    %4656 = vrot.lane.b32.xlu0 %v4609, 120
    %v4657 = vpop.permute.xlu0 %4656
    %4658 = vrot.lane.b32.xlu0 %v4613, 120
    %v4659 = vpop.permute.xlu0 %4658
    %4660 = vrot.lane.b32.xlu0 %v4617, 120
    %v4661 = vpop.permute.xlu0 %4660
    %4662 = vrot.lane.b32.xlu0 %v4621, 120
    %v4663 = vpop.permute.xlu0 %4662
    %4664 = vrot.lane.b32.xlu0 %v4625, 120
    %v4665 = vpop.permute.xlu0 %4664
    %4666 = vrot.lane.b32.xlu0 %v4629, 120
    %v4667 = vpop.permute.xlu0 %4666
    %4668 = vrot.lane.b32.xlu0 %v4633, 120
    %v4669 = vpop.permute.xlu0 %4668
    %4670 = vrot.lane.b32.xlu0 %v4637, 120
    %v4671 = vpop.permute.xlu0 %4670
    %4672 = vrot.lane.b32.xlu0 %v4641, 120
    %v4673 = vpop.permute.xlu0 %4672
    %4690 = vst.msk [vmem:[#allocation2 + $0x1] sm:$0x1] %vm4561, %v4643
    %4691 = vst.msk [vmem:[#allocation2 + $0x3] sm:$0x1] %vm4561, %v4645
    %4692 = vst.msk [vmem:[#allocation2 + $0x5] sm:$0x1] %vm4561, %v4647
    %4693 = vst.msk [vmem:[#allocation2 + $0x7] sm:$0x1] %vm4561, %v4649
    %4694 = vst.msk [vmem:[#allocation2 + $0x9] sm:$0x1] %vm4561, %v4651
    %4695 = vst.msk [vmem:[#allocation2 + $0xb] sm:$0x1] %vm4561, %v4653
    %4696 = vst.msk [vmem:[#allocation2 + $0xd] sm:$0x1] %vm4561, %v4655
    %4697 = vst.msk [vmem:[#allocation2 + $0xf] sm:$0x1] %vm4561, %v4657
    %4698 = vst.msk [vmem:[#allocation2 + $0x11] sm:$0x1] %vm4561, %v4659
    %4699 = vst.msk [vmem:[#allocation2 + $0x13] sm:$0x1] %vm4561, %v4661
    %4700 = vst.msk [vmem:[#allocation2 + $0x15] sm:$0x1] %vm4561, %v4663
    %4701 = vst.msk [vmem:[#allocation2 + $0x17] sm:$0x1] %vm4561, %v4665
    %4702 = vst.msk [vmem:[#allocation2 + $0x19] sm:$0x1] %vm4561, %v4667
    %4703 = vst.msk [vmem:[#allocation2 + $0x1b] sm:$0x1] %vm4561, %v4669
    %4704 = vst.msk [vmem:[#allocation2 + $0x1d] sm:$0x1] %vm4561, %v4671
    %4705 = vst.msk [vmem:[#allocation2 + $0x1f] sm:$0x1] %vm4561, %v4673
    %v4706 = vld [vmem:[#allocation2] sm:$0x3]
    %v4707 = vld [vmem:[#allocation2 + $0x2] sm:$0x3]
    %v4708 = vld [vmem:[#allocation2 + $0x4] sm:$0x3]
    %v4709 = vld [vmem:[#allocation2 + $0x6] sm:$0x3]
    %v4710 = vld [vmem:[#allocation2 + $0x8] sm:$0x3]
    %v4711 = vld [vmem:[#allocation2 + $0xa] sm:$0x3]
    %v4712 = vld [vmem:[#allocation2 + $0xc] sm:$0x3]
    %v4713 = vld [vmem:[#allocation2 + $0xe] sm:$0x3]
    %v4714 = vld [vmem:[#allocation2 + $0x10] sm:$0x3]
    %v4715 = vld [vmem:[#allocation2 + $0x12] sm:$0x3]
    %v4716 = vld [vmem:[#allocation2 + $0x14] sm:$0x3]
    %v4717 = vld [vmem:[#allocation2 + $0x16] sm:$0x3]
    %v4718 = vld [vmem:[#allocation2 + $0x18] sm:$0x3]
    %v4719 = vld [vmem:[#allocation2 + $0x1a] sm:$0x3]
    %v4720 = vld [vmem:[#allocation2 + $0x1c] sm:$0x3]
    %v4721 = vld [vmem:[#allocation2 + $0x1e] sm:$0x3]
    %v4722 = vmax.f32 %v4706, 0.0
    %v4723 = vmax.f32 %v4707, 0.0
    %v4724 = vmax.f32 %v4708, 0.0
    %v4725 = vmax.f32 %v4709, 0.0
    %v4726 = vmax.f32 %v4710, 0.0
    %v4727 = vmax.f32 %v4711, 0.0
    %v4728 = vmax.f32 %v4712, 0.0
    %v4729 = vmax.f32 %v4713, 0.0
    %v4730 = vmax.f32 %v4714, 0.0
    %v4731 = vmax.f32 %v4715, 0.0
    %v4732 = vmax.f32 %v4716, 0.0
    %v4733 = vmax.f32 %v4717, 0.0
    %v4734 = vmax.f32 %v4718, 0.0
    %v4735 = vmax.f32 %v4719, 0.0
    %v4736 = vmax.f32 %v4720, 0.0
    %v4737 = vmax.f32 %v4721, 0.0
    %v4738 = vld [vmem:[#allocation8 + $0x21] ss:$0 sm:$0xff]
    %v4739 = vld [vmem:[#allocation8 + $0x22] ss:$0 sm:$0xff]
    %v4756 = vcombine.low %v4722, %v4723
    %v4757 = vcombine.low %v4724, %v4725
    %v4759 = vunpack.c.l.s4 1983009808
    %v4760 = vunpack.c.0.s8 %v4759
    %v4761 = vlaneseq
    %v4762 = vshrl.u32 %v4761, 7
    %v4763 = vsub.s32 %v4760, %v4762
    %v4764 = vrot.slane %v4756, %v4763
    %v4766 = vunpack.c.l.s4 1983009808
    %v4767 = vunpack.c.0.s8 %v4766
    %v4768 = vlaneseq
    %v4769 = vshrl.u32 %v4768, 7
    %v4770 = vsub.s32 %v4767, %v4769
    %v4771 = vrot.slane %v4757, %v4770
    %v4772 = vcombine.low %v4764, %v4771
    %v4773 = vcombine.low %v4726, %v4727
    %v4774 = vcombine.low %v4728, %v4729
    %v4776 = vunpack.c.l.s4 1983009808
    %v4777 = vunpack.c.0.s8 %v4776
    %v4778 = vlaneseq
    %v4779 = vshrl.u32 %v4778, 7
    %v4780 = vsub.s32 %v4777, %v4779
    %v4781 = vrot.slane %v4773, %v4780
    %v4783 = vunpack.c.l.s4 1983009808
    %v4784 = vunpack.c.0.s8 %v4783
    %v4785 = vlaneseq
    %v4786 = vshrl.u32 %v4785, 7
    %v4787 = vsub.s32 %v4784, %v4786
    %v4788 = vrot.slane %v4774, %v4787
    %v4789 = vcombine.low %v4781, %v4788
    %v4790 = vcombine.low %v4730, %v4731
    %v4791 = vcombine.low %v4732, %v4733
    %v4793 = vunpack.c.l.s4 1983009808
    %v4794 = vunpack.c.0.s8 %v4793
    %v4795 = vlaneseq
    %v4796 = vshrl.u32 %v4795, 7
    %v4797 = vsub.s32 %v4794, %v4796
    %v4798 = vrot.slane %v4790, %v4797
    %v4800 = vunpack.c.l.s4 1983009808
    %v4801 = vunpack.c.0.s8 %v4800
    %v4802 = vlaneseq
    %v4803 = vshrl.u32 %v4802, 7
    %v4804 = vsub.s32 %v4801, %v4803
    %v4805 = vrot.slane %v4791, %v4804
    %v4806 = vcombine.low %v4798, %v4805
    %v4807 = vcombine.low %v4734, %v4735
    %v4808 = vcombine.low %v4736, %v4737
    %v4810 = vunpack.c.l.s4 1983009808
    %v4811 = vunpack.c.0.s8 %v4810
    %v4812 = vlaneseq
    %v4813 = vshrl.u32 %v4812, 7
    %v4814 = vsub.s32 %v4811, %v4813
    %v4815 = vrot.slane %v4807, %v4814
    %v4817 = vunpack.c.l.s4 1983009808
    %v4818 = vunpack.c.0.s8 %v4817
    %v4819 = vlaneseq
    %v4820 = vshrl.u32 %v4819, 7
    %v4821 = vsub.s32 %v4818, %v4820
    %v4822 = vrot.slane %v4808, %v4821
    %v4823 = vcombine.low %v4815, %v4822
    %v4828 = vsel %vm249, %v4772, 0.0
    %v4829 = vsel %vm249, %v4789, 0.0
    %v4830 = vadd.f32 %v4828, %v4829
    %v4831 = vsel %vm249, %v4806, 0.0
    %v4832 = vadd.f32 %v4830, %v4831
    %v4833 = vsel %vm249, %v4823, 0.0
    %v4834 = vadd.f32 %v4832, %v4833
    %v4835 = vrot.slane %v4834, 4
    %v4836 = vadd.f32 %v4834, %v4835
    %v4837 = vrot.slane %v4836, 2
    %v4838 = vadd.f32 %v4836, %v4837
    %v4839 = vrot.slane %v4838, 1
    %v4840 = vadd.f32 %v4838, %v4839
    %v4841 = vmul.f32 %v4840, %v1052
    %v4843 = vcombine.high %v4841, %v4841
    %v4845 = vunpack.c.l.s4 1983009808
    %v4846 = vunpack.c.0.s8 %v4845
    %v4847 = vlaneseq
    %v4848 = vshrl.u32 %v4847, 7
    %v4849 = vsub.s32 %v4846, %v4848
    %v4850 = vrot.slane %v4841, %v4849
    %v4852 = vunpack.c.l.s4 1983009808
    %v4853 = vunpack.c.0.s8 %v4852
    %v4854 = vlaneseq
    %v4855 = vshrl.u32 %v4854, 7
    %v4856 = vsub.s32 %v4853, %v4855
    %v4857 = vrot.slane %v4843, %v4856
    %v4858 = vcombine.high %v4850, %v4850
    %v4859 = vcombine.high %v4857, %v4857
    %v4864 = vsub.f32 %v4722, %v4850
    %v4865 = vsub.f32 %v4723, %v4858
    %v4866 = vsub.f32 %v4724, %v4857
    %v4867 = vsub.f32 %v4725, %v4859
    %v4868 = vsub.f32 %v4726, %v4850
    %v4869 = vsub.f32 %v4727, %v4858
    %v4870 = vsub.f32 %v4728, %v4857
    %v4871 = vsub.f32 %v4729, %v4859
    %v4872 = vsub.f32 %v4730, %v4850
    %v4873 = vsub.f32 %v4731, %v4858
    %v4874 = vsub.f32 %v4732, %v4857
    %v4875 = vsub.f32 %v4733, %v4859
    %v4876 = vsub.f32 %v4734, %v4850
    %v4877 = vsub.f32 %v4735, %v4858
    %v4878 = vsub.f32 %v4736, %v4857
    %v4879 = vsub.f32 %v4737, %v4859
    %v4880 = vmul.f32 %v4864, %v4864
    %v4881 = vmul.f32 %v4865, %v4865
    %v4882 = vmul.f32 %v4866, %v4866
    %v4883 = vmul.f32 %v4867, %v4867
    %v4884 = vmul.f32 %v4868, %v4868
    %v4885 = vmul.f32 %v4869, %v4869
    %v4886 = vmul.f32 %v4870, %v4870
    %v4887 = vmul.f32 %v4871, %v4871
    %v4888 = vmul.f32 %v4872, %v4872
    %v4889 = vmul.f32 %v4873, %v4873
    %v4890 = vmul.f32 %v4874, %v4874
    %v4891 = vmul.f32 %v4875, %v4875
    %v4892 = vmul.f32 %v4876, %v4876
    %v4893 = vmul.f32 %v4877, %v4877
    %v4894 = vmul.f32 %v4878, %v4878
    %v4895 = vmul.f32 %v4879, %v4879
    %v4912 = vcombine.low %v4880, %v4881
    %v4913 = vcombine.low %v4882, %v4883
    %v4915 = vunpack.c.l.s4 1983009808
    %v4916 = vunpack.c.0.s8 %v4915
    %v4917 = vlaneseq
    %v4918 = vshrl.u32 %v4917, 7
    %v4919 = vsub.s32 %v4916, %v4918
    %v4920 = vrot.slane %v4912, %v4919
    %v4922 = vunpack.c.l.s4 1983009808
    %v4923 = vunpack.c.0.s8 %v4922
    %v4924 = vlaneseq
    %v4925 = vshrl.u32 %v4924, 7
    %v4926 = vsub.s32 %v4923, %v4925
    %v4927 = vrot.slane %v4913, %v4926
    %v4928 = vcombine.low %v4920, %v4927
    %v4929 = vcombine.low %v4884, %v4885
    %v4930 = vcombine.low %v4886, %v4887
    %v4932 = vunpack.c.l.s4 1983009808
    %v4933 = vunpack.c.0.s8 %v4932
    %v4934 = vlaneseq
    %v4935 = vshrl.u32 %v4934, 7
    %v4936 = vsub.s32 %v4933, %v4935
    %v4937 = vrot.slane %v4929, %v4936
    %v4939 = vunpack.c.l.s4 1983009808
    %v4940 = vunpack.c.0.s8 %v4939
    %v4941 = vlaneseq
    %v4942 = vshrl.u32 %v4941, 7
    %v4943 = vsub.s32 %v4940, %v4942
    %v4944 = vrot.slane %v4930, %v4943
    %v4945 = vcombine.low %v4937, %v4944
    %v4946 = vcombine.low %v4888, %v4889
    %v4947 = vcombine.low %v4890, %v4891
    %v4949 = vunpack.c.l.s4 1983009808
    %v4950 = vunpack.c.0.s8 %v4949
    %v4951 = vlaneseq
    %v4952 = vshrl.u32 %v4951, 7
    %v4953 = vsub.s32 %v4950, %v4952
    %v4954 = vrot.slane %v4946, %v4953
    %v4956 = vunpack.c.l.s4 1983009808
    %v4957 = vunpack.c.0.s8 %v4956
    %v4958 = vlaneseq
    %v4959 = vshrl.u32 %v4958, 7
    %v4960 = vsub.s32 %v4957, %v4959
    %v4961 = vrot.slane %v4947, %v4960
    %v4962 = vcombine.low %v4954, %v4961
    %v4963 = vcombine.low %v4892, %v4893
    %v4964 = vcombine.low %v4894, %v4895
    %v4966 = vunpack.c.l.s4 1983009808
    %v4967 = vunpack.c.0.s8 %v4966
    %v4968 = vlaneseq
    %v4969 = vshrl.u32 %v4968, 7
    %v4970 = vsub.s32 %v4967, %v4969
    %v4971 = vrot.slane %v4963, %v4970
    %v4973 = vunpack.c.l.s4 1983009808
    %v4974 = vunpack.c.0.s8 %v4973
    %v4975 = vlaneseq
    %v4976 = vshrl.u32 %v4975, 7
    %v4977 = vsub.s32 %v4974, %v4976
    %v4978 = vrot.slane %v4964, %v4977
    %v4979 = vcombine.low %v4971, %v4978
    %v4984 = vsel %vm249, %v4928, 0.0
    %v4985 = vsel %vm249, %v4945, 0.0
    %v4986 = vadd.f32 %v4984, %v4985
    %v4987 = vsel %vm249, %v4962, 0.0
    %v4988 = vadd.f32 %v4986, %v4987
    %v4989 = vsel %vm249, %v4979, 0.0
    %v4990 = vadd.f32 %v4988, %v4989
    %v4991 = vrot.slane %v4990, 4
    %v4992 = vadd.f32 %v4990, %v4991
    %v4993 = vrot.slane %v4992, 2
    %v4994 = vadd.f32 %v4992, %v4993
    %v4995 = vrot.slane %v4994, 1
    %v4996 = vadd.f32 %v4994, %v4995
    %v4997 = vmul.f32 %v4996, %v1052
    %v4998 = vadd.f32 %v4997, 1e-05
    %v4999 = vrsqrt.pop %v4998
    %v5001 = vcombine.high %v4999, %v4999
    %v5003 = vunpack.c.l.s4 1983009808
    %v5004 = vunpack.c.0.s8 %v5003
    %v5005 = vlaneseq
    %v5006 = vshrl.u32 %v5005, 7
    %v5007 = vsub.s32 %v5004, %v5006
    %v5008 = vrot.slane %v4999, %v5007
    %v5010 = vunpack.c.l.s4 1983009808
    %v5011 = vunpack.c.0.s8 %v5010
    %v5012 = vlaneseq
    %v5013 = vshrl.u32 %v5012, 7
    %v5014 = vsub.s32 %v5011, %v5013
    %v5015 = vrot.slane %v5001, %v5014
    %v5016 = vcombine.high %v5008, %v5008
    %v5017 = vcombine.high %v5015, %v5015
    %v5022 = vmul.f32 %v4864, %v5008
    %v5023 = vmul.f32 %v4865, %v5016
    %v5024 = vmul.f32 %v4866, %v5015
    %v5025 = vmul.f32 %v4867, %v5017
    %v5026 = vmul.f32 %v4868, %v5008
    %v5027 = vmul.f32 %v4869, %v5016
    %v5028 = vmul.f32 %v4870, %v5015
    %v5029 = vmul.f32 %v4871, %v5017
    %v5030 = vmul.f32 %v4872, %v5008
    %v5031 = vmul.f32 %v4873, %v5016
    %v5032 = vmul.f32 %v4874, %v5015
    %v5033 = vmul.f32 %v4875, %v5017
    %v5034 = vmul.f32 %v4876, %v5008
    %v5035 = vmul.f32 %v4877, %v5016
    %v5036 = vmul.f32 %v4878, %v5015
    %v5037 = vmul.f32 %v4879, %v5017
    %v5039 = vcombine.high %v4738, %v4738
    %v5041 = vunpack.c.l.s4 1983009808
    %v5042 = vunpack.c.0.s8 %v5041
    %v5043 = vlaneseq
    %v5044 = vshrl.u32 %v5043, 7
    %v5045 = vsub.s32 %v5042, %v5044
    %v5046 = vrot.slane %v4738, %v5045
    %v5048 = vunpack.c.l.s4 1983009808
    %v5049 = vunpack.c.0.s8 %v5048
    %v5050 = vlaneseq
    %v5051 = vshrl.u32 %v5050, 7
    %v5052 = vsub.s32 %v5049, %v5051
    %v5053 = vrot.slane %v5039, %v5052
    %v5054 = vcombine.high %v5046, %v5046
    %v5055 = vcombine.high %v5053, %v5053
    %v5060 = vmul.f32 %v5022, %v5046
    %v5061 = vmul.f32 %v5023, %v5054
    %v5062 = vmul.f32 %v5024, %v5053
    %v5063 = vmul.f32 %v5025, %v5055
    %v5064 = vmul.f32 %v5026, %v5046
    %v5065 = vmul.f32 %v5027, %v5054
    %v5066 = vmul.f32 %v5028, %v5053
    %v5067 = vmul.f32 %v5029, %v5055
    %v5068 = vmul.f32 %v5030, %v5046
    %v5069 = vmul.f32 %v5031, %v5054
    %v5070 = vmul.f32 %v5032, %v5053
    %v5071 = vmul.f32 %v5033, %v5055
    %v5072 = vmul.f32 %v5034, %v5046
    %v5073 = vmul.f32 %v5035, %v5054
    %v5074 = vmul.f32 %v5036, %v5053
    %v5075 = vmul.f32 %v5037, %v5055
    %v5077 = vcombine.high %v4739, %v4739
    %v5079 = vunpack.c.l.s4 1983009808
    %v5080 = vunpack.c.0.s8 %v5079
    %v5081 = vlaneseq
    %v5082 = vshrl.u32 %v5081, 7
    %v5083 = vsub.s32 %v5080, %v5082
    %v5084 = vrot.slane %v4739, %v5083
    %v5086 = vunpack.c.l.s4 1983009808
    %v5087 = vunpack.c.0.s8 %v5086
    %v5088 = vlaneseq
    %v5089 = vshrl.u32 %v5088, 7
    %v5090 = vsub.s32 %v5087, %v5089
    %v5091 = vrot.slane %v5077, %v5090
    %v5092 = vcombine.high %v5084, %v5084
    %v5093 = vcombine.high %v5091, %v5091
    %v5098 = vadd.f32 %v5060, %v5084
    %v5099 = vadd.f32 %v5061, %v5092
    %v5100 = vadd.f32 %v5062, %v5091
    %v5101 = vadd.f32 %v5063, %v5093
    %v5102 = vadd.f32 %v5064, %v5084
    %v5103 = vadd.f32 %v5065, %v5092
    %v5104 = vadd.f32 %v5066, %v5091
    %v5105 = vadd.f32 %v5067, %v5093
    %v5106 = vadd.f32 %v5068, %v5084
    %v5107 = vadd.f32 %v5069, %v5092
    %v5108 = vadd.f32 %v5070, %v5091
    %v5109 = vadd.f32 %v5071, %v5093
    %v5110 = vadd.f32 %v5072, %v5084
    %v5111 = vadd.f32 %v5073, %v5092
    %v5112 = vadd.f32 %v5074, %v5091
    %v5113 = vadd.f32 %v5075, %v5093
    %v5114 = vld [vmem:[#allocation6 + $0x2f0] sm:$0xff]
    %v5115 = vld [vmem:[#allocation6 + $0x2f8] sm:$0xff]
    %v5116 = vld [vmem:[#allocation6 + $0x300] sm:$0xff]
    %v5117 = vld [vmem:[#allocation8 + $0x23] ss:$0 sm:$0xff]
    %v5134 = vcombine.low %v5098, %v5099
    %v5135 = vcombine.low %v5100, %v5101
    %v5137 = vunpack.c.l.s4 1983009808
    %v5138 = vunpack.c.0.s8 %v5137
    %v5139 = vlaneseq
    %v5140 = vshrl.u32 %v5139, 7
    %v5141 = vsub.s32 %v5138, %v5140
    %v5142 = vrot.slane %v5134, %v5141
    %v5144 = vunpack.c.l.s4 1983009808
    %v5145 = vunpack.c.0.s8 %v5144
    %v5146 = vlaneseq
    %v5147 = vshrl.u32 %v5146, 7
    %v5148 = vsub.s32 %v5145, %v5147
    %v5149 = vrot.slane %v5135, %v5148
    %v5150 = vcombine.low %v5142, %v5149
    %v5151 = vcombine.low %v5102, %v5103
    %v5152 = vcombine.low %v5104, %v5105
    %v5154 = vunpack.c.l.s4 1983009808
    %v5155 = vunpack.c.0.s8 %v5154
    %v5156 = vlaneseq
    %v5157 = vshrl.u32 %v5156, 7
    %v5158 = vsub.s32 %v5155, %v5157
    %v5159 = vrot.slane %v5151, %v5158
    %v5161 = vunpack.c.l.s4 1983009808
    %v5162 = vunpack.c.0.s8 %v5161
    %v5163 = vlaneseq
    %v5164 = vshrl.u32 %v5163, 7
    %v5165 = vsub.s32 %v5162, %v5164
    %v5166 = vrot.slane %v5152, %v5165
    %v5167 = vcombine.low %v5159, %v5166
    %v5168 = vcombine.low %v5106, %v5107
    %v5169 = vcombine.low %v5108, %v5109
    %v5171 = vunpack.c.l.s4 1983009808
    %v5172 = vunpack.c.0.s8 %v5171
    %v5173 = vlaneseq
    %v5174 = vshrl.u32 %v5173, 7
    %v5175 = vsub.s32 %v5172, %v5174
    %v5176 = vrot.slane %v5168, %v5175
    %v5178 = vunpack.c.l.s4 1983009808
    %v5179 = vunpack.c.0.s8 %v5178
    %v5180 = vlaneseq
    %v5181 = vshrl.u32 %v5180, 7
    %v5182 = vsub.s32 %v5179, %v5181
    %v5183 = vrot.slane %v5169, %v5182
    %v5184 = vcombine.low %v5176, %v5183
    %v5185 = vcombine.low %v5110, %v5111
    %v5186 = vcombine.low %v5112, %v5113
    %v5188 = vunpack.c.l.s4 1983009808
    %v5189 = vunpack.c.0.s8 %v5188
    %v5190 = vlaneseq
    %v5191 = vshrl.u32 %v5190, 7
    %v5192 = vsub.s32 %v5189, %v5191
    %v5193 = vrot.slane %v5185, %v5192
    %v5195 = vunpack.c.l.s4 1983009808
    %v5196 = vunpack.c.0.s8 %v5195
    %v5197 = vlaneseq
    %v5198 = vshrl.u32 %v5197, 7
    %v5199 = vsub.s32 %v5196, %v5198
    %v5200 = vrot.slane %v5186, %v5199
    %v5201 = vcombine.low %v5193, %v5200
    %v5202 = vrot.slane %v5150, 7
    %v5203 = vrot.slane %v5167, 7
    %v5204 = vsel %vm146, %v5202, %v5203
    %v5205 = vrot.slane %v5184, 7
    %v5206 = vrot.slane %v5201, 7
    %v5207 = vsel %vm146, %v5205, %v5206
    %v5212 = vsel %vm146, 0.0, %v5202
    %v5213 = vsel %vm146, 0.0, %v5205
    %v5214 = vrot.slane %v5150, 1
    %v5215 = vrot.slane %v5167, 1
    %v5216 = vsel %vm169, %v5214, %v5215
    %v5217 = vrot.slane %v5184, 1
    %v5218 = vrot.slane %v5201, 1
    %v5219 = vsel %vm169, %v5217, %v5218
    %v5222 = vsel %vm169, %v5215, 0.0
    %v5223 = vsel %vm169, %v5218, 0.0
    %5224 = vrot.lane.b32.xlu0 %v5150, 8
    %v5225 = vpop.permute.xlu0 %5224
    %5226 = vrot.lane.b32.xlu0 %v5167, 8
    %v5227 = vpop.permute.xlu0 %5226
    %5228 = vrot.lane.b32.xlu0 %v5184, 8
    %v5229 = vpop.permute.xlu0 %5228
    %5230 = vrot.lane.b32.xlu0 %v5201, 8
    %v5231 = vpop.permute.xlu0 %5230
    %5238 = vrot.lane.b32.xlu0 %v5216, 16
    %v5239 = vpop.permute.xlu0 %5238
    %5240 = vrot.lane.b32.xlu0 %v5222, 16
    %v5241 = vpop.permute.xlu0 %5240
    %5242 = vrot.lane.b32.xlu0 %v5219, 16
    %v5243 = vpop.permute.xlu0 %5242
    %5244 = vrot.lane.b32.xlu0 %v5223, 16
    %v5245 = vpop.permute.xlu0 %5244
    %v5250 = vsel %vm249, %v5212, %v5225
    %v5251 = vsel %vm249, %v5204, %v5227
    %v5252 = vsel %vm249, %v5213, %v5229
    %v5253 = vsel %vm249, %v5207, %v5231
    %v5254 = vsel %vm1838, %v5250, %v5239
    %v5255 = vsel %vm1838, %v5251, %v5241
    %v5256 = vsel %vm1838, %v5252, %v5243
    %v5257 = vsel %vm1838, %v5253, %v5245
    %v5259 = vsel %vm1843, %v5254, 0
    %v5262 = vsel %vm1843, %v5255, 0
    %v5265 = vsel %vm1843, %v5256, 0
    %v5268 = vsel %vm1843, %v5257, 0
    %5270 = vmatprep.subr.mxu0 0.0
    %5271 = vmatpush1.msra.mxu0 %v5114
    %5272 = vmatprep.subr.mxu0 0.0
    %5273 = vmatpush1.msra.mxu0 %v5115
    %5274 = vmatprep.subr.mxu0 0.0
    %5275 = vmatpush1.msra.mxu0 %v5116
    %5276 = vmatprep.subr.mxu0 0.0
    %5277 = vmatpush1.msra.mxu0 0.0
    %5278 = vmatprep.subr.mxu0 0.0
    %5279 = vmatpush1.msra.mxu0 0.0
    %5280 = vmatprep.subr.mxu0 0.0
    %5281 = vmatpush1.msra.mxu0 0.0
    %5282 = vmatprep.subr.mxu0 0.0
    %5283 = vmatpush1.msra.mxu0 0.0
    %5284 = vmatprep.subr.mxu0 0.0
    %5285 = vmatpush1.msra.mxu0 0.0
    %5286 = vmatprep.subr.mxu0 0.0
    %5287 = vmatpush1.msra.mxu0 0.0
    %5288 = vmatprep.subr.mxu0 0.0
    %5289 = vmatpush1.msra.mxu0 0.0
    %5290 = vmatprep.subr.mxu0 0.0
    %5291 = vmatpush1.msra.mxu0 0.0
    %5292 = vmatprep.subr.mxu0 0.0
    %5293 = vmatpush1.msra.mxu0 0.0
    %5294 = vmatprep.subr.mxu0 0.0
    %5295 = vmatpush1.msra.mxu0 0.0
    %5296 = vmatprep.subr.mxu0 0.0
    %5297 = vmatpush1.msra.mxu0 0.0
    %5298 = vmatprep.subr.mxu0 0.0
    %5299 = vmatpush1.msra.mxu0 0.0
    %5300 = vmatprep.subr.mxu0 0.0
    %5301 = vmatpush1.msra.mxu0 0.0
    %5302 = vmatprep.subr.mxu0 0.0
    %5303 = vmatpush1.msra.mxu0 0.0
    %5304 = vmatprep.subr.mxu0 0.0
    %5305 = vmatpush1.msra.mxu0 0.0
    %5306 = vmatprep.subr.mxu0 0.0
    %5307 = vmatpush1.msra.mxu0 0.0
    %5308 = vmatprep.subr.mxu0 0.0
    %5309 = vmatpush1.msra.mxu0 0.0
    %5310 = vmatprep.subr.mxu0 0.0
    %5311 = vmatpush1.msra.mxu0 0.0
    %5312 = vmatprep.subr.mxu0 0.0
    %5313 = vmatpush1.msra.mxu0 0.0
    %5314 = vmatprep.subr.mxu0 0.0
    %5315 = vmatpush1.msra.mxu0 0.0
    %5316 = vmatprep.subr.mxu0 0.0
    %5317 = vmatpush1.msra.mxu0 0.0
    %5318 = vmatprep.subr.mxu0 0.0
    %5319 = vmatpush1.msra.mxu0 0.0
    %5320 = vmatprep.subr.mxu0 0.0
    %5321 = vmatpush1.msra.mxu0 0.0
    %5322 = vmatprep.subr.mxu0 0.0
    %5323 = vmatpush1.msra.mxu0 0.0
    %5324 = vmatprep.subr.mxu0 0.0
    %5325 = vmatpush1.msra.mxu0 0.0
    %5326 = vmatprep.subr.mxu0 0.0
    %5327 = vmatpush1.msra.mxu0 0.0
    %5328 = vmatprep.subr.mxu0 0.0
    %5329 = vmatpush1.msra.mxu0 0.0
    %5330 = vmatprep.subr.mxu0 0.0
    %5331 = vmatpush1.msra.mxu0 0.0
    %5332 = vmatprep.subr.mxu0 0.0
    %5333 = vmatpush1.msra.mxu0 0.0
    %5334 = vmatprep.mubr.f32.mxu0 0.0
    %5335 = vmatmul.mubr.f32.gmra.mrb[0].mxu0 %v5259
    %v5336 = vpop.f32.mrb[0].mxu0
    %v5337 = vadd.f32 %v5117, %v5336
    %v5338 = vpop.f32.mrb[0].mxu0
    %5339 = vmatprep.mubr.f32.mxu0 0.0
    %5340 = vmatmul.mubr.f32.gmra.mrb[0].mxu0 %v5262
    %v5341 = vpop.f32.mrb[0].mxu0
    %v5342 = vadd.f32 %v5117, %v5341
    %v5343 = vpop.f32.mrb[0].mxu0
    %5344 = vmatprep.mubr.f32.mxu0 0.0
    %5345 = vmatmul.mubr.f32.gmra.mrb[0].mxu0 %v5265
    %v5346 = vpop.f32.mrb[0].mxu0
    %v5347 = vadd.f32 %v5117, %v5346
    %v5348 = vpop.f32.mrb[0].mxu0
    %5349 = vmatprep.mubr.f32.mxu0 0.0
    %5350 = vmatmul.mubr.f32.gmra.mrb[0].mxu0 %v5268
    %v5351 = vpop.f32.mrb[0].mxu0
    %v5352 = vadd.f32 %v5117, %v5351
    %v5353 = vpop.f32.mrb[0].mxu0
    %5354 = vdwg.mxu0
    %v5359 = vcombine.high %v5337, %v5337
    %v5361 = vunpack.c.l.s4 1966171168
    %v5362 = vunpack.c.0.s8 %v5361
    %v5363 = vlaneseq
    %v5364 = vshrl.u32 %v5363, 7
    %v5365 = vsub.s32 %v5362, %v5364
    %v5366 = vrot.slane %v5337, %v5365
    %v5368 = vunpack.c.l.s4 1966171168
    %v5369 = vunpack.c.0.s8 %v5368
    %v5370 = vlaneseq
    %v5371 = vshrl.u32 %v5370, 7
    %v5372 = vsub.s32 %v5369, %v5371
    %v5373 = vrot.slane %v5359, %v5372
    %v5374 = vcombine.high %v5366, %v5366
    %v5375 = vcombine.high %v5373, %v5373
    %v5377 = vunpack.c.l.s4 1966171168
    %v5378 = vunpack.c.0.s8 %v5377
    %v5379 = vlaneseq
    %v5380 = vshrl.u32 %v5379, 7
    %v5381 = vsub.s32 %v5378, %v5380
    %v5382 = vrot.slane %v5366, %v5381
    %v5384 = vunpack.c.l.s4 1966171168
    %v5385 = vunpack.c.0.s8 %v5384
    %v5386 = vlaneseq
    %v5387 = vshrl.u32 %v5386, 7
    %v5388 = vsub.s32 %v5385, %v5387
    %v5389 = vrot.slane %v5373, %v5388
    %v5391 = vunpack.c.l.s4 1966171168
    %v5392 = vunpack.c.0.s8 %v5391
    %v5393 = vlaneseq
    %v5394 = vshrl.u32 %v5393, 7
    %v5395 = vsub.s32 %v5392, %v5394
    %v5396 = vrot.slane %v5374, %v5395
    %v5398 = vunpack.c.l.s4 1966171168
    %v5399 = vunpack.c.0.s8 %v5398
    %v5400 = vlaneseq
    %v5401 = vshrl.u32 %v5400, 7
    %v5402 = vsub.s32 %v5399, %v5401
    %v5403 = vrot.slane %v5375, %v5402
    %v5404 = vcombine.high %v5382, %v5382
    %v5405 = vcombine.high %v5389, %v5389
    %v5406 = vcombine.high %v5396, %v5396
    %v5407 = vcombine.high %v5403, %v5403
    %v5408 = vcombine.high %v5342, %v5342
    %v5410 = vunpack.c.l.s4 1966171168
    %v5411 = vunpack.c.0.s8 %v5410
    %v5412 = vlaneseq
    %v5413 = vshrl.u32 %v5412, 7
    %v5414 = vsub.s32 %v5411, %v5413
    %v5415 = vrot.slane %v5342, %v5414
    %v5417 = vunpack.c.l.s4 1966171168
    %v5418 = vunpack.c.0.s8 %v5417
    %v5419 = vlaneseq
    %v5420 = vshrl.u32 %v5419, 7
    %v5421 = vsub.s32 %v5418, %v5420
    %v5422 = vrot.slane %v5408, %v5421
    %v5423 = vcombine.high %v5415, %v5415
    %v5424 = vcombine.high %v5422, %v5422
    %v5426 = vunpack.c.l.s4 1966171168
    %v5427 = vunpack.c.0.s8 %v5426
    %v5428 = vlaneseq
    %v5429 = vshrl.u32 %v5428, 7
    %v5430 = vsub.s32 %v5427, %v5429
    %v5431 = vrot.slane %v5415, %v5430
    %v5433 = vunpack.c.l.s4 1966171168
    %v5434 = vunpack.c.0.s8 %v5433
    %v5435 = vlaneseq
    %v5436 = vshrl.u32 %v5435, 7
    %v5437 = vsub.s32 %v5434, %v5436
    %v5438 = vrot.slane %v5422, %v5437
    %v5440 = vunpack.c.l.s4 1966171168
    %v5441 = vunpack.c.0.s8 %v5440
    %v5442 = vlaneseq
    %v5443 = vshrl.u32 %v5442, 7
    %v5444 = vsub.s32 %v5441, %v5443
    %v5445 = vrot.slane %v5423, %v5444
    %v5447 = vunpack.c.l.s4 1966171168
    %v5448 = vunpack.c.0.s8 %v5447
    %v5449 = vlaneseq
    %v5450 = vshrl.u32 %v5449, 7
    %v5451 = vsub.s32 %v5448, %v5450
    %v5452 = vrot.slane %v5424, %v5451
    %v5453 = vcombine.high %v5431, %v5431
    %v5454 = vcombine.high %v5438, %v5438
    %v5455 = vcombine.high %v5445, %v5445
    %v5456 = vcombine.high %v5452, %v5452
    %v5457 = vcombine.high %v5347, %v5347
    %v5459 = vunpack.c.l.s4 1966171168
    %v5460 = vunpack.c.0.s8 %v5459
    %v5461 = vlaneseq
    %v5462 = vshrl.u32 %v5461, 7
    %v5463 = vsub.s32 %v5460, %v5462
    %v5464 = vrot.slane %v5347, %v5463
    %v5466 = vunpack.c.l.s4 1966171168
    %v5467 = vunpack.c.0.s8 %v5466
    %v5468 = vlaneseq
    %v5469 = vshrl.u32 %v5468, 7
    %v5470 = vsub.s32 %v5467, %v5469
    %v5471 = vrot.slane %v5457, %v5470
    %v5472 = vcombine.high %v5464, %v5464
    %v5473 = vcombine.high %v5471, %v5471
    %v5475 = vunpack.c.l.s4 1966171168
    %v5476 = vunpack.c.0.s8 %v5475
    %v5477 = vlaneseq
    %v5478 = vshrl.u32 %v5477, 7
    %v5479 = vsub.s32 %v5476, %v5478
    %v5480 = vrot.slane %v5464, %v5479
    %v5482 = vunpack.c.l.s4 1966171168
    %v5483 = vunpack.c.0.s8 %v5482
    %v5484 = vlaneseq
    %v5485 = vshrl.u32 %v5484, 7
    %v5486 = vsub.s32 %v5483, %v5485
    %v5487 = vrot.slane %v5471, %v5486
    %v5489 = vunpack.c.l.s4 1966171168
    %v5490 = vunpack.c.0.s8 %v5489
    %v5491 = vlaneseq
    %v5492 = vshrl.u32 %v5491, 7
    %v5493 = vsub.s32 %v5490, %v5492
    %v5494 = vrot.slane %v5472, %v5493
    %v5496 = vunpack.c.l.s4 1966171168
    %v5497 = vunpack.c.0.s8 %v5496
    %v5498 = vlaneseq
    %v5499 = vshrl.u32 %v5498, 7
    %v5500 = vsub.s32 %v5497, %v5499
    %v5501 = vrot.slane %v5473, %v5500
    %v5502 = vcombine.high %v5480, %v5480
    %v5503 = vcombine.high %v5487, %v5487
    %v5504 = vcombine.high %v5494, %v5494
    %v5505 = vcombine.high %v5501, %v5501
    %v5506 = vcombine.high %v5352, %v5352
    %v5508 = vunpack.c.l.s4 1966171168
    %v5509 = vunpack.c.0.s8 %v5508
    %v5510 = vlaneseq
    %v5511 = vshrl.u32 %v5510, 7
    %v5512 = vsub.s32 %v5509, %v5511
    %v5513 = vrot.slane %v5352, %v5512
    %v5515 = vunpack.c.l.s4 1966171168
    %v5516 = vunpack.c.0.s8 %v5515
    %v5517 = vlaneseq
    %v5518 = vshrl.u32 %v5517, 7
    %v5519 = vsub.s32 %v5516, %v5518
    %v5520 = vrot.slane %v5506, %v5519
    %v5521 = vcombine.high %v5513, %v5513
    %v5522 = vcombine.high %v5520, %v5520
    %v5524 = vunpack.c.l.s4 1966171168
    %v5525 = vunpack.c.0.s8 %v5524
    %v5526 = vlaneseq
    %v5527 = vshrl.u32 %v5526, 7
    %v5528 = vsub.s32 %v5525, %v5527
    %v5529 = vrot.slane %v5513, %v5528
    %v5531 = vunpack.c.l.s4 1966171168
    %v5532 = vunpack.c.0.s8 %v5531
    %v5533 = vlaneseq
    %v5534 = vshrl.u32 %v5533, 7
    %v5535 = vsub.s32 %v5532, %v5534
    %v5536 = vrot.slane %v5520, %v5535
    %v5538 = vunpack.c.l.s4 1966171168
    %v5539 = vunpack.c.0.s8 %v5538
    %v5540 = vlaneseq
    %v5541 = vshrl.u32 %v5540, 7
    %v5542 = vsub.s32 %v5539, %v5541
    %v5543 = vrot.slane %v5521, %v5542
    %v5545 = vunpack.c.l.s4 1966171168
    %v5546 = vunpack.c.0.s8 %v5545
    %v5547 = vlaneseq
    %v5548 = vshrl.u32 %v5547, 7
    %v5549 = vsub.s32 %v5546, %v5548
    %v5550 = vrot.slane %v5522, %v5549
    %v5551 = vcombine.high %v5529, %v5529
    %v5552 = vcombine.high %v5536, %v5536
    %v5553 = vcombine.high %v5543, %v5543
    %v5554 = vcombine.high %v5550, %v5550
    %vm5587 = vcmask 24576
    %5588 = vst.msk [vmem:[#allocation2] sm:$0x1] %vm5587, %v5382
    %5589 = vst.msk [vmem:[#allocation2 + $0x2] sm:$0x1] %vm5587, %v5396
    %5590 = vst.msk [vmem:[#allocation2 + $0x4] sm:$0x1] %vm5587, %v5404
    %5591 = vst.msk [vmem:[#allocation2 + $0x6] sm:$0x1] %vm5587, %v5406
    %5592 = vst.msk [vmem:[#allocation2 + $0x8] sm:$0x1] %vm5587, %v5389
    %5593 = vst.msk [vmem:[#allocation2 + $0xa] sm:$0x1] %vm5587, %v5403
    %5594 = vst.msk [vmem:[#allocation2 + $0xc] sm:$0x1] %vm5587, %v5405
    %5595 = vst.msk [vmem:[#allocation2 + $0xe] sm:$0x1] %vm5587, %v5407
    %5596 = vst.msk [vmem:[#allocation2 + $0x10] sm:$0x1] %vm5587, %v5431
    %5597 = vst.msk [vmem:[#allocation2 + $0x12] sm:$0x1] %vm5587, %v5445
    %5598 = vst.msk [vmem:[#allocation2 + $0x14] sm:$0x1] %vm5587, %v5453
    %5599 = vst.msk [vmem:[#allocation2 + $0x16] sm:$0x1] %vm5587, %v5455
    %5600 = vst.msk [vmem:[#allocation2 + $0x18] sm:$0x1] %vm5587, %v5438
    %5601 = vst.msk [vmem:[#allocation2 + $0x1a] sm:$0x1] %vm5587, %v5452
    %5602 = vst.msk [vmem:[#allocation2 + $0x1c] sm:$0x1] %vm5587, %v5454
    %5603 = vst.msk [vmem:[#allocation2 + $0x1e] sm:$0x1] %vm5587, %v5456
    %5604 = vst.msk [vmem:[#allocation2 + $0x20] sm:$0x1] %vm5587, %v5480
    %5605 = vst.msk [vmem:[#allocation2 + $0x22] sm:$0x1] %vm5587, %v5494
    %5606 = vst.msk [vmem:[#allocation2 + $0x24] sm:$0x1] %vm5587, %v5502
    %5607 = vst.msk [vmem:[#allocation2 + $0x26] sm:$0x1] %vm5587, %v5504
    %5608 = vst.msk [vmem:[#allocation2 + $0x28] sm:$0x1] %vm5587, %v5487
    %5609 = vst.msk [vmem:[#allocation2 + $0x2a] sm:$0x1] %vm5587, %v5501
    %5610 = vst.msk [vmem:[#allocation2 + $0x2c] sm:$0x1] %vm5587, %v5503
    %5611 = vst.msk [vmem:[#allocation2 + $0x2e] sm:$0x1] %vm5587, %v5505
    %5612 = vst.msk [vmem:[#allocation2 + $0x30] sm:$0x1] %vm5587, %v5529
    %5613 = vst.msk [vmem:[#allocation2 + $0x32] sm:$0x1] %vm5587, %v5543
    %5614 = vst.msk [vmem:[#allocation2 + $0x34] sm:$0x1] %vm5587, %v5551
    %5615 = vst.msk [vmem:[#allocation2 + $0x36] sm:$0x1] %vm5587, %v5553
    %5616 = vst.msk [vmem:[#allocation2 + $0x38] sm:$0x1] %vm5587, %v5536
    %5617 = vst.msk [vmem:[#allocation2 + $0x3a] sm:$0x1] %vm5587, %v5550
    %5618 = vst.msk [vmem:[#allocation2 + $0x3c] sm:$0x1] %vm5587, %v5552
    %5619 = vst.msk [vmem:[#allocation2 + $0x3e] sm:$0x1] %vm5587, %v5554
    %v5620 = vlaneseq
    %v5621 = vshrl.u32 %v5620, 7
    %v5622 = vsub.s32 0, %v5621
    %v5623 = vrot.slane %v5382, %v5622
    %v5624 = vlaneseq
    %v5625 = vshrl.u32 %v5624, 7
    %v5626 = vsub.s32 0, %v5625
    %v5627 = vrot.slane %v5396, %v5626
    %v5628 = vlaneseq
    %v5629 = vshrl.u32 %v5628, 7
    %v5630 = vsub.s32 0, %v5629
    %v5631 = vrot.slane %v5404, %v5630
    %v5632 = vlaneseq
    %v5633 = vshrl.u32 %v5632, 7
    %v5634 = vsub.s32 0, %v5633
    %v5635 = vrot.slane %v5406, %v5634
    %v5636 = vlaneseq
    %v5637 = vshrl.u32 %v5636, 7
    %v5638 = vsub.s32 0, %v5637
    %v5639 = vrot.slane %v5389, %v5638
    %v5640 = vlaneseq
    %v5641 = vshrl.u32 %v5640, 7
    %v5642 = vsub.s32 0, %v5641
    %v5643 = vrot.slane %v5403, %v5642
    %v5644 = vlaneseq
    %v5645 = vshrl.u32 %v5644, 7
    %v5646 = vsub.s32 0, %v5645
    %v5647 = vrot.slane %v5405, %v5646
    %v5648 = vlaneseq
    %v5649 = vshrl.u32 %v5648, 7
    %v5650 = vsub.s32 0, %v5649
    %v5651 = vrot.slane %v5407, %v5650
    %v5652 = vlaneseq
    %v5653 = vshrl.u32 %v5652, 7
    %v5654 = vsub.s32 0, %v5653
    %v5655 = vrot.slane %v5431, %v5654
    %v5656 = vlaneseq
    %v5657 = vshrl.u32 %v5656, 7
    %v5658 = vsub.s32 0, %v5657
    %v5659 = vrot.slane %v5445, %v5658
    %v5660 = vlaneseq
    %v5661 = vshrl.u32 %v5660, 7
    %v5662 = vsub.s32 0, %v5661
    %v5663 = vrot.slane %v5453, %v5662
    %v5664 = vlaneseq
    %v5665 = vshrl.u32 %v5664, 7
    %v5666 = vsub.s32 0, %v5665
    %v5667 = vrot.slane %v5455, %v5666
    %v5668 = vlaneseq
    %v5669 = vshrl.u32 %v5668, 7
    %v5670 = vsub.s32 0, %v5669
    %v5671 = vrot.slane %v5438, %v5670
    %v5672 = vlaneseq
    %v5673 = vshrl.u32 %v5672, 7
    %v5674 = vsub.s32 0, %v5673
    %v5675 = vrot.slane %v5452, %v5674
    %v5676 = vlaneseq
    %v5677 = vshrl.u32 %v5676, 7
    %v5678 = vsub.s32 0, %v5677
    %v5679 = vrot.slane %v5454, %v5678
    %v5680 = vlaneseq
    %v5681 = vshrl.u32 %v5680, 7
    %v5682 = vsub.s32 0, %v5681
    %v5683 = vrot.slane %v5456, %v5682
    %v5684 = vlaneseq
    %v5685 = vshrl.u32 %v5684, 7
    %v5686 = vsub.s32 0, %v5685
    %v5687 = vrot.slane %v5480, %v5686
    %v5688 = vlaneseq
    %v5689 = vshrl.u32 %v5688, 7
    %v5690 = vsub.s32 0, %v5689
    %v5691 = vrot.slane %v5494, %v5690
    %v5692 = vlaneseq
    %v5693 = vshrl.u32 %v5692, 7
    %v5694 = vsub.s32 0, %v5693
    %v5695 = vrot.slane %v5502, %v5694
    %v5696 = vlaneseq
    %v5697 = vshrl.u32 %v5696, 7
    %v5698 = vsub.s32 0, %v5697
    %v5699 = vrot.slane %v5504, %v5698
    %v5700 = vlaneseq
    %v5701 = vshrl.u32 %v5700, 7
    %v5702 = vsub.s32 0, %v5701
    %v5703 = vrot.slane %v5487, %v5702
    %v5704 = vlaneseq
    %v5705 = vshrl.u32 %v5704, 7
    %v5706 = vsub.s32 0, %v5705
    %v5707 = vrot.slane %v5501, %v5706
    %v5708 = vlaneseq
    %v5709 = vshrl.u32 %v5708, 7
    %v5710 = vsub.s32 0, %v5709
    %v5711 = vrot.slane %v5503, %v5710
    %v5712 = vlaneseq
    %v5713 = vshrl.u32 %v5712, 7
    %v5714 = vsub.s32 0, %v5713
    %v5715 = vrot.slane %v5505, %v5714
    %v5716 = vlaneseq
    %v5717 = vshrl.u32 %v5716, 7
    %v5718 = vsub.s32 0, %v5717
    %v5719 = vrot.slane %v5529, %v5718
    %v5720 = vlaneseq
    %v5721 = vshrl.u32 %v5720, 7
    %v5722 = vsub.s32 0, %v5721
    %v5723 = vrot.slane %v5543, %v5722
    %v5724 = vlaneseq
    %v5725 = vshrl.u32 %v5724, 7
    %v5726 = vsub.s32 0, %v5725
    %v5727 = vrot.slane %v5551, %v5726
    %v5728 = vlaneseq
    %v5729 = vshrl.u32 %v5728, 7
    %v5730 = vsub.s32 0, %v5729
    %v5731 = vrot.slane %v5553, %v5730
    %v5732 = vlaneseq
    %v5733 = vshrl.u32 %v5732, 7
    %v5734 = vsub.s32 0, %v5733
    %v5735 = vrot.slane %v5536, %v5734
    %v5736 = vlaneseq
    %v5737 = vshrl.u32 %v5736, 7
    %v5738 = vsub.s32 0, %v5737
    %v5739 = vrot.slane %v5550, %v5738
    %v5740 = vlaneseq
    %v5741 = vshrl.u32 %v5740, 7
    %v5742 = vsub.s32 0, %v5741
    %v5743 = vrot.slane %v5552, %v5742
    %v5744 = vlaneseq
    %v5745 = vshrl.u32 %v5744, 7
    %v5746 = vsub.s32 0, %v5745
    %v5747 = vrot.slane %v5554, %v5746
    %5748 = vrot.lane.b32.xlu0 %v5623, 124
    %v5749 = vpop.permute.xlu0 %5748
    %5750 = vrot.lane.b32.xlu0 %v5627, 124
    %v5751 = vpop.permute.xlu0 %5750
    %5752 = vrot.lane.b32.xlu0 %v5631, 124
    %v5753 = vpop.permute.xlu0 %5752
    %5754 = vrot.lane.b32.xlu0 %v5635, 124
    %v5755 = vpop.permute.xlu0 %5754
    %5756 = vrot.lane.b32.xlu0 %v5639, 124
    %v5757 = vpop.permute.xlu0 %5756
    %5758 = vrot.lane.b32.xlu0 %v5643, 124
    %v5759 = vpop.permute.xlu0 %5758
    %5760 = vrot.lane.b32.xlu0 %v5647, 124
    %v5761 = vpop.permute.xlu0 %5760
    %5762 = vrot.lane.b32.xlu0 %v5651, 124
    %v5763 = vpop.permute.xlu0 %5762
    %5764 = vrot.lane.b32.xlu0 %v5655, 124
    %v5765 = vpop.permute.xlu0 %5764
    %5766 = vrot.lane.b32.xlu0 %v5659, 124
    %v5767 = vpop.permute.xlu0 %5766
    %5768 = vrot.lane.b32.xlu0 %v5663, 124
    %v5769 = vpop.permute.xlu0 %5768
    %5770 = vrot.lane.b32.xlu0 %v5667, 124
    %v5771 = vpop.permute.xlu0 %5770
    %5772 = vrot.lane.b32.xlu0 %v5671, 124
    %v5773 = vpop.permute.xlu0 %5772
    %5774 = vrot.lane.b32.xlu0 %v5675, 124
    %v5775 = vpop.permute.xlu0 %5774
    %5776 = vrot.lane.b32.xlu0 %v5679, 124
    %v5777 = vpop.permute.xlu0 %5776
    %5778 = vrot.lane.b32.xlu0 %v5683, 124
    %v5779 = vpop.permute.xlu0 %5778
    %5780 = vrot.lane.b32.xlu0 %v5687, 124
    %v5781 = vpop.permute.xlu0 %5780
    %5782 = vrot.lane.b32.xlu0 %v5691, 124
    %v5783 = vpop.permute.xlu0 %5782
    %5784 = vrot.lane.b32.xlu0 %v5695, 124
    %v5785 = vpop.permute.xlu0 %5784
    %5786 = vrot.lane.b32.xlu0 %v5699, 124
    %v5787 = vpop.permute.xlu0 %5786
    %5788 = vrot.lane.b32.xlu0 %v5703, 124
    %v5789 = vpop.permute.xlu0 %5788
    %5790 = vrot.lane.b32.xlu0 %v5707, 124
    %v5791 = vpop.permute.xlu0 %5790
    %5792 = vrot.lane.b32.xlu0 %v5711, 124
    %v5793 = vpop.permute.xlu0 %5792
    %5794 = vrot.lane.b32.xlu0 %v5715, 124
    %v5795 = vpop.permute.xlu0 %5794
    %5796 = vrot.lane.b32.xlu0 %v5719, 124
    %v5797 = vpop.permute.xlu0 %5796
    %5798 = vrot.lane.b32.xlu0 %v5723, 124
    %v5799 = vpop.permute.xlu0 %5798
    %5800 = vrot.lane.b32.xlu0 %v5727, 124
    %v5801 = vpop.permute.xlu0 %5800
    %5802 = vrot.lane.b32.xlu0 %v5731, 124
    %v5803 = vpop.permute.xlu0 %5802
    %5804 = vrot.lane.b32.xlu0 %v5735, 124
    %v5805 = vpop.permute.xlu0 %5804
    %5806 = vrot.lane.b32.xlu0 %v5739, 124
    %v5807 = vpop.permute.xlu0 %5806
    %5808 = vrot.lane.b32.xlu0 %v5743, 124
    %v5809 = vpop.permute.xlu0 %5808
    %5810 = vrot.lane.b32.xlu0 %v5747, 124
    %v5811 = vpop.permute.xlu0 %5810
    %5844 = vst.msk [vmem:[#allocation2 + $0x1] sm:$0x1] %vm5587, %v5749
    %5845 = vst.msk [vmem:[#allocation2 + $0x3] sm:$0x1] %vm5587, %v5751
    %5846 = vst.msk [vmem:[#allocation2 + $0x5] sm:$0x1] %vm5587, %v5753
    %5847 = vst.msk [vmem:[#allocation2 + $0x7] sm:$0x1] %vm5587, %v5755
    %5848 = vst.msk [vmem:[#allocation2 + $0x9] sm:$0x1] %vm5587, %v5757
    %5849 = vst.msk [vmem:[#allocation2 + $0xb] sm:$0x1] %vm5587, %v5759
    %5850 = vst.msk [vmem:[#allocation2 + $0xd] sm:$0x1] %vm5587, %v5761
    %5851 = vst.msk [vmem:[#allocation2 + $0xf] sm:$0x1] %vm5587, %v5763
    %5852 = vst.msk [vmem:[#allocation2 + $0x11] sm:$0x1] %vm5587, %v5765
    %5853 = vst.msk [vmem:[#allocation2 + $0x13] sm:$0x1] %vm5587, %v5767
    %5854 = vst.msk [vmem:[#allocation2 + $0x15] sm:$0x1] %vm5587, %v5769
    %5855 = vst.msk [vmem:[#allocation2 + $0x17] sm:$0x1] %vm5587, %v5771
    %5856 = vst.msk [vmem:[#allocation2 + $0x19] sm:$0x1] %vm5587, %v5773
    %5857 = vst.msk [vmem:[#allocation2 + $0x1b] sm:$0x1] %vm5587, %v5775
    %5858 = vst.msk [vmem:[#allocation2 + $0x1d] sm:$0x1] %vm5587, %v5777
    %5859 = vst.msk [vmem:[#allocation2 + $0x1f] sm:$0x1] %vm5587, %v5779
    %5860 = vst.msk [vmem:[#allocation2 + $0x21] sm:$0x1] %vm5587, %v5781
    %5861 = vst.msk [vmem:[#allocation2 + $0x23] sm:$0x1] %vm5587, %v5783
    %5862 = vst.msk [vmem:[#allocation2 + $0x25] sm:$0x1] %vm5587, %v5785
    %5863 = vst.msk [vmem:[#allocation2 + $0x27] sm:$0x1] %vm5587, %v5787
    %5864 = vst.msk [vmem:[#allocation2 + $0x29] sm:$0x1] %vm5587, %v5789
    %5865 = vst.msk [vmem:[#allocation2 + $0x2b] sm:$0x1] %vm5587, %v5791
    %5866 = vst.msk [vmem:[#allocation2 + $0x2d] sm:$0x1] %vm5587, %v5793
    %5867 = vst.msk [vmem:[#allocation2 + $0x2f] sm:$0x1] %vm5587, %v5795
    %5868 = vst.msk [vmem:[#allocation2 + $0x31] sm:$0x1] %vm5587, %v5797
    %5869 = vst.msk [vmem:[#allocation2 + $0x33] sm:$0x1] %vm5587, %v5799
    %5870 = vst.msk [vmem:[#allocation2 + $0x35] sm:$0x1] %vm5587, %v5801
    %5871 = vst.msk [vmem:[#allocation2 + $0x37] sm:$0x1] %vm5587, %v5803
    %5872 = vst.msk [vmem:[#allocation2 + $0x39] sm:$0x1] %vm5587, %v5805
    %5873 = vst.msk [vmem:[#allocation2 + $0x3b] sm:$0x1] %vm5587, %v5807
    %5874 = vst.msk [vmem:[#allocation2 + $0x3d] sm:$0x1] %vm5587, %v5809
    %5875 = vst.msk [vmem:[#allocation2 + $0x3f] sm:$0x1] %vm5587, %v5811
    %v5876 = vld [vmem:[#allocation2] sm:$0x3]
    %v5877 = vld [vmem:[#allocation2 + $0x2] sm:$0x3]
    %v5878 = vld [vmem:[#allocation2 + $0x4] sm:$0x3]
    %v5879 = vld [vmem:[#allocation2 + $0x6] sm:$0x3]
    %v5880 = vld [vmem:[#allocation2 + $0x8] sm:$0x3]
    %v5881 = vld [vmem:[#allocation2 + $0xa] sm:$0x3]
    %v5882 = vld [vmem:[#allocation2 + $0xc] sm:$0x3]
    %v5883 = vld [vmem:[#allocation2 + $0xe] sm:$0x3]
    %v5884 = vld [vmem:[#allocation2 + $0x10] sm:$0x3]
    %v5885 = vld [vmem:[#allocation2 + $0x12] sm:$0x3]
    %v5886 = vld [vmem:[#allocation2 + $0x14] sm:$0x3]
    %v5887 = vld [vmem:[#allocation2 + $0x16] sm:$0x3]
    %v5888 = vld [vmem:[#allocation2 + $0x18] sm:$0x3]
    %v5889 = vld [vmem:[#allocation2 + $0x1a] sm:$0x3]
    %v5890 = vld [vmem:[#allocation2 + $0x1c] sm:$0x3]
    %v5891 = vld [vmem:[#allocation2 + $0x1e] sm:$0x3]
    %v5892 = vld [vmem:[#allocation2 + $0x20] sm:$0x3]
    %v5893 = vld [vmem:[#allocation2 + $0x22] sm:$0x3]
    %v5894 = vld [vmem:[#allocation2 + $0x24] sm:$0x3]
    %v5895 = vld [vmem:[#allocation2 + $0x26] sm:$0x3]
    %v5896 = vld [vmem:[#allocation2 + $0x28] sm:$0x3]
    %v5897 = vld [vmem:[#allocation2 + $0x2a] sm:$0x3]
    %v5898 = vld [vmem:[#allocation2 + $0x2c] sm:$0x3]
    %v5899 = vld [vmem:[#allocation2 + $0x2e] sm:$0x3]
    %v5900 = vld [vmem:[#allocation2 + $0x30] sm:$0x3]
    %v5901 = vld [vmem:[#allocation2 + $0x32] sm:$0x3]
    %v5902 = vld [vmem:[#allocation2 + $0x34] sm:$0x3]
    %v5903 = vld [vmem:[#allocation2 + $0x36] sm:$0x3]
    %v5904 = vld [vmem:[#allocation2 + $0x38] sm:$0x3]
    %v5905 = vld [vmem:[#allocation2 + $0x3a] sm:$0x3]
    %v5906 = vld [vmem:[#allocation2 + $0x3c] sm:$0x3]
    %v5907 = vld [vmem:[#allocation2 + $0x3e] sm:$0x3]
    %v5940 = vcombine.low %v5876, %v5877
    %v5941 = vcombine.low %v5878, %v5879
    %v5943 = vunpack.c.l.s4 1983009808
    %v5944 = vunpack.c.0.s8 %v5943
    %v5945 = vlaneseq
    %v5946 = vshrl.u32 %v5945, 7
    %v5947 = vsub.s32 %v5944, %v5946
    %v5948 = vrot.slane %v5940, %v5947
    %v5950 = vunpack.c.l.s4 1983009808
    %v5951 = vunpack.c.0.s8 %v5950
    %v5952 = vlaneseq
    %v5953 = vshrl.u32 %v5952, 7
    %v5954 = vsub.s32 %v5951, %v5953
    %v5955 = vrot.slane %v5941, %v5954
    %v5956 = vcombine.low %v5948, %v5955
    %v5957 = vcombine.low %v5880, %v5881
    %v5958 = vcombine.low %v5882, %v5883
    %v5960 = vunpack.c.l.s4 1983009808
    %v5961 = vunpack.c.0.s8 %v5960
    %v5962 = vlaneseq
    %v5963 = vshrl.u32 %v5962, 7
    %v5964 = vsub.s32 %v5961, %v5963
    %v5965 = vrot.slane %v5957, %v5964
    %v5967 = vunpack.c.l.s4 1983009808
    %v5968 = vunpack.c.0.s8 %v5967
    %v5969 = vlaneseq
    %v5970 = vshrl.u32 %v5969, 7
    %v5971 = vsub.s32 %v5968, %v5970
    %v5972 = vrot.slane %v5958, %v5971
    %v5973 = vcombine.low %v5965, %v5972
    %v5974 = vcombine.low %v5884, %v5885
    %v5975 = vcombine.low %v5886, %v5887
    %v5977 = vunpack.c.l.s4 1983009808
    %v5978 = vunpack.c.0.s8 %v5977
    %v5979 = vlaneseq
    %v5980 = vshrl.u32 %v5979, 7
    %v5981 = vsub.s32 %v5978, %v5980
    %v5982 = vrot.slane %v5974, %v5981
    %v5984 = vunpack.c.l.s4 1983009808
    %v5985 = vunpack.c.0.s8 %v5984
    %v5986 = vlaneseq
    %v5987 = vshrl.u32 %v5986, 7
    %v5988 = vsub.s32 %v5985, %v5987
    %v5989 = vrot.slane %v5975, %v5988
    %v5990 = vcombine.low %v5982, %v5989
    %v5991 = vcombine.low %v5888, %v5889
    %v5992 = vcombine.low %v5890, %v5891
    %v5994 = vunpack.c.l.s4 1983009808
    %v5995 = vunpack.c.0.s8 %v5994
    %v5996 = vlaneseq
    %v5997 = vshrl.u32 %v5996, 7
    %v5998 = vsub.s32 %v5995, %v5997
    %v5999 = vrot.slane %v5991, %v5998
    %v6001 = vunpack.c.l.s4 1983009808
    %v6002 = vunpack.c.0.s8 %v6001
    %v6003 = vlaneseq
    %v6004 = vshrl.u32 %v6003, 7
    %v6005 = vsub.s32 %v6002, %v6004
    %v6006 = vrot.slane %v5992, %v6005
    %v6007 = vcombine.low %v5999, %v6006
    %v6008 = vcombine.low %v5892, %v5893
    %v6009 = vcombine.low %v5894, %v5895
    %v6011 = vunpack.c.l.s4 1983009808
    %v6012 = vunpack.c.0.s8 %v6011
    %v6013 = vlaneseq
    %v6014 = vshrl.u32 %v6013, 7
    %v6015 = vsub.s32 %v6012, %v6014
    %v6016 = vrot.slane %v6008, %v6015
    %v6018 = vunpack.c.l.s4 1983009808
    %v6019 = vunpack.c.0.s8 %v6018
    %v6020 = vlaneseq
    %v6021 = vshrl.u32 %v6020, 7
    %v6022 = vsub.s32 %v6019, %v6021
    %v6023 = vrot.slane %v6009, %v6022
    %v6024 = vcombine.low %v6016, %v6023
    %v6025 = vcombine.low %v5896, %v5897
    %v6026 = vcombine.low %v5898, %v5899
    %v6028 = vunpack.c.l.s4 1983009808
    %v6029 = vunpack.c.0.s8 %v6028
    %v6030 = vlaneseq
    %v6031 = vshrl.u32 %v6030, 7
    %v6032 = vsub.s32 %v6029, %v6031
    %v6033 = vrot.slane %v6025, %v6032
    %v6035 = vunpack.c.l.s4 1983009808
    %v6036 = vunpack.c.0.s8 %v6035
    %v6037 = vlaneseq
    %v6038 = vshrl.u32 %v6037, 7
    %v6039 = vsub.s32 %v6036, %v6038
    %v6040 = vrot.slane %v6026, %v6039
    %v6041 = vcombine.low %v6033, %v6040
    %v6042 = vcombine.low %v5900, %v5901
    %v6043 = vcombine.low %v5902, %v5903
    %v6045 = vunpack.c.l.s4 1983009808
    %v6046 = vunpack.c.0.s8 %v6045
    %v6047 = vlaneseq
    %v6048 = vshrl.u32 %v6047, 7
    %v6049 = vsub.s32 %v6046, %v6048
    %v6050 = vrot.slane %v6042, %v6049
    %v6052 = vunpack.c.l.s4 1983009808
    %v6053 = vunpack.c.0.s8 %v6052
    %v6054 = vlaneseq
    %v6055 = vshrl.u32 %v6054, 7
    %v6056 = vsub.s32 %v6053, %v6055
    %v6057 = vrot.slane %v6043, %v6056
    %v6058 = vcombine.low %v6050, %v6057
    %v6059 = vcombine.low %v5904, %v5905
    %v6060 = vcombine.low %v5906, %v5907
    %v6062 = vunpack.c.l.s4 1983009808
    %v6063 = vunpack.c.0.s8 %v6062
    %v6064 = vlaneseq
    %v6065 = vshrl.u32 %v6064, 7
    %v6066 = vsub.s32 %v6063, %v6065
    %v6067 = vrot.slane %v6059, %v6066
    %v6069 = vunpack.c.l.s4 1983009808
    %v6070 = vunpack.c.0.s8 %v6069
    %v6071 = vlaneseq
    %v6072 = vshrl.u32 %v6071, 7
    %v6073 = vsub.s32 %v6070, %v6072
    %v6074 = vrot.slane %v6060, %v6073
    %v6075 = vcombine.low %v6067, %v6074
    %6084 = vxpose.xlu0.b32.start [1/16] %v5956, 128
    %6085 = vxpose.xlu0.b32.cont [2/16] %v5973, 128
    %6086 = vxpose.xlu0.b32.cont [3/16] %v5990, 128
    %6087 = vxpose.xlu0.b32.cont [4/16] %v6007, 128
    %6088 = vxpose.xlu0.b32.cont [5/16] 0.0, 128
    %6089 = vxpose.xlu0.b32.cont [6/16] 0.0, 128
    %6090 = vxpose.xlu0.b32.cont [7/16] 0.0, 128
    %6091 = vxpose.xlu0.b32.cont [8/16] 0.0, 128
    %6092 = vxpose.xlu0.b32.cont [9/16] 0.0, 128
    %6093 = vxpose.xlu0.b32.cont [10/16] 0.0, 128
    %6094 = vxpose.xlu0.b32.cont [11/16] 0.0, 128
    %6095 = vxpose.xlu0.b32.cont [12/16] 0.0, 128
    %6096 = vxpose.xlu0.b32.cont [13/16] 0.0, 128
    %6097 = vxpose.xlu0.b32.cont [14/16] 0.0, 128
    %6098 = vxpose.xlu0.b32.cont [15/16] 0.0, 128
    %6099 = vxpose.xlu0.b32.end [16/16] 0.0, 128
    %v6100 = vpop.trf.xlu0
    %v6101 = vpop.trf.xlu0
    %v6102 = vpop.trf.xlu0
    %v6103 = vpop.trf.xlu0
    %v6104 = vpop.trf.xlu0
    %v6105 = vpop.trf.xlu0
    %v6106 = vpop.trf.xlu0
    %v6107 = vpop.trf.xlu0
    %v6108 = vpop.trf.xlu0
    %v6109 = vpop.trf.xlu0
    %v6110 = vpop.trf.xlu0
    %v6111 = vpop.trf.xlu0
    %v6112 = vpop.trf.xlu0
    %v6113 = vpop.trf.xlu0
    %v6114 = vpop.trf.xlu0
    %v6115 = vpop.trf.xlu0
    %6116 = vxpose.xlu0.b32.start [1/16] %v6024, 128
    %6117 = vxpose.xlu0.b32.cont [2/16] %v6041, 128
    %6118 = vxpose.xlu0.b32.cont [3/16] %v6058, 128
    %6119 = vxpose.xlu0.b32.cont [4/16] %v6075, 128
    %6120 = vxpose.xlu0.b32.cont [5/16] 0.0, 128
    %6121 = vxpose.xlu0.b32.cont [6/16] 0.0, 128
    %6122 = vxpose.xlu0.b32.cont [7/16] 0.0, 128
    %6123 = vxpose.xlu0.b32.cont [8/16] 0.0, 128
    %6124 = vxpose.xlu0.b32.cont [9/16] 0.0, 128
    %6125 = vxpose.xlu0.b32.cont [10/16] 0.0, 128
    %6126 = vxpose.xlu0.b32.cont [11/16] 0.0, 128
    %6127 = vxpose.xlu0.b32.cont [12/16] 0.0, 128
    %6128 = vxpose.xlu0.b32.cont [13/16] 0.0, 128
    %6129 = vxpose.xlu0.b32.cont [14/16] 0.0, 128
    %6130 = vxpose.xlu0.b32.cont [15/16] 0.0, 128
    %6131 = vxpose.xlu0.b32.end [16/16] 0.0, 128
    %v6132 = vpop.trf.xlu0
    %v6133 = vpop.trf.xlu0
    %v6134 = vpop.trf.xlu0
    %v6135 = vpop.trf.xlu0
    %v6136 = vpop.trf.xlu0
    %v6137 = vpop.trf.xlu0
    %v6138 = vpop.trf.xlu0
    %v6139 = vpop.trf.xlu0
    %v6140 = vpop.trf.xlu0
    %v6141 = vpop.trf.xlu0
    %v6142 = vpop.trf.xlu0
    %v6143 = vpop.trf.xlu0
    %v6144 = vpop.trf.xlu0
    %v6145 = vpop.trf.xlu0
    %v6146 = vpop.trf.xlu0
    %v6147 = vpop.trf.xlu0
    %v6148 = vand.u32 2147483647, %v6100
    %vm6149 = vcmp.le.f32.partialorder %v6148, 0.7853982
    %vm6150 = vcmp.lt.s32.totalorder %v6100, 0
    %v6151 = vand.u32 %v6100, 2139095040
    %v6152 = vshrl.u32 %v6151, 23
    %v6153 = vsub.s32 %v6152, 127
    %v6154 = vand.u32 2147483647, %v6100
    %v6155 = vand.u32 %v6154, 8388607
    %v6156 = vor.u32 %v6155, 8388608
    %v6157 = vsub.s32 0, %v6156
    %v6158 = vadd.s32 %v6153, 1
    %vm6159 = vcmp.gt.s32.totalorder %v6158, 0
    %v6160 = vsel %vm6159, %v6158, 0
    %v6161 = vshrl.u32 %v6160, 5
    %v6162 = vand.u32 %v6160, 31
    %v6163 = vsub.s32 32, %v6162
    %v6164 = vshrl.u32 683565275, %v6163
    %v6165 = vshll.u32 683565275, %v6162
    %v6166 = vshrl.u32 2475754826, %v6163
    %v6167 = vor.u32 %v6165, %v6166
    %v6168 = vshll.u32 2475754826, %v6162
    %v6169 = vshrl.u32 2131351028, %v6163
    %v6170 = vor.u32 %v6168, %v6169
    %v6171 = vshll.u32 2131351028, %v6162
    %v6172 = vshrl.u32 2102212464, %v6163
    %v6173 = vor.u32 %v6171, %v6172
    %v6174 = vshll.u32 2102212464, %v6162
    %v6175 = vshrl.u32 920167782, %v6163
    %v6176 = vor.u32 %v6174, %v6175
    %v6177 = vshll.u32 920167782, %v6162
    %v6178 = vshrl.u32 1326507024, %v6163
    %v6179 = vor.u32 %v6177, %v6178
    %vm6180 = vcmp.lt.s32.totalorder %v6161, 1
    %vm6181 = vcmp.lt.s32.totalorder %v6161, 2
    %vm6182 = vcmp.lt.s32.totalorder %v6161, 3
    %vm6183 = vcmp.lt.s32.totalorder %v6161, 4
    %v6184 = vsel %vm6180, %v6164, %v6167
    %v6185 = vsel %vm6183, %v6173, 2102212464
    %v6186 = vsel %vm6182, %v6170, %v6185
    %v6187 = vsel %vm6181, %v6184, %v6186
    %v6188 = vsel %vm6180, %v6167, %v6170
    %v6189 = vsel %vm6183, %v6176, 920167782
    %v6190 = vsel %vm6182, %v6173, %v6189
    %v6191 = vsel %vm6181, %v6188, %v6190
    %v6192 = vsel %vm6180, %v6170, %v6173
    %v6193 = vsel %vm6183, %v6179, 1326507024
    %v6194 = vsel %vm6182, %v6176, %v6193
    %v6195 = vsel %vm6181, %v6192, %v6194
    %v6196 = vshll.u32 %v6156, 8
    %v6197 = vmul.u32.u64.compose %v6196, %v6195
    %v6198 = vextract.low.u32 %v6197
    %v6199 = vextract.high.u32 %v6197
    %v6200 = vmul.u32.u64.compose %v6196, %v6191
    %v6201 = vextract.low.u32 %v6200
    %v6202 = vextract.high.u32 %v6200
    %v6203 = vmul.u32 %v6196, %v6187
    %v6204 = vadd.s32 %v6199, %v6201
    %vm6205 = vc.u32 %v6199, %v6201
    %v6206 = vadd.s32 %v6202, 1
    %v6207 = vsel %vm6205, %v6206, %v6202
    %v6208 = vadd.s32 %v6203, %v6207
    %v6209 = vadd.s32 %v6208, 536870912
    %v6210 = vshrl.u32 %v6209, 30
    %v6211 = vshll.u32 %v6210, 30
    %v6212 = vsub.s32 %v6208, %v6211
    %vm6213 = vcmp.lt.s32.totalorder %v6212, 0
    %v6214 = vsub.s32 0, %v6212
    %v6215 = vsel %vm6213, %v6214, %v6212
    %v6216 = vclz %v6215
    %v6217 = vsub.s32 %v6216, 2
    %vm6218 = vcmp.gt.s32.totalorder 0, %v6217
    %v6219 = vsel %vm6218, 0, %v6217
    %v6220 = vsub.s32 32, %v6219
    %v6221 = vshll.u32 %v6212, %v6219
    %v6222 = vshrl.u32 %v6204, %v6220
    %v6223 = vor.u32 %v6221, %v6222
    %v6224 = vsub.s32 4294967266, %v6219
    %v6225 = vadd.s32 %v6224, 127
    %v6226 = vshll.u32 %v6225, 23
    %v6227 = vor.u32 4788187, %v6226
    %v6228 = vand.u32 2147483647, %v6227
    %v6230 = vcvt.s32.f32 %v6223
    %v6231 = vmul.f32 %v6230, %v6228
    %v6232 = vxor.u32 %v6231, 2147483648
    %v6233 = vsel %vm6150, %v6232, %v6231
    %v6234 = vsub.s32 4, %v6210
    %v6235 = vsel %vm6150, %v6234, %v6210
    %v6236 = vsel %vm6149, %v6100, %v6233
    %v6237 = vsel %vm6149, 0, %v6235
    %v6238 = vcosq.f32.pop %v6236
    %v6239 = vsinq.f32.pop %v6236
    %vm6240 = vweird.f32 %v6100
    %v6241 = vand.u32 %v6237, 3
    %vm6242 = vcmp.lt.s32.totalorder %v6241, 2
    %vm6243 = vcmp.eq.s32.totalorder %v6241, 0
    %v6244 = vxor.u32 %v6239, 2147483648
    %v6245 = vsel %vm6243, %v6238, %v6244
    %vm6246 = vcmp.eq.s32.totalorder %v6241, 2
    %v6247 = vxor.u32 %v6238, 2147483648
    %v6248 = vsel %vm6246, %v6247, %v6239
    %v6249 = vsel %vm6242, %v6245, %v6248
    %v6250 = vsel %vm6240, nan, %v6249
    %v6251 = vand.u32 2147483647, %v6132
    %vm6252 = vcmp.le.f32.partialorder %v6251, 0.7853982
    %vm6253 = vcmp.lt.s32.totalorder %v6132, 0
    %v6254 = vand.u32 %v6132, 2139095040
    %v6255 = vshrl.u32 %v6254, 23
    %v6256 = vsub.s32 %v6255, 127
    %v6257 = vand.u32 2147483647, %v6132
    %v6258 = vand.u32 %v6257, 8388607
    %v6259 = vor.u32 %v6258, 8388608
    %v6260 = vsub.s32 0, %v6259
    %v6261 = vadd.s32 %v6256, 1
    %vm6262 = vcmp.gt.s32.totalorder %v6261, 0
    %v6263 = vsel %vm6262, %v6261, 0
    %v6264 = vshrl.u32 %v6263, 5
    %v6265 = vand.u32 %v6263, 31
    %v6266 = vsub.s32 32, %v6265
    %v6267 = vshrl.u32 683565275, %v6266
    %v6268 = vshll.u32 683565275, %v6265
    %v6269 = vshrl.u32 2475754826, %v6266
    %v6270 = vor.u32 %v6268, %v6269
    %v6271 = vshll.u32 2475754826, %v6265
    %v6272 = vshrl.u32 2131351028, %v6266
    %v6273 = vor.u32 %v6271, %v6272
    %v6274 = vshll.u32 2131351028, %v6265
    %v6275 = vshrl.u32 2102212464, %v6266
    %v6276 = vor.u32 %v6274, %v6275
    %v6277 = vshll.u32 2102212464, %v6265
    %v6278 = vshrl.u32 920167782, %v6266
    %v6279 = vor.u32 %v6277, %v6278
    %v6280 = vshll.u32 920167782, %v6265
    %v6281 = vshrl.u32 1326507024, %v6266
    %v6282 = vor.u32 %v6280, %v6281
    %vm6283 = vcmp.lt.s32.totalorder %v6264, 1
    %vm6284 = vcmp.lt.s32.totalorder %v6264, 2
    %vm6285 = vcmp.lt.s32.totalorder %v6264, 3
    %vm6286 = vcmp.lt.s32.totalorder %v6264, 4
    %v6287 = vsel %vm6283, %v6267, %v6270
    %v6288 = vsel %vm6286, %v6276, 2102212464
    %v6289 = vsel %vm6285, %v6273, %v6288
    %v6290 = vsel %vm6284, %v6287, %v6289
    %v6291 = vsel %vm6283, %v6270, %v6273
    %v6292 = vsel %vm6286, %v6279, 920167782
    %v6293 = vsel %vm6285, %v6276, %v6292
    %v6294 = vsel %vm6284, %v6291, %v6293
    %v6295 = vsel %vm6283, %v6273, %v6276
    %v6296 = vsel %vm6286, %v6282, 1326507024
    %v6297 = vsel %vm6285, %v6279, %v6296
    %v6298 = vsel %vm6284, %v6295, %v6297
    %v6299 = vshll.u32 %v6259, 8
    %v6300 = vmul.u32.u64.compose %v6299, %v6298
    %v6301 = vextract.low.u32 %v6300
    %v6302 = vextract.high.u32 %v6300
    %v6303 = vmul.u32.u64.compose %v6299, %v6294
    %v6304 = vextract.low.u32 %v6303
    %v6305 = vextract.high.u32 %v6303
    %v6306 = vmul.u32 %v6299, %v6290
    %v6307 = vadd.s32 %v6302, %v6304
    %vm6308 = vc.u32 %v6302, %v6304
    %v6309 = vadd.s32 %v6305, 1
    %v6310 = vsel %vm6308, %v6309, %v6305
    %v6311 = vadd.s32 %v6306, %v6310
    %v6312 = vadd.s32 %v6311, 536870912
    %v6313 = vshrl.u32 %v6312, 30
    %v6314 = vshll.u32 %v6313, 30
    %v6315 = vsub.s32 %v6311, %v6314
    %vm6316 = vcmp.lt.s32.totalorder %v6315, 0
    %v6317 = vsub.s32 0, %v6315
    %v6318 = vsel %vm6316, %v6317, %v6315
    %v6319 = vclz %v6318
    %v6320 = vsub.s32 %v6319, 2
    %vm6321 = vcmp.gt.s32.totalorder 0, %v6320
    %v6322 = vsel %vm6321, 0, %v6320
    %v6323 = vsub.s32 32, %v6322
    %v6324 = vshll.u32 %v6315, %v6322
    %v6325 = vshrl.u32 %v6307, %v6323
    %v6326 = vor.u32 %v6324, %v6325
    %v6327 = vsub.s32 4294967266, %v6322
    %v6328 = vadd.s32 %v6327, 127
    %v6329 = vshll.u32 %v6328, 23
    %v6330 = vor.u32 4788187, %v6329
    %v6331 = vand.u32 2147483647, %v6330
    %v6333 = vcvt.s32.f32 %v6326
    %v6334 = vmul.f32 %v6333, %v6331
    %v6335 = vxor.u32 %v6334, 2147483648
    %v6336 = vsel %vm6253, %v6335, %v6334
    %v6337 = vsub.s32 4, %v6313
    %v6338 = vsel %vm6253, %v6337, %v6313
    %v6339 = vsel %vm6252, %v6132, %v6336
    %v6340 = vsel %vm6252, 0, %v6338
    %v6341 = vcosq.f32.pop %v6339
    %v6342 = vsinq.f32.pop %v6339
    %vm6343 = vweird.f32 %v6132
    %v6344 = vand.u32 %v6340, 3
    %vm6345 = vcmp.lt.s32.totalorder %v6344, 2
    %vm6346 = vcmp.eq.s32.totalorder %v6344, 0
    %v6347 = vxor.u32 %v6342, 2147483648
    %v6348 = vsel %vm6346, %v6341, %v6347
    %vm6349 = vcmp.eq.s32.totalorder %v6344, 2
    %v6350 = vxor.u32 %v6341, 2147483648
    %v6351 = vsel %vm6349, %v6350, %v6342
    %v6352 = vsel %vm6345, %v6348, %v6351
    %v6353 = vsel %vm6343, nan, %v6352
    %vm6354 = vcmask 257024
    %6355 = vst.msk [vmem:[#allocation9] sm:$0xf] %vm6354, %v6250
    %6356 = vst.msk [vmem:[#allocation9 + $0x4] sm:$0xf] %vm6354, %v6353
    // Predicated region
    $region30: #{varae_forward.1} parent=1 // pred_check
      _
    $region31: #{varae_forward.1} parent=1 // pred_check_branch
      %6358 = sbr.rel (0) target = $region33
    $region32: #{varae_forward.1} parent=1 // pred_region
      %s6360 = ssub.s32 128, 128
      %6361 = vsyncadd [#allocation5], %s6360
      %s6362 = sshll.u32 [#allocation9], 4
      %s6363 = int_to_ptr.vmem [resolvable:$true] %s6362
      %6368 = dma.vmem_to_hbm [thread:$0]  %s6363, 128, %s4, [#allocation5], 64, 64, 4
    $region33: #{varae_forward.1} parent=1 // pred_fallthru
      _
    // Predicated region
    $region34: #{varae_forward.1} parent=1 // pred_check
      _
    $region35: #{varae_forward.1} parent=1 // pred_check_branch
      %6370 = sbr.rel (0) target = $region37
    $region36: #{varae_forward.1} parent=1 // pred_region
      %s6372 = ssub.s32 32, 32
      %6373 = vsyncadd [#allocation11], %s6372
      %s6375 = sshll.u32 [#allocation10], 4
      %s6376 = int_to_ptr.vmem [resolvable:$true] %s6375
      %6378 = dma.vmem_to_hbm [thread:$0]  %s6376, 32, %s5, [#allocation11]
    $region37: #{varae_forward.1} parent=1 // pred_fallthru
      _
    // Predicated region
    $region38: #{varae_forward.1} parent=1 // pred_check
      _
    $region39: #{varae_forward.1} parent=1 // pred_check_branch
      %6380 = sbr.rel (0) target = $region41
    $region40: #{varae_forward.1} parent=1 // pred_region
      %s6382 = ssub.s32 32, 32
      %6383 = vsyncadd [#allocation11], %s6382
      %s6385 = sshll.u32 [#allocation12], 4
      %s6386 = int_to_ptr.vmem [resolvable:$true] %s6385
      %6388 = dma.vmem_to_hbm [thread:$0]  %s6386, 32, %s6, [#allocation11]
    $region41: #{varae_forward.1} parent=1 // pred_fallthru
      _
    // Predicated region
    $region42: #{varae_forward.1} parent=1 // pred_check
      _
    $region43: #{varae_forward.1} parent=1 // pred_check_branch
      %6390 = sbr.rel (0) target = $region45
    $region44: #{varae_forward.1} parent=1 // pred_region
      %6391 = dma.done [#allocation5], 128
    $region45: #{varae_forward.1} parent=1 // pred_fallthru
      _
    // Predicated region
    $region46: #{varae_forward.1} parent=1 // pred_check
      _
    $region47: #{varae_forward.1} parent=1 // pred_check_branch
      %6393 = sbr.rel (0) target = $region49
    $region48: #{varae_forward.1} parent=1 // pred_region
      %6394 = dma.done [#allocation11], 32
    $region49: #{varae_forward.1} parent=1 // pred_fallthru
      _
    // Predicated region
    $region50: #{varae_forward.1} parent=1 // pred_check
      _
    $region51: #{varae_forward.1} parent=1 // pred_check_branch
      %6396 = sbr.rel (0) target = $region53
    $region52: #{varae_forward.1} parent=1 // pred_region
      %6397 = dma.done [#allocation11], 32
    $region53: #{varae_forward.1} parent=1 // pred_fallthru
      _
    %6398 = vsyncpa [#allocation4], 1
    %6399 = vsyncpa [#allocation7], 1
    %6400 = vsyncpa [#allocation5], 1
    %6401 = vsyncpa [#allocation11], 1

</llo_original>
